<compile_context>
chip_gen: v7x
topology: tpu7x:2x2x1
jax: 0.10.0
libtpu: 0.0.40
codegen_flags: <defaults>
</compile_context>

<pallas_src>
import functools

import jax
import jax.numpy as jnp
from jax.experimental import pallas as pl
from jax.experimental.pallas import tpu as pltpu


DP = 128      # padded feature width (TPU lane dim)


def _round_up(x, m):
    return (x + m - 1) // m * m


# ----------------------------- fused forward kernel ---------------------------

def _fused_gnn_kernel(
    # VMEM inputs
    x_ref, ea_ref,                       # [Np, DP] bf16, [Ep, DP] bf16
    gdst_ref, gsrc_ref, sdst_ref, pool_ref,   # one-hot bf16 matrices
    w_in_ref, b_in_ref,                  # [DP, DP] bf16, [1, DP] f32
    w_msg1_ref, w_msg2_ref,              # [L, 3DP, DP], [L, DP, DP] bf16
    w_upd1_ref, w_upd2_ref,              # [L, 2DP, DP], [L, DP, DP] bf16
    b_ref,                               # [L, 4, 1, DP] f32
    w_pred_ref, b_pred_ref,              # [DP, DP] bf16, [1, DP] f32
    invc_ref,                            # [Gp, DP] f32
    # output
    out_ref,                             # [Gp, DP] f32 (lane-dense slab)
    # VMEM scratch
    h_s,                                 # [Np, DP]  f32  residual accumulator
    hb_s,                                # [Np, DP]  bf16 per-layer copy of h
    cat_s,                               # [Ep, 3DP] bf16 message-MLP input
    ucat_s,                              # [Np, 2DP] bf16 update-MLP input
    *, n_layers,
):
    # ---- h = lin_in(x): single MXU pass, bias folded into the store ----------
    h_s[...] = (
        jnp.dot(x_ref[...], w_in_ref[...], preferred_element_type=jnp.float32)
        + b_in_ref[...]
    )

    # edge-attr slab of the message concat is layer-invariant: write it ONCE
    cat_s[:, 2 * DP:3 * DP] = ea_ref[...]

    for l in range(n_layers):
        hb_s[...] = h_s[...].astype(jnp.bfloat16)

        # ---- vectorized gathers: h_i = h[dst], h_j = h[src] via one-hot MXU ---
        cat_s[:, 0:DP] = jnp.dot(
            gdst_ref[...], hb_s[...],
            preferred_element_type=jnp.float32).astype(jnp.bfloat16)
        cat_s[:, DP:2 * DP] = jnp.dot(
            gsrc_ref[...], hb_s[...],
            preferred_element_type=jnp.float32).astype(jnp.bfloat16)

        # ---- message MLP, fused K=384 contraction ------------------------------
        m = jnp.dot(cat_s[...], w_msg1_ref[l],
                    preferred_element_type=jnp.float32) + b_ref[l, 0]
        m = jnp.maximum(m, 0.0)                       # Linear + (BN=id) + ReLU
        m = jnp.dot(m.astype(jnp.bfloat16), w_msg2_ref[l],
                    preferred_element_type=jnp.float32) + b_ref[l, 1]
        m = jnp.maximum(m, 0.0).astype(jnp.bfloat16)

        # ---- scatter-sum messages at dst: one-hot matmul on the MXU ------------
        aggr = jnp.dot(sdst_ref[...], m, preferred_element_type=jnp.float32)

        # ---- update MLP, fused K=256 contraction, + fused residual -------------
        ucat_s[:, 0:DP] = hb_s[...]
        ucat_s[:, DP:2 * DP] = aggr.astype(jnp.bfloat16)
        u = jnp.dot(ucat_s[...], w_upd1_ref[l],
                    preferred_element_type=jnp.float32) + b_ref[l, 2]
        u = jnp.maximum(u, 0.0)
        u = jnp.dot(u.astype(jnp.bfloat16), w_upd2_ref[l],
                    preferred_element_type=jnp.float32) + b_ref[l, 3]
        u = jnp.maximum(u, 0.0)

        h_s[...] = h_s[...] + u        # residual folded into the same store

    # ---- global mean pool (one-hot matmul) + lin_pred, fused -------------------
    hb_s[...] = h_s[...].astype(jnp.bfloat16)
    pooled = (jnp.dot(pool_ref[...], hb_s[...],
                      preferred_element_type=jnp.float32) * invc_ref[...])
    out_ref[...] = (
        jnp.dot(pooled.astype(jnp.bfloat16), w_pred_ref[...],
                preferred_element_type=jnp.float32)
        + b_pred_ref[...]
    )


# ------------------------------ parameter setup --------------------------------

def init_linear(key, fan_in, fan_out):
    kw, kb = jax.random.split(key)
    bound = 1.0 / (fan_in ** 0.5)
    w = jax.random.uniform(kw, (fan_in, fan_out), jnp.float32, -bound, bound)
    b = jax.random.uniform(kb, (fan_out,), jnp.float32, -bound, bound)
    return w, b


def init_gnn_params(key, n_layers=4, emb_dim=50, edge_dim=4, in_dim=10, out_dim=1):
    keys = jax.random.split(key, 2 + 4 * n_layers)
    params = {
        "lin_in": init_linear(keys[0], in_dim, emb_dim),
        "lin_pred": init_linear(keys[1], emb_dim, out_dim),
        "convs": [],
    }
    for i in range(n_layers):
        k0, k1, k2, k3 = keys[2 + 4 * i: 6 + 4 * i]
        params["convs"].append({
            "msg1": init_linear(k0, 2 * emb_dim + edge_dim, emb_dim),
            "msg2": init_linear(k1, emb_dim, emb_dim),
            "upd1": init_linear(k2, 2 * emb_dim, emb_dim),
            "upd2": init_linear(k3, emb_dim, emb_dim),
        })
    return params


def _pad2(w, rows, cols):
    out = jnp.zeros((rows, cols), jnp.float32)
    return out.at[: w.shape[0], : w.shape[1]].set(w)


def _pad_bias(b, cols):
    out = jnp.zeros((1, cols), jnp.float32)
    return out.at[0, : b.shape[0]].set(b)


def prepare_params(params, emb_dim, edge_dim):
    """Pad weights to 128-lane slabs, stack concat-weights into fused-K blocks."""
    D = emb_dim
    w_in, b_in = params["lin_in"]
    w_in_p = _pad2(w_in, DP, DP).astype(jnp.bfloat16)
    b_in_p = _pad_bias(b_in, DP)

    w_msg1_l, w_msg2_l, w_upd1_l, w_upd2_l, b_l = [], [], [], [], []
    for layer in params["convs"]:
        w_m1, b_m1 = layer["msg1"]   # [2D+edge_dim, D]
        w_m2, b_m2 = layer["msg2"]
        w_u1, b_u1 = layer["upd1"]   # [2D, D]
        w_u2, b_u2 = layer["upd2"]

        # fused message weight: rows 0:DP -> h_i, DP:2DP -> h_j, 2DP:.. -> edge_attr
        wm1 = jnp.zeros((3 * DP, DP), jnp.float32)
        wm1 = wm1.at[:D, :D].set(w_m1[:D])
        wm1 = wm1.at[DP:DP + D, :D].set(w_m1[D:2 * D])
        wm1 = wm1.at[2 * DP:2 * DP + edge_dim, :D].set(w_m1[2 * D:2 * D + edge_dim])

        # fused update weight: rows 0:DP -> h, DP:2DP -> aggr
        wu1 = jnp.zeros((2 * DP, DP), jnp.float32)
        wu1 = wu1.at[:D, :D].set(w_u1[:D])
        wu1 = wu1.at[DP:DP + D, :D].set(w_u1[D:2 * D])

        w_msg1_l.append(wm1)
        w_msg2_l.append(_pad2(w_m2, DP, DP))
        w_upd1_l.append(wu1)
        w_upd2_l.append(_pad2(w_u2, DP, DP))
        b_l.append(jnp.stack([_pad_bias(b_m1, DP), _pad_bias(b_m2, DP),
                              _pad_bias(b_u1, DP), _pad_bias(b_u2, DP)]))

    w_pred, b_pred = params["lin_pred"]
    return dict(
        w_in=w_in_p, b_in=b_in_p,
        w_msg1=jnp.stack(w_msg1_l).astype(jnp.bfloat16),   # [L, 3DP, DP]
        w_msg2=jnp.stack(w_msg2_l).astype(jnp.bfloat16),   # [L, DP, DP]
        w_upd1=jnp.stack(w_upd1_l).astype(jnp.bfloat16),   # [L, 2DP, DP]
        w_upd2=jnp.stack(w_upd2_l).astype(jnp.bfloat16),   # [L, DP, DP]
        b_layers=jnp.stack(b_l),                           # [L, 4, 1, DP] f32
        w_pred=_pad2(w_pred, DP, DP).astype(jnp.bfloat16),
        b_pred=_pad_bias(b_pred, DP),
    )


# ----------------------------------- forward -----------------------------------

@functools.partial(jax.jit,
                   static_argnames=("num_graphs", "in_dim", "edge_dim", "out_dim"))
def gnn_forward(prep, x, edge_index, edge_attr, batch,
                num_graphs, in_dim, edge_dim, out_dim):
    n_nodes = x.shape[0]
    n_edges = edge_index.shape[1]
    n_pad = _round_up(n_nodes, 16)
    e_pad = _round_up(n_edges, 16)
    g_pad = _round_up(num_graphs, 8)
    n_layers = prep["w_msg1"].shape[0]

    x_pad = jnp.zeros((n_pad, DP), jnp.bfloat16)
    x_pad = x_pad.at[:n_nodes, :in_dim].set(x.astype(jnp.bfloat16))
    # TODO(synk): edge_attr only uses edge_dim lanes of this slab; for very large
    # edge counts pass it at natural width or chunk it to avoid the DMA waste.
    ea_pad = jnp.zeros((e_pad, DP), jnp.bfloat16)
    ea_pad = ea_pad.at[:n_edges, :edge_dim].set(edge_attr.astype(jnp.bfloat16))

    src = edge_index[0].astype(jnp.int32)
    dst = edge_index[1].astype(jnp.int32)
    batch_i = batch.astype(jnp.int32)

    # one-hot gather / scatter / pool matrices: built ONCE, reused by every layer.
    e_ar = jnp.arange(n_edges)
    gsrc = jnp.zeros((e_pad, n_pad), jnp.bfloat16).at[e_ar, src].set(1.0)
    gdst = jnp.zeros((e_pad, n_pad), jnp.bfloat16).at[e_ar, dst].set(1.0)
    sdst = jnp.zeros((n_pad, e_pad), jnp.bfloat16).at[dst, e_ar].set(1.0)
    pool = jnp.zeros((g_pad, n_pad), jnp.bfloat16).at[
        batch_i, jnp.arange(n_nodes)].set(1.0)

    counts = jnp.maximum(jnp.bincount(batch_i, length=num_graphs), 1
                         ).astype(jnp.float32)
    inv_counts = jnp.ones((g_pad,), jnp.float32).at[:num_graphs].set(1.0 / counts)
    invc = jnp.broadcast_to(inv_counts[:, None], (g_pad, DP))

    vmem = pl.BlockSpec(memory_space=pltpu.MemorySpace.VMEM)
    kernel = functools.partial(_fused_gnn_kernel, n_layers=n_layers)

    out_pad = pl.pallas_call(
        kernel,
        out_shape=jax.ShapeDtypeStruct((g_pad, DP), jnp.float32),
        in_specs=[vmem] * 16,
        out_specs=vmem,
        scratch_shapes=[
            pltpu.VMEM((n_pad, DP), jnp.float32),      # h (f32 residual acc)
            pltpu.VMEM((n_pad, DP), jnp.bfloat16),     # bf16 copy of h
            pltpu.VMEM((e_pad, 3 * DP), jnp.bfloat16), # [h_i|h_j|e] message concat
            pltpu.VMEM((n_pad, 2 * DP), jnp.bfloat16), # [h|aggr] update concat
        ],
        compiler_params=pltpu.CompilerParams(vmem_limit_bytes=48 * 1024 * 1024),
    )(x_pad, ea_pad, gdst, gsrc, sdst, pool,
      prep["w_in"], prep["b_in"],
      prep["w_msg1"], prep["w_msg2"], prep["w_upd1"], prep["w_upd2"],
      prep["b_layers"], prep["w_pred"], prep["b_pred"], invc)

    return out_pad[:num_graphs, :out_dim]


# ------------------------------------ main --------------------------------------

if __name__ == "__main__":
    n_layers, emb_dim, edge_dim, in_dim, out_dim = 4, 50, 4, 10, 1
    n_nodes, n_edges, num_graphs = 16, 32, 2

    key = jax.random.PRNGKey(0)
    k_x, k_ei, k_ea, k_params = jax.random.split(key, 4)

    x = jax.random.normal(k_x, (n_nodes, in_dim), jnp.float32)
    edge_index = jax.random.randint(k_ei, (2, n_edges), 0, n_nodes, jnp.int32)
    edge_attr = jax.random.normal(k_ea, (n_edges, edge_dim), jnp.float32)
    batch = jnp.concatenate([
        jnp.zeros((n_nodes // 2,), jnp.int32),
        jnp.ones((n_nodes - n_nodes // 2,), jnp.int32),
    ])

    params = init_gnn_params(k_params, n_layers, emb_dim, edge_dim, in_dim, out_dim)
    prep = prepare_params(params, emb_dim, edge_dim)

    out = gnn_forward(prep, x, edge_index, edge_attr, batch,
                      num_graphs=num_graphs, in_dim=in_dim,
                      edge_dim=edge_dim, out_dim=out_dim)
    jax.block_until_ready(out)
    assert out.shape == (num_graphs, out_dim)
    assert bool(jnp.all(jnp.isfinite(out)))
    print("KERNEL_OK")
</pallas_src>

<mosaic_0001>
module attributes {stable_mosaic.version = 11 : i64} {
  func.func private @main(%arg0: i32) attributes {dimension_semantics = [#tpu.dimension_semantics<core_parallel>], iteration_bounds = array<i64: 2>, tpu.core_type = #tpu.core_type<sc_scalar_subcore>, window_params = []} {
    return
  }
}

module attributes {stable_mosaic.version = 11 : i64} {
  func.func private @main(%arg0: i32) attributes {dimension_semantics = [#tpu.dimension_semantics<core_parallel>], iteration_bounds = array<i64: 2>, tpu.core_type = #tpu.core_type<sc_scalar_subcore>, window_params = []} {
    return
  }
}

module attributes {stable_mosaic.version = 11 : i64} {
  func.func @_fused_gnn_kernel(%arg0: memref<16x128xbf16, #tpu.memory_space<vmem>>, %arg1: memref<32x128xbf16, #tpu.memory_space<vmem>>, %arg2: memref<32x16xbf16, #tpu.memory_space<vmem>>, %arg3: memref<32x16xbf16, #tpu.memory_space<vmem>>, %arg4: memref<16x32xbf16, #tpu.memory_space<vmem>>, %arg5: memref<8x16xbf16, #tpu.memory_space<vmem>>, %arg6: memref<128x128xbf16, #tpu.memory_space<vmem>>, %arg7: memref<1x128xf32, #tpu.memory_space<vmem>>, %arg8: memref<4x384x128xbf16, #tpu.memory_space<vmem>>, %arg9: memref<4x128x128xbf16, #tpu.memory_space<vmem>>, %arg10: memref<4x256x128xbf16, #tpu.memory_space<vmem>>, %arg11: memref<4x128x128xbf16, #tpu.memory_space<vmem>>, %arg12: memref<4x4x1x128xf32, #tpu.memory_space<vmem>>, %arg13: memref<128x128xbf16, #tpu.memory_space<vmem>>, %arg14: memref<1x128xf32, #tpu.memory_space<vmem>>, %arg15: memref<8x128xf32, #tpu.memory_space<vmem>>, %arg16: memref<8x128xf32, #tpu.memory_space<vmem>>, %arg17: memref<16x128xf32, #tpu.memory_space<vmem>>, %arg18: memref<16x128xbf16, #tpu.memory_space<vmem>>, %arg19: memref<32x384xbf16, #tpu.memory_space<vmem>>, %arg20: memref<16x256xbf16, #tpu.memory_space<vmem>>) attributes {dimension_semantics = [], scalar_prefetch = 0 : i64, scratch_operands = 4 : i64, tpu.core_type = #tpu.core_type<tc>} {
    %c0 = arith.constant 0 : index
    %c0_0 = arith.constant 0 : index
    %0 = vector.load %arg0[%c0, %c0_0] : memref<16x128xbf16, #tpu.memory_space<vmem>>, vector<16x128xbf16>
    %c0_1 = arith.constant 0 : index
    %c0_2 = arith.constant 0 : index
    %1 = vector.load %arg6[%c0_1, %c0_2] : memref<128x128xbf16, #tpu.memory_space<vmem>>, vector<128x128xbf16>
    %cst = arith.constant dense<0.000000e+00> : vector<16x128xf32>
    %2 = tpu.matmul %0, %1, %cst {dimension_numbers = #tpu.dot_dimension_numbers<[1], [0], [0], [1], [0, 0, 1, 1], [], []>} : vector<16x128xbf16>, vector<128x128xbf16>, vector<16x128xf32> -> vector<16x128xf32>
    %c0_3 = arith.constant 0 : index
    %c0_4 = arith.constant 0 : index
    %3 = vector.load %arg7[%c0_3, %c0_4] : memref<1x128xf32, #tpu.memory_space<vmem>>, vector<1x128xf32>
    %4 = vector.broadcast %3 : vector<1x128xf32> to vector<16x128xf32>
    %5 = arith.addf %2, %4 : vector<16x128xf32>
    %c0_5 = arith.constant 0 : index
    %c0_6 = arith.constant 0 : index
    %6 = vector.load %arg17[%c0_5, %c0_6] : memref<16x128xf32, #tpu.memory_space<vmem>>, vector<16x128xf32>
    tpu.vector_store %arg17[%c0_5, %c0_6], %5 {strides = array<i32>} : memref<16x128xf32, #tpu.memory_space<vmem>>, vector<16x128xf32>,
    %c0_7 = arith.constant 0 : index
    %c0_8 = arith.constant 0 : index
    %7 = vector.load %arg1[%c0_7, %c0_8] : memref<32x128xbf16, #tpu.memory_space<vmem>>, vector<32x128xbf16>
    %c0_9 = arith.constant 0 : index
    %c256 = arith.constant 256 : index
    %8 = vector.load %arg19[%c0_9, %c256] : memref<32x384xbf16, #tpu.memory_space<vmem>>, vector<32x128xbf16>
    tpu.vector_store %arg19[%c0_9, %c256], %7 {strides = array<i32>} : memref<32x384xbf16, #tpu.memory_space<vmem>>, vector<32x128xbf16>,
    %c0_10 = arith.constant 0 : index
    %c0_11 = arith.constant 0 : index
    %9 = vector.load %arg17[%c0_10, %c0_11] : memref<16x128xf32, #tpu.memory_space<vmem>>, vector<16x128xf32>
    %10 = arith.truncf %9 : vector<16x128xf32> to vector<16x128xbf16>
    %c0_12 = arith.constant 0 : index
    %c0_13 = arith.constant 0 : index
    %11 = vector.load %arg18[%c0_12, %c0_13] : memref<16x128xbf16, #tpu.memory_space<vmem>>, vector<16x128xbf16>
    tpu.vector_store %arg18[%c0_12, %c0_13], %10 {strides = array<i32>} : memref<16x128xbf16, #tpu.memory_space<vmem>>, vector<16x128xbf16>,
    %c0_14 = arith.constant 0 : index
    %c0_15 = arith.constant 0 : index
    %12 = vector.load %arg2[%c0_14, %c0_15] : memref<32x16xbf16, #tpu.memory_space<vmem>>, vector<32x16xbf16>
    %c0_16 = arith.constant 0 : index
    %c0_17 = arith.constant 0 : index
    %13 = vector.load %arg18[%c0_16, %c0_17] : memref<16x128xbf16, #tpu.memory_space<vmem>>, vector<16x128xbf16>
    %cst_18 = arith.constant dense<0.000000e+00> : vector<32x128xf32>
    %14 = tpu.matmul %12, %13, %cst_18 {dimension_numbers = #tpu.dot_dimension_numbers<[1], [0], [0], [1], [0, 0, 1, 1], [], []>} : vector<32x16xbf16>, vector<16x128xbf16>, vector<32x128xf32> -> vector<32x128xf32>
    %15 = arith.truncf %14 : vector<32x128xf32> to vector<32x128xbf16>
    %c0_19 = arith.constant 0 : index
    %c0_20 = arith.constant 0 : index
    %16 = vector.load %arg19[%c0_19, %c0_20] : memref<32x384xbf16, #tpu.memory_space<vmem>>, vector<32x128xbf16>
    tpu.vector_store %arg19[%c0_19, %c0_20], %15 {strides = array<i32>} : memref<32x384xbf16, #tpu.memory_space<vmem>>, vector<32x128xbf16>,
    %c0_21 = arith.constant 0 : index
    %c0_22 = arith.constant 0 : index
    %17 = vector.load %arg3[%c0_21, %c0_22] : memref<32x16xbf16, #tpu.memory_space<vmem>>, vector<32x16xbf16>
    %c0_23 = arith.constant 0 : index
    %c0_24 = arith.constant 0 : index
    %18 = vector.load %arg18[%c0_23, %c0_24] : memref<16x128xbf16, #tpu.memory_space<vmem>>, vector<16x128xbf16>
    %cst_25 = arith.constant dense<0.000000e+00> : vector<32x128xf32>
    %19 = tpu.matmul %17, %18, %cst_25 {dimension_numbers = #tpu.dot_dimension_numbers<[1], [0], [0], [1], [0, 0, 1, 1], [], []>} : vector<32x16xbf16>, vector<16x128xbf16>, vector<32x128xf32> -> vector<32x128xf32>
    %20 = arith.truncf %19 : vector<32x128xf32> to vector<32x128xbf16>
    %c0_26 = arith.constant 0 : index
    %c128 = arith.constant 128 : index
    %21 = vector.load %arg19[%c0_26, %c128] : memref<32x384xbf16, #tpu.memory_space<vmem>>, vector<32x128xbf16>
    tpu.vector_store %arg19[%c0_26, %c128], %20 {strides = array<i32>} : memref<32x384xbf16, #tpu.memory_space<vmem>>, vector<32x128xbf16>,
    %c0_27 = arith.constant 0 : index
    %c0_28 = arith.constant 0 : index
    %22 = vector.load %arg19[%c0_27, %c0_28] : memref<32x384xbf16, #tpu.memory_space<vmem>>, vector<32x384xbf16>
    %c0_29 = arith.constant 0 : index
    %c0_30 = arith.constant 0 : index
    %c0_31 = arith.constant 0 : index
    %23 = vector.load %arg8[%c0_29, %c0_30, %c0_31] : memref<4x384x128xbf16, #tpu.memory_space<vmem>>, vector<1x384x128xbf16>
    %24 = vector.shape_cast %23 : vector<1x384x128xbf16> to vector<384x128xbf16>
    %cst_32 = arith.constant dense<0.000000e+00> : vector<32x128xf32>
    %25 = tpu.matmul %22, %24, %cst_32 {dimension_numbers = #tpu.dot_dimension_numbers<[1], [0], [0], [1], [0, 0, 1, 1], [], []>} : vector<32x384xbf16>, vector<384x128xbf16>, vector<32x128xf32> -> vector<32x128xf32>
    %c0_33 = arith.constant 0 : index
    %c0_34 = arith.constant 0 : index
    %c0_35 = arith.constant 0 : index
    %c0_36 = arith.constant 0 : index
    %26 = vector.load %arg12[%c0_33, %c0_34, %c0_35, %c0_36] : memref<4x4x1x128xf32, #tpu.memory_space<vmem>>, vector<1x1x1x128xf32>
    %27 = vector.shape_cast %26 : vector<1x1x1x128xf32> to vector<1x128xf32>
    %28 = vector.broadcast %27 : vector<1x128xf32> to vector<32x128xf32>
    %29 = arith.addf %25, %28 : vector<32x128xf32>
    %cst_37 = arith.constant 0.000000e+00 : f32
    %30 = vector.broadcast %cst_37 : f32 to vector<32x128xf32>
    %31 = arith.maximumf %29, %30 : vector<32x128xf32>
    %32 = arith.truncf %31 : vector<32x128xf32> to vector<32x128xbf16>
    %c0_38 = arith.constant 0 : index
    %c0_39 = arith.constant 0 : index
    %c0_40 = arith.constant 0 : index
    %33 = vector.load %arg9[%c0_38, %c0_39, %c0_40] : memref<4x128x128xbf16, #tpu.memory_space<vmem>>, vector<1x128x128xbf16>
    %34 = vector.shape_cast %33 : vector<1x128x128xbf16> to vector<128x128xbf16>
    %cst_41 = arith.constant dense<0.000000e+00> : vector<32x128xf32>
    %35 = tpu.matmul %32, %34, %cst_41 {dimension_numbers = #tpu.dot_dimension_numbers<[1], [0], [0], [1], [0, 0, 1, 1], [], []>} : vector<32x128xbf16>, vector<128x128xbf16>, vector<32x128xf32> -> vector<32x128xf32>
    %c0_42 = arith.constant 0 : index
    %c1 = arith.constant 1 : index
    %c0_43 = arith.constant 0 : index
    %c0_44 = arith.constant 0 : index
    %36 = vector.load %arg12[%c0_42, %c1, %c0_43, %c0_44] : memref<4x4x1x128xf32, #tpu.memory_space<vmem>>, vector<1x1x1x128xf32>
    %37 = vector.shape_cast %36 : vector<1x1x1x128xf32> to vector<1x128xf32>
    %38 = vector.broadcast %37 : vector<1x128xf32> to vector<32x128xf32>
    %39 = arith.addf %35, %38 : vector<32x128xf32>
    %cst_45 = arith.constant 0.000000e+00 : f32
    %40 = vector.broadcast %cst_45 : f32 to vector<32x128xf32>
    %41 = arith.maximumf %39, %40 : vector<32x128xf32>
    %42 = arith.truncf %41 : vector<32x128xf32> to vector<32x128xbf16>
    %c0_46 = arith.constant 0 : index
    %c0_47 = arith.constant 0 : index
    %43 = vector.load %arg4[%c0_46, %c0_47] : memref<16x32xbf16, #tpu.memory_space<vmem>>, vector<16x32xbf16>
    %cst_48 = arith.constant dense<0.000000e+00> : vector<16x128xf32>
    %44 = tpu.matmul %43, %42, %cst_48 {dimension_numbers = #tpu.dot_dimension_numbers<[1], [0], [0], [1], [0, 0, 1, 1], [], []>} : vector<16x32xbf16>, vector<32x128xbf16>, vector<16x128xf32> -> vector<16x128xf32>
    %c0_49 = arith.constant 0 : index
    %c0_50 = arith.constant 0 : index
    %45 = vector.load %arg18[%c0_49, %c0_50] : memref<16x128xbf16, #tpu.memory_space<vmem>>, vector<16x128xbf16>
    %c0_51 = arith.constant 0 : index
    %c0_52 = arith.constant 0 : index
    %46 = vector.load %arg20[%c0_51, %c0_52] : memref<16x256xbf16, #tpu.memory_space<vmem>>, vector<16x128xbf16>
    tpu.vector_store %arg20[%c0_51, %c0_52], %45 {strides = array<i32>} : memref<16x256xbf16, #tpu.memory_space<vmem>>, vector<16x128xbf16>,
    %47 = arith.truncf %44 : vector<16x128xf32> to vector<16x128xbf16>
    %c0_53 = arith.constant 0 : index
    %c128_54 = arith.constant 128 : index
    %48 = vector.load %arg20[%c0_53, %c128_54] : memref<16x256xbf16, #tpu.memory_space<vmem>>, vector<16x128xbf16>
    tpu.vector_store %arg20[%c0_53, %c128_54], %47 {strides = array<i32>} : memref<16x256xbf16, #tpu.memory_space<vmem>>, vector<16x128xbf16>,
    %c0_55 = arith.constant 0 : index
    %c0_56 = arith.constant 0 : index
    %49 = vector.load %arg20[%c0_55, %c0_56] : memref<16x256xbf16, #tpu.memory_space<vmem>>, vector<16x256xbf16>
    %c0_57 = arith.constant 0 : index
    %c0_58 = arith.constant 0 : index
    %c0_59 = arith.constant 0 : index
    %50 = vector.load %arg10[%c0_57, %c0_58, %c0_59] : memref<4x256x128xbf16, #tpu.memory_space<vmem>>, vector<1x256x128xbf16>
    %51 = vector.shape_cast %50 : vector<1x256x128xbf16> to vector<256x128xbf16>
    %cst_60 = arith.constant dense<0.000000e+00> : vector<16x128xf32>
    %52 = tpu.matmul %49, %51, %cst_60 {dimension_numbers = #tpu.dot_dimension_numbers<[1], [0], [0], [1], [0, 0, 1, 1], [], []>} : vector<16x256xbf16>, vector<256x128xbf16>, vector<16x128xf32> -> vector<16x128xf32>
    %c0_61 = arith.constant 0 : index
    %c2 = arith.constant 2 : index
    %c0_62 = arith.constant 0 : index
    %c0_63 = arith.constant 0 : index
    %53 = vector.load %arg12[%c0_61, %c2, %c0_62, %c0_63] : memref<4x4x1x128xf32, #tpu.memory_space<vmem>>, vector<1x1x1x128xf32>
    %54 = vector.shape_cast %53 : vector<1x1x1x128xf32> to vector<1x128xf32>
    %55 = vector.broadcast %54 : vector<1x128xf32> to vector<16x128xf32>
    %56 = arith.addf %52, %55 : vector<16x128xf32>
    %cst_64 = arith.constant 0.000000e+00 : f32
    %57 = vector.broadcast %cst_64 : f32 to vector<16x128xf32>
    %58 = arith.maximumf %56, %57 : vector<16x128xf32>
    %59 = arith.truncf %58 : vector<16x128xf32> to vector<16x128xbf16>
    %c0_65 = arith.constant 0 : index
    %c0_66 = arith.constant 0 : index
    %c0_67 = arith.constant 0 : index
    %60 = vector.load %arg11[%c0_65, %c0_66, %c0_67] : memref<4x128x128xbf16, #tpu.memory_space<vmem>>, vector<1x128x128xbf16>
    %61 = vector.shape_cast %60 : vector<1x128x128xbf16> to vector<128x128xbf16>
    %cst_68 = arith.constant dense<0.000000e+00> : vector<16x128xf32>
    %62 = tpu.matmul %59, %61, %cst_68 {dimension_numbers = #tpu.dot_dimension_numbers<[1], [0], [0], [1], [0, 0, 1, 1], [], []>} : vector<16x128xbf16>, vector<128x128xbf16>, vector<16x128xf32> -> vector<16x128xf32>
    %c0_69 = arith.constant 0 : index
    %c3 = arith.constant 3 : index
    %c0_70 = arith.constant 0 : index
    %c0_71 = arith.constant 0 : index
    %63 = vector.load %arg12[%c0_69, %c3, %c0_70, %c0_71] : memref<4x4x1x128xf32, #tpu.memory_space<vmem>>, vector<1x1x1x128xf32>
    %64 = vector.shape_cast %63 : vector<1x1x1x128xf32> to vector<1x128xf32>
    %65 = vector.broadcast %64 : vector<1x128xf32> to vector<16x128xf32>
    %66 = arith.addf %62, %65 : vector<16x128xf32>
    %cst_72 = arith.constant 0.000000e+00 : f32
    %67 = vector.broadcast %cst_72 : f32 to vector<16x128xf32>
    %68 = arith.maximumf %66, %67 : vector<16x128xf32>
    %c0_73 = arith.constant 0 : index
    %c0_74 = arith.constant 0 : index
    %69 = vector.load %arg17[%c0_73, %c0_74] : memref<16x128xf32, #tpu.memory_space<vmem>>, vector<16x128xf32>
    %70 = arith.addf %69, %68 : vector<16x128xf32>
    %c0_75 = arith.constant 0 : index
    %c0_76 = arith.constant 0 : index
    %71 = vector.load %arg17[%c0_75, %c0_76] : memref<16x128xf32, #tpu.memory_space<vmem>>, vector<16x128xf32>
    tpu.vector_store %arg17[%c0_75, %c0_76], %70 {strides = array<i32>} : memref<16x128xf32, #tpu.memory_space<vmem>>, vector<16x128xf32>,
    %c0_77 = arith.constant 0 : index
    %c0_78 = arith.constant 0 : index
    %72 = vector.load %arg17[%c0_77, %c0_78] : memref<16x128xf32, #tpu.memory_space<vmem>>, vector<16x128xf32>
    %73 = arith.truncf %72 : vector<16x128xf32> to vector<16x128xbf16>
    %c0_79 = arith.constant 0 : index
    %c0_80 = arith.constant 0 : index
    %74 = vector.load %arg18[%c0_79, %c0_80] : memref<16x128xbf16, #tpu.memory_space<vmem>>, vector<16x128xbf16>
    tpu.vector_store %arg18[%c0_79, %c0_80], %73 {strides = array<i32>} : memref<16x128xbf16, #tpu.memory_space<vmem>>, vector<16x128xbf16>,
    %c0_81 = arith.constant 0 : index
    %c0_82 = arith.constant 0 : index
    %75 = vector.load %arg2[%c0_81, %c0_82] : memref<32x16xbf16, #tpu.memory_space<vmem>>, vector<32x16xbf16>
    %c0_83 = arith.constant 0 : index
    %c0_84 = arith.constant 0 : index
    %76 = vector.load %arg18[%c0_83, %c0_84] : memref<16x128xbf16, #tpu.memory_space<vmem>>, vector<16x128xbf16>
    %cst_85 = arith.constant dense<0.000000e+00> : vector<32x128xf32>
    %77 = tpu.matmul %75, %76, %cst_85 {dimension_numbers = #tpu.dot_dimension_numbers<[1], [0], [0], [1], [0, 0, 1, 1], [], []>} : vector<32x16xbf16>, vector<16x128xbf16>, vector<32x128xf32> -> vector<32x128xf32>
    %78 = arith.truncf %77 : vector<32x128xf32> to vector<32x128xbf16>
    %c0_86 = arith.constant 0 : index
    %c0_87 = arith.constant 0 : index
    %79 = vector.load %arg19[%c0_86, %c0_87] : memref<32x384xbf16, #tpu.memory_space<vmem>>, vector<32x128xbf16>
    tpu.vector_store %arg19[%c0_86, %c0_87], %78 {strides = array<i32>} : memref<32x384xbf16, #tpu.memory_space<vmem>>, vector<32x128xbf16>,
    %c0_88 = arith.constant 0 : index
    %c0_89 = arith.constant 0 : index
    %80 = vector.load %arg3[%c0_88, %c0_89] : memref<32x16xbf16, #tpu.memory_space<vmem>>, vector<32x16xbf16>
    %c0_90 = arith.constant 0 : index
    %c0_91 = arith.constant 0 : index
    %81 = vector.load %arg18[%c0_90, %c0_91] : memref<16x128xbf16, #tpu.memory_space<vmem>>, vector<16x128xbf16>
    %cst_92 = arith.constant dense<0.000000e+00> : vector<32x128xf32>
    %82 = tpu.matmul %80, %81, %cst_92 {dimension_numbers = #tpu.dot_dimension_numbers<[1], [0], [0], [1], [0, 0, 1, 1], [], []>} : vector<32x16xbf16>, vector<16x128xbf16>, vector<32x128xf32> -> vector<32x128xf32>
    %83 = arith.truncf %82 : vector<32x128xf32> to vector<32x128xbf16>
    %c0_93 = arith.constant 0 : index
    %c128_94 = arith.constant 128 : index
    %84 = vector.load %arg19[%c0_93, %c128_94] : memref<32x384xbf16, #tpu.memory_space<vmem>>, vector<32x128xbf16>
    tpu.vector_store %arg19[%c0_93, %c128_94], %83 {strides = array<i32>} : memref<32x384xbf16, #tpu.memory_space<vmem>>, vector<32x128xbf16>,
    %c0_95 = arith.constant 0 : index
    %c0_96 = arith.constant 0 : index
    %85 = vector.load %arg19[%c0_95, %c0_96] : memref<32x384xbf16, #tpu.memory_space<vmem>>, vector<32x384xbf16>
    %c1_97 = arith.constant 1 : index
    %c0_98 = arith.constant 0 : index
    %c0_99 = arith.constant 0 : index
    %86 = vector.load %arg8[%c1_97, %c0_98, %c0_99] : memref<4x384x128xbf16, #tpu.memory_space<vmem>>, vector<1x384x128xbf16>
    %87 = vector.shape_cast %86 : vector<1x384x128xbf16> to vector<384x128xbf16>
    %cst_100 = arith.constant dense<0.000000e+00> : vector<32x128xf32>
    %88 = tpu.matmul %85, %87, %cst_100 {dimension_numbers = #tpu.dot_dimension_numbers<[1], [0], [0], [1], [0, 0, 1, 1], [], []>} : vector<32x384xbf16>, vector<384x128xbf16>, vector<32x128xf32> -> vector<32x128xf32>
    %c1_101 = arith.constant 1 : index
    %c0_102 = arith.constant 0 : index
    %c0_103 = arith.constant 0 : index
    %c0_104 = arith.constant 0 : index
    %89 = vector.load %arg12[%c1_101, %c0_102, %c0_103, %c0_104] : memref<4x4x1x128xf32, #tpu.memory_space<vmem>>, vector<1x1x1x128xf32>
    %90 = vector.shape_cast %89 : vector<1x1x1x128xf32> to vector<1x128xf32>
    %91 = vector.broadcast %90 : vector<1x128xf32> to vector<32x128xf32>
    %92 = arith.addf %88, %91 : vector<32x128xf32>
    %cst_105 = arith.constant 0.000000e+00 : f32
    %93 = vector.broadcast %cst_105 : f32 to vector<32x128xf32>
    %94 = arith.maximumf %92, %93 : vector<32x128xf32>
    %95 = arith.truncf %94 : vector<32x128xf32> to vector<32x128xbf16>
    %c1_106 = arith.constant 1 : index
    %c0_107 = arith.constant 0 : index
    %c0_108 = arith.constant 0 : index
    %96 = vector.load %arg9[%c1_106, %c0_107, %c0_108] : memref<4x128x128xbf16, #tpu.memory_space<vmem>>, vector<1x128x128xbf16>
    %97 = vector.shape_cast %96 : vector<1x128x128xbf16> to vector<128x128xbf16>
    %cst_109 = arith.constant dense<0.000000e+00> : vector<32x128xf32>
    %98 = tpu.matmul %95, %97, %cst_109 {dimension_numbers = #tpu.dot_dimension_numbers<[1], [0], [0], [1], [0, 0, 1, 1], [], []>} : vector<32x128xbf16>, vector<128x128xbf16>, vector<32x128xf32> -> vector<32x128xf32>
    %c1_110 = arith.constant 1 : index
    %c1_111 = arith.constant 1 : index
    %c0_112 = arith.constant 0 : index
    %c0_113 = arith.constant 0 : index
    %99 = vector.load %arg12[%c1_110, %c1_111, %c0_112, %c0_113] : memref<4x4x1x128xf32, #tpu.memory_space<vmem>>, vector<1x1x1x128xf32>
    %100 = vector.shape_cast %99 : vector<1x1x1x128xf32> to vector<1x128xf32>
    %101 = vector.broadcast %100 : vector<1x128xf32> to vector<32x128xf32>
    %102 = arith.addf %98, %101 : vector<32x128xf32>
    %cst_114 = arith.constant 0.000000e+00 : f32
    %103 = vector.broadcast %cst_114 : f32 to vector<32x128xf32>
    %104 = arith.maximumf %102, %103 : vector<32x128xf32>
    %105 = arith.truncf %104 : vector<32x128xf32> to vector<32x128xbf16>
    %c0_115 = arith.constant 0 : index
    %c0_116 = arith.constant 0 : index
    %106 = vector.load %arg4[%c0_115, %c0_116] : memref<16x32xbf16, #tpu.memory_space<vmem>>, vector<16x32xbf16>
    %cst_117 = arith.constant dense<0.000000e+00> : vector<16x128xf32>
    %107 = tpu.matmul %106, %105, %cst_117 {dimension_numbers = #tpu.dot_dimension_numbers<[1], [0], [0], [1], [0, 0, 1, 1], [], []>} : vector<16x32xbf16>, vector<32x128xbf16>, vector<16x128xf32> -> vector<16x128xf32>
    %c0_118 = arith.constant 0 : index
    %c0_119 = arith.constant 0 : index
    %108 = vector.load %arg18[%c0_118, %c0_119] : memref<16x128xbf16, #tpu.memory_space<vmem>>, vector<16x128xbf16>
    %c0_120 = arith.constant 0 : index
    %c0_121 = arith.constant 0 : index
    %109 = vector.load %arg20[%c0_120, %c0_121] : memref<16x256xbf16, #tpu.memory_space<vmem>>, vector<16x128xbf16>
    tpu.vector_store %arg20[%c0_120, %c0_121], %108 {strides = array<i32>} : memref<16x256xbf16, #tpu.memory_space<vmem>>, vector<16x128xbf16>,
    %110 = arith.truncf %107 : vector<16x128xf32> to vector<16x128xbf16>
    %c0_122 = arith.constant 0 : index
    %c128_123 = arith.constant 128 : index
    %111 = vector.load %arg20[%c0_122, %c128_123] : memref<16x256xbf16, #tpu.memory_space<vmem>>, vector<16x128xbf16>
    tpu.vector_store %arg20[%c0_122, %c128_123], %110 {strides = array<i32>} : memref<16x256xbf16, #tpu.memory_space<vmem>>, vector<16x128xbf16>,
    %c0_124 = arith.constant 0 : index
    %c0_125 = arith.constant 0 : index
    %112 = vector.load %arg20[%c0_124, %c0_125] : memref<16x256xbf16, #tpu.memory_space<vmem>>, vector<16x256xbf16>
    %c1_126 = arith.constant 1 : index
    %c0_127 = arith.constant 0 : index
    %c0_128 = arith.constant 0 : index
    %113 = vector.load %arg10[%c1_126, %c0_127, %c0_128] : memref<4x256x128xbf16, #tpu.memory_space<vmem>>, vector<1x256x128xbf16>
    %114 = vector.shape_cast %113 : vector<1x256x128xbf16> to vector<256x128xbf16>
    %cst_129 = arith.constant dense<0.000000e+00> : vector<16x128xf32>
    %115 = tpu.matmul %112, %114, %cst_129 {dimension_numbers = #tpu.dot_dimension_numbers<[1], [0], [0], [1], [0, 0, 1, 1], [], []>} : vector<16x256xbf16>, vector<256x128xbf16>, vector<16x128xf32> -> vector<16x128xf32>
    %c1_130 = arith.constant 1 : index
    %c2_131 = arith.constant 2 : index
    %c0_132 = arith.constant 0 : index
    %c0_133 = arith.constant 0 : index
    %116 = vector.load %arg12[%c1_130, %c2_131, %c0_132, %c0_133] : memref<4x4x1x128xf32, #tpu.memory_space<vmem>>, vector<1x1x1x128xf32>
    %117 = vector.shape_cast %116 : vector<1x1x1x128xf32> to vector<1x128xf32>
    %118 = vector.broadcast %117 : vector<1x128xf32> to vector<16x128xf32>
    %119 = arith.addf %115, %118 : vector<16x128xf32>
    %cst_134 = arith.constant 0.000000e+00 : f32
    %120 = vector.broadcast %cst_134 : f32 to vector<16x128xf32>
    %121 = arith.maximumf %119, %120 : vector<16x128xf32>
    %122 = arith.truncf %121 : vector<16x128xf32> to vector<16x128xbf16>
    %c1_135 = arith.constant 1 : index
    %c0_136 = arith.constant 0 : index
    %c0_137 = arith.constant 0 : index
    %123 = vector.load %arg11[%c1_135, %c0_136, %c0_137] : memref<4x128x128xbf16, #tpu.memory_space<vmem>>, vector<1x128x128xbf16>
    %124 = vector.shape_cast %123 : vector<1x128x128xbf16> to vector<128x128xbf16>
    %cst_138 = arith.constant dense<0.000000e+00> : vector<16x128xf32>
    %125 = tpu.matmul %122, %124, %cst_138 {dimension_numbers = #tpu.dot_dimension_numbers<[1], [0], [0], [1], [0, 0, 1, 1], [], []>} : vector<16x128xbf16>, vector<128x128xbf16>, vector<16x128xf32> -> vector<16x128xf32>
    %c1_139 = arith.constant 1 : index
    %c3_140 = arith.constant 3 : index
    %c0_141 = arith.constant 0 : index
    %c0_142 = arith.constant 0 : index
    %126 = vector.load %arg12[%c1_139, %c3_140, %c0_141, %c0_142] : memref<4x4x1x128xf32, #tpu.memory_space<vmem>>, vector<1x1x1x128xf32>
    %127 = vector.shape_cast %126 : vector<1x1x1x128xf32> to vector<1x128xf32>
    %128 = vector.broadcast %127 : vector<1x128xf32> to vector<16x128xf32>
    %129 = arith.addf %125, %128 : vector<16x128xf32>
    %cst_143 = arith.constant 0.000000e+00 : f32
    %130 = vector.broadcast %cst_143 : f32 to vector<16x128xf32>
    %131 = arith.maximumf %129, %130 : vector<16x128xf32>
    %c0_144 = arith.constant 0 : index
    %c0_145 = arith.constant 0 : index
    %132 = vector.load %arg17[%c0_144, %c0_145] : memref<16x128xf32, #tpu.memory_space<vmem>>, vector<16x128xf32>
    %133 = arith.addf %132, %131 : vector<16x128xf32>
    %c0_146 = arith.constant 0 : index
    %c0_147 = arith.constant 0 : index
    %134 = vector.load %arg17[%c0_146, %c0_147] : memref<16x128xf32, #tpu.memory_space<vmem>>, vector<16x128xf32>
    tpu.vector_store %arg17[%c0_146, %c0_147], %133 {strides = array<i32>} : memref<16x128xf32, #tpu.memory_space<vmem>>, vector<16x128xf32>,
    %c0_148 = arith.constant 0 : index
    %c0_149 = arith.constant 0 : index
    %135 = vector.load %arg17[%c0_148, %c0_149] : memref<16x128xf32, #tpu.memory_space<vmem>>, vector<16x128xf32>
    %136 = arith.truncf %135 : vector<16x128xf32> to vector<16x128xbf16>
    %c0_150 = arith.constant 0 : index
    %c0_151 = arith.constant 0 : index
    %137 = vector.load %arg18[%c0_150, %c0_151] : memref<16x128xbf16, #tpu.memory_space<vmem>>, vector<16x128xbf16>
    tpu.vector_store %arg18[%c0_150, %c0_151], %136 {strides = array<i32>} : memref<16x128xbf16, #tpu.memory_space<vmem>>, vector<16x128xbf16>,
    %c0_152 = arith.constant 0 : index
    %c0_153 = arith.constant 0 : index
    %138 = vector.load %arg2[%c0_152, %c0_153] : memref<32x16xbf16, #tpu.memory_space<vmem>>, vector<32x16xbf16>
    %c0_154 = arith.constant 0 : index
    %c0_155 = arith.constant 0 : index
    %139 = vector.load %arg18[%c0_154, %c0_155] : memref<16x128xbf16, #tpu.memory_space<vmem>>, vector<16x128xbf16>
    %cst_156 = arith.constant dense<0.000000e+00> : vector<32x128xf32>
    %140 = tpu.matmul %138, %139, %cst_156 {dimension_numbers = #tpu.dot_dimension_numbers<[1], [0], [0], [1], [0, 0, 1, 1], [], []>} : vector<32x16xbf16>, vector<16x128xbf16>, vector<32x128xf32> -> vector<32x128xf32>
    %141 = arith.truncf %140 : vector<32x128xf32> to vector<32x128xbf16>
    %c0_157 = arith.constant 0 : index
    %c0_158 = arith.constant 0 : index
    %142 = vector.load %arg19[%c0_157, %c0_158] : memref<32x384xbf16, #tpu.memory_space<vmem>>, vector<32x128xbf16>
    tpu.vector_store %arg19[%c0_157, %c0_158], %141 {strides = array<i32>} : memref<32x384xbf16, #tpu.memory_space<vmem>>, vector<32x128xbf16>,
    %c0_159 = arith.constant 0 : index
    %c0_160 = arith.constant 0 : index
    %143 = vector.load %arg3[%c0_159, %c0_160] : memref<32x16xbf16, #tpu.memory_space<vmem>>, vector<32x16xbf16>
    %c0_161 = arith.constant 0 : index
    %c0_162 = arith.constant 0 : index
    %144 = vector.load %arg18[%c0_161, %c0_162] : memref<16x128xbf16, #tpu.memory_space<vmem>>, vector<16x128xbf16>
    %cst_163 = arith.constant dense<0.000000e+00> : vector<32x128xf32>
    %145 = tpu.matmul %143, %144, %cst_163 {dimension_numbers = #tpu.dot_dimension_numbers<[1], [0], [0], [1], [0, 0, 1, 1], [], []>} : vector<32x16xbf16>, vector<16x128xbf16>, vector<32x128xf32> -> vector<32x128xf32>
    %146 = arith.truncf %145 : vector<32x128xf32> to vector<32x128xbf16>
    %c0_164 = arith.constant 0 : index
    %c128_165 = arith.constant 128 : index
    %147 = vector.load %arg19[%c0_164, %c128_165] : memref<32x384xbf16, #tpu.memory_space<vmem>>, vector<32x128xbf16>
    tpu.vector_store %arg19[%c0_164, %c128_165], %146 {strides = array<i32>} : memref<32x384xbf16, #tpu.memory_space<vmem>>, vector<32x128xbf16>,
    %c0_166 = arith.constant 0 : index
    %c0_167 = arith.constant 0 : index
    %148 = vector.load %arg19[%c0_166, %c0_167] : memref<32x384xbf16, #tpu.memory_space<vmem>>, vector<32x384xbf16>
    %c2_168 = arith.constant 2 : index
    %c0_169 = arith.constant 0 : index
    %c0_170 = arith.constant 0 : index
    %149 = vector.load %arg8[%c2_168, %c0_169, %c0_170] : memref<4x384x128xbf16, #tpu.memory_space<vmem>>, vector<1x384x128xbf16>
    %150 = vector.shape_cast %149 : vector<1x384x128xbf16> to vector<384x128xbf16>
    %cst_171 = arith.constant dense<0.000000e+00> : vector<32x128xf32>
    %151 = tpu.matmul %148, %150, %cst_171 {dimension_numbers = #tpu.dot_dimension_numbers<[1], [0], [0], [1], [0, 0, 1, 1], [], []>} : vector<32x384xbf16>, vector<384x128xbf16>, vector<32x128xf32> -> vector<32x128xf32>
    %c2_172 = arith.constant 2 : index
    %c0_173 = arith.constant 0 : index
    %c0_174 = arith.constant 0 : index
    %c0_175 = arith.constant 0 : index
    %152 = vector.load %arg12[%c2_172, %c0_173, %c0_174, %c0_175] : memref<4x4x1x128xf32, #tpu.memory_space<vmem>>, vector<1x1x1x128xf32>
    %153 = vector.shape_cast %152 : vector<1x1x1x128xf32> to vector<1x128xf32>
    %154 = vector.broadcast %153 : vector<1x128xf32> to vector<32x128xf32>
    %155 = arith.addf %151, %154 : vector<32x128xf32>
    %cst_176 = arith.constant 0.000000e+00 : f32
    %156 = vector.broadcast %cst_176 : f32 to vector<32x128xf32>
    %157 = arith.maximumf %155, %156 : vector<32x128xf32>
    %158 = arith.truncf %157 : vector<32x128xf32> to vector<32x128xbf16>
    %c2_177 = arith.constant 2 : index
    %c0_178 = arith.constant 0 : index
    %c0_179 = arith.constant 0 : index
    %159 = vector.load %arg9[%c2_177, %c0_178, %c0_179] : memref<4x128x128xbf16, #tpu.memory_space<vmem>>, vector<1x128x128xbf16>
    %160 = vector.shape_cast %159 : vector<1x128x128xbf16> to vector<128x128xbf16>
    %cst_180 = arith.constant dense<0.000000e+00> : vector<32x128xf32>
    %161 = tpu.matmul %158, %160, %cst_180 {dimension_numbers = #tpu.dot_dimension_numbers<[1], [0], [0], [1], [0, 0, 1, 1], [], []>} : vector<32x128xbf16>, vector<128x128xbf16>, vector<32x128xf32> -> vector<32x128xf32>
    %c2_181 = arith.constant 2 : index
    %c1_182 = arith.constant 1 : index
    %c0_183 = arith.constant 0 : index
    %c0_184 = arith.constant 0 : index
    %162 = vector.load %arg12[%c2_181, %c1_182, %c0_183, %c0_184] : memref<4x4x1x128xf32, #tpu.memory_space<vmem>>, vector<1x1x1x128xf32>
    %163 = vector.shape_cast %162 : vector<1x1x1x128xf32> to vector<1x128xf32>
    %164 = vector.broadcast %163 : vector<1x128xf32> to vector<32x128xf32>
    %165 = arith.addf %161, %164 : vector<32x128xf32>
    %cst_185 = arith.constant 0.000000e+00 : f32
    %166 = vector.broadcast %cst_185 : f32 to vector<32x128xf32>
    %167 = arith.maximumf %165, %166 : vector<32x128xf32>
    %168 = arith.truncf %167 : vector<32x128xf32> to vector<32x128xbf16>
    %c0_186 = arith.constant 0 : index
    %c0_187 = arith.constant 0 : index
    %169 = vector.load %arg4[%c0_186, %c0_187] : memref<16x32xbf16, #tpu.memory_space<vmem>>, vector<16x32xbf16>
    %cst_188 = arith.constant dense<0.000000e+00> : vector<16x128xf32>
    %170 = tpu.matmul %169, %168, %cst_188 {dimension_numbers = #tpu.dot_dimension_numbers<[1], [0], [0], [1], [0, 0, 1, 1], [], []>} : vector<16x32xbf16>, vector<32x128xbf16>, vector<16x128xf32> -> vector<16x128xf32>
    %c0_189 = arith.constant 0 : index
    %c0_190 = arith.constant 0 : index
    %171 = vector.load %arg18[%c0_189, %c0_190] : memref<16x128xbf16, #tpu.memory_space<vmem>>, vector<16x128xbf16>
    %c0_191 = arith.constant 0 : index
    %c0_192 = arith.constant 0 : index
    %172 = vector.load %arg20[%c0_191, %c0_192] : memref<16x256xbf16, #tpu.memory_space<vmem>>, vector<16x128xbf16>
    tpu.vector_store %arg20[%c0_191, %c0_192], %171 {strides = array<i32>} : memref<16x256xbf16, #tpu.memory_space<vmem>>, vector<16x128xbf16>,
    %173 = arith.truncf %170 : vector<16x128xf32> to vector<16x128xbf16>
    %c0_193 = arith.constant 0 : index
    %c128_194 = arith.constant 128 : index
    %174 = vector.load %arg20[%c0_193, %c128_194] : memref<16x256xbf16, #tpu.memory_space<vmem>>, vector<16x128xbf16>
    tpu.vector_store %arg20[%c0_193, %c128_194], %173 {strides = array<i32>} : memref<16x256xbf16, #tpu.memory_space<vmem>>, vector<16x128xbf16>,
    %c0_195 = arith.constant 0 : index
    %c0_196 = arith.constant 0 : index
    %175 = vector.load %arg20[%c0_195, %c0_196] : memref<16x256xbf16, #tpu.memory_space<vmem>>, vector<16x256xbf16>
    %c2_197 = arith.constant 2 : index
    %c0_198 = arith.constant 0 : index
    %c0_199 = arith.constant 0 : index
    %176 = vector.load %arg10[%c2_197, %c0_198, %c0_199] : memref<4x256x128xbf16, #tpu.memory_space<vmem>>, vector<1x256x128xbf16>
    %177 = vector.shape_cast %176 : vector<1x256x128xbf16> to vector<256x128xbf16>
    %cst_200 = arith.constant dense<0.000000e+00> : vector<16x128xf32>
    %178 = tpu.matmul %175, %177, %cst_200 {dimension_numbers = #tpu.dot_dimension_numbers<[1], [0], [0], [1], [0, 0, 1, 1], [], []>} : vector<16x256xbf16>, vector<256x128xbf16>, vector<16x128xf32> -> vector<16x128xf32>
    %c2_201 = arith.constant 2 : index
    %c2_202 = arith.constant 2 : index
    %c0_203 = arith.constant 0 : index
    %c0_204 = arith.constant 0 : index
    %179 = vector.load %arg12[%c2_201, %c2_202, %c0_203, %c0_204] : memref<4x4x1x128xf32, #tpu.memory_space<vmem>>, vector<1x1x1x128xf32>
    %180 = vector.shape_cast %179 : vector<1x1x1x128xf32> to vector<1x128xf32>
    %181 = vector.broadcast %180 : vector<1x128xf32> to vector<16x128xf32>
    %182 = arith.addf %178, %181 : vector<16x128xf32>
    %cst_205 = arith.constant 0.000000e+00 : f32
    %183 = vector.broadcast %cst_205 : f32 to vector<16x128xf32>
    %184 = arith.maximumf %182, %183 : vector<16x128xf32>
    %185 = arith.truncf %184 : vector<16x128xf32> to vector<16x128xbf16>
    %c2_206 = arith.constant 2 : index
    %c0_207 = arith.constant 0 : index
    %c0_208 = arith.constant 0 : index
    %186 = vector.load %arg11[%c2_206, %c0_207, %c0_208] : memref<4x128x128xbf16, #tpu.memory_space<vmem>>, vector<1x128x128xbf16>
    %187 = vector.shape_cast %186 : vector<1x128x128xbf16> to vector<128x128xbf16>
    %cst_209 = arith.constant dense<0.000000e+00> : vector<16x128xf32>
    %188 = tpu.matmul %185, %187, %cst_209 {dimension_numbers = #tpu.dot_dimension_numbers<[1], [0], [0], [1], [0, 0, 1, 1], [], []>} : vector<16x128xbf16>, vector<128x128xbf16>, vector<16x128xf32> -> vector<16x128xf32>
    %c2_210 = arith.constant 2 : index
    %c3_211 = arith.constant 3 : index
    %c0_212 = arith.constant 0 : index
    %c0_213 = arith.constant 0 : index
    %189 = vector.load %arg12[%c2_210, %c3_211, %c0_212, %c0_213] : memref<4x4x1x128xf32, #tpu.memory_space<vmem>>, vector<1x1x1x128xf32>
    %190 = vector.shape_cast %189 : vector<1x1x1x128xf32> to vector<1x128xf32>
    %191 = vector.broadcast %190 : vector<1x128xf32> to vector<16x128xf32>
    %192 = arith.addf %188, %191 : vector<16x128xf32>
    %cst_214 = arith.constant 0.000000e+00 : f32
    %193 = vector.broadcast %cst_214 : f32 to vector<16x128xf32>
    %194 = arith.maximumf %192, %193 : vector<16x128xf32>
    %c0_215 = arith.constant 0 : index
    %c0_216 = arith.constant 0 : index
    %195 = vector.load %arg17[%c0_215, %c0_216] : memref<16x128xf32, #tpu.memory_space<vmem>>, vector<16x128xf32>
    %196 = arith.addf %195, %194 : vector<16x128xf32>
    %c0_217 = arith.constant 0 : index
    %c0_218 = arith.constant 0 : index
    %197 = vector.load %arg17[%c0_217, %c0_218] : memref<16x128xf32, #tpu.memory_space<vmem>>, vector<16x128xf32>
    tpu.vector_store %arg17[%c0_217, %c0_218], %196 {strides = array<i32>} : memref<16x128xf32, #tpu.memory_space<vmem>>, vector<16x128xf32>,
    %c0_219 = arith.constant 0 : index
    %c0_220 = arith.constant 0 : index
    %198 = vector.load %arg17[%c0_219, %c0_220] : memref<16x128xf32, #tpu.memory_space<vmem>>, vector<16x128xf32>
    %199 = arith.truncf %198 : vector<16x128xf32> to vector<16x128xbf16>
    %c0_221 = arith.constant 0 : index
    %c0_222 = arith.constant 0 : index
    %200 = vector.load %arg18[%c0_221, %c0_222] : memref<16x128xbf16, #tpu.memory_space<vmem>>, vector<16x128xbf16>
    tpu.vector_store %arg18[%c0_221, %c0_222], %199 {strides = array<i32>} : memref<16x128xbf16, #tpu.memory_space<vmem>>, vector<16x128xbf16>,
    %c0_223 = arith.constant 0 : index
    %c0_224 = arith.constant 0 : index
    %201 = vector.load %arg2[%c0_223, %c0_224] : memref<32x16xbf16, #tpu.memory_space<vmem>>, vector<32x16xbf16>
    %c0_225 = arith.constant 0 : index
    %c0_226 = arith.constant 0 : index
    %202 = vector.load %arg18[%c0_225, %c0_226] : memref<16x128xbf16, #tpu.memory_space<vmem>>, vector<16x128xbf16>
    %cst_227 = arith.constant dense<0.000000e+00> : vector<32x128xf32>
    %203 = tpu.matmul %201, %202, %cst_227 {dimension_numbers = #tpu.dot_dimension_numbers<[1], [0], [0], [1], [0, 0, 1, 1], [], []>} : vector<32x16xbf16>, vector<16x128xbf16>, vector<32x128xf32> -> vector<32x128xf32>
    %204 = arith.truncf %203 : vector<32x128xf32> to vector<32x128xbf16>
    %c0_228 = arith.constant 0 : index
    %c0_229 = arith.constant 0 : index
    %205 = vector.load %arg19[%c0_228, %c0_229] : memref<32x384xbf16, #tpu.memory_space<vmem>>, vector<32x128xbf16>
    tpu.vector_store %arg19[%c0_228, %c0_229], %204 {strides = array<i32>} : memref<32x384xbf16, #tpu.memory_space<vmem>>, vector<32x128xbf16>,
    %c0_230 = arith.constant 0 : index
    %c0_231 = arith.constant 0 : index
    %206 = vector.load %arg3[%c0_230, %c0_231] : memref<32x16xbf16, #tpu.memory_space<vmem>>, vector<32x16xbf16>
    %c0_232 = arith.constant 0 : index
    %c0_233 = arith.constant 0 : index
    %207 = vector.load %arg18[%c0_232, %c0_233] : memref<16x128xbf16, #tpu.memory_space<vmem>>, vector<16x128xbf16>
    %cst_234 = arith.constant dense<0.000000e+00> : vector<32x128xf32>
    %208 = tpu.matmul %206, %207, %cst_234 {dimension_numbers = #tpu.dot_dimension_numbers<[1], [0], [0], [1], [0, 0, 1, 1], [], []>} : vector<32x16xbf16>, vector<16x128xbf16>, vector<32x128xf32> -> vector<32x128xf32>
    %209 = arith.truncf %208 : vector<32x128xf32> to vector<32x128xbf16>
    %c0_235 = arith.constant 0 : index
    %c128_236 = arith.constant 128 : index
    %210 = vector.load %arg19[%c0_235, %c128_236] : memref<32x384xbf16, #tpu.memory_space<vmem>>, vector<32x128xbf16>
    tpu.vector_store %arg19[%c0_235, %c128_236], %209 {strides = array<i32>} : memref<32x384xbf16, #tpu.memory_space<vmem>>, vector<32x128xbf16>,
    %c0_237 = arith.constant 0 : index
    %c0_238 = arith.constant 0 : index
    %211 = vector.load %arg19[%c0_237, %c0_238] : memref<32x384xbf16, #tpu.memory_space<vmem>>, vector<32x384xbf16>
    %c3_239 = arith.constant 3 : index
    %c0_240 = arith.constant 0 : index
    %c0_241 = arith.constant 0 : index
    %212 = vector.load %arg8[%c3_239, %c0_240, %c0_241] : memref<4x384x128xbf16, #tpu.memory_space<vmem>>, vector<1x384x128xbf16>
    %213 = vector.shape_cast %212 : vector<1x384x128xbf16> to vector<384x128xbf16>
    %cst_242 = arith.constant dense<0.000000e+00> : vector<32x128xf32>
    %214 = tpu.matmul %211, %213, %cst_242 {dimension_numbers = #tpu.dot_dimension_numbers<[1], [0], [0], [1], [0, 0, 1, 1], [], []>} : vector<32x384xbf16>, vector<384x128xbf16>, vector<32x128xf32> -> vector<32x128xf32>
    %c3_243 = arith.constant 3 : index
    %c0_244 = arith.constant 0 : index
    %c0_245 = arith.constant 0 : index
    %c0_246 = arith.constant 0 : index
    %215 = vector.load %arg12[%c3_243, %c0_244, %c0_245, %c0_246] : memref<4x4x1x128xf32, #tpu.memory_space<vmem>>, vector<1x1x1x128xf32>
    %216 = vector.shape_cast %215 : vector<1x1x1x128xf32> to vector<1x128xf32>
    %217 = vector.broadcast %216 : vector<1x128xf32> to vector<32x128xf32>
    %218 = arith.addf %214, %217 : vector<32x128xf32>
    %cst_247 = arith.constant 0.000000e+00 : f32
    %219 = vector.broadcast %cst_247 : f32 to vector<32x128xf32>
    %220 = arith.maximumf %218, %219 : vector<32x128xf32>
    %221 = arith.truncf %220 : vector<32x128xf32> to vector<32x128xbf16>
    %c3_248 = arith.constant 3 : index
    %c0_249 = arith.constant 0 : index
    %c0_250 = arith.constant 0 : index
    %222 = vector.load %arg9[%c3_248, %c0_249, %c0_250] : memref<4x128x128xbf16, #tpu.memory_space<vmem>>, vector<1x128x128xbf16>
    %223 = vector.shape_cast %222 : vector<1x128x128xbf16> to vector<128x128xbf16>
    %cst_251 = arith.constant dense<0.000000e+00> : vector<32x128xf32>
    %224 = tpu.matmul %221, %223, %cst_251 {dimension_numbers = #tpu.dot_dimension_numbers<[1], [0], [0], [1], [0, 0, 1, 1], [], []>} : vector<32x128xbf16>, vector<128x128xbf16>, vector<32x128xf32> -> vector<32x128xf32>
    %c3_252 = arith.constant 3 : index
    %c1_253 = arith.constant 1 : index
    %c0_254 = arith.constant 0 : index
    %c0_255 = arith.constant 0 : index
    %225 = vector.load %arg12[%c3_252, %c1_253, %c0_254, %c0_255] : memref<4x4x1x128xf32, #tpu.memory_space<vmem>>, vector<1x1x1x128xf32>
    %226 = vector.shape_cast %225 : vector<1x1x1x128xf32> to vector<1x128xf32>
    %227 = vector.broadcast %226 : vector<1x128xf32> to vector<32x128xf32>
    %228 = arith.addf %224, %227 : vector<32x128xf32>
    %cst_256 = arith.constant 0.000000e+00 : f32
    %229 = vector.broadcast %cst_256 : f32 to vector<32x128xf32>
    %230 = arith.maximumf %228, %229 : vector<32x128xf32>
    %231 = arith.truncf %230 : vector<32x128xf32> to vector<32x128xbf16>
    %c0_257 = arith.constant 0 : index
    %c0_258 = arith.constant 0 : index
    %232 = vector.load %arg4[%c0_257, %c0_258] : memref<16x32xbf16, #tpu.memory_space<vmem>>, vector<16x32xbf16>
    %cst_259 = arith.constant dense<0.000000e+00> : vector<16x128xf32>
    %233 = tpu.matmul %232, %231, %cst_259 {dimension_numbers = #tpu.dot_dimension_numbers<[1], [0], [0], [1], [0, 0, 1, 1], [], []>} : vector<16x32xbf16>, vector<32x128xbf16>, vector<16x128xf32> -> vector<16x128xf32>
    %c0_260 = arith.constant 0 : index
    %c0_261 = arith.constant 0 : index
    %234 = vector.load %arg18[%c0_260, %c0_261] : memref<16x128xbf16, #tpu.memory_space<vmem>>, vector<16x128xbf16>
    %c0_262 = arith.constant 0 : index
    %c0_263 = arith.constant 0 : index
    %235 = vector.load %arg20[%c0_262, %c0_263] : memref<16x256xbf16, #tpu.memory_space<vmem>>, vector<16x128xbf16>
    tpu.vector_store %arg20[%c0_262, %c0_263], %234 {strides = array<i32>} : memref<16x256xbf16, #tpu.memory_space<vmem>>, vector<16x128xbf16>,
    %236 = arith.truncf %233 : vector<16x128xf32> to vector<16x128xbf16>
    %c0_264 = arith.constant 0 : index
    %c128_265 = arith.constant 128 : index
    %237 = vector.load %arg20[%c0_264, %c128_265] : memref<16x256xbf16, #tpu.memory_space<vmem>>, vector<16x128xbf16>
    tpu.vector_store %arg20[%c0_264, %c128_265], %236 {strides = array<i32>} : memref<16x256xbf16, #tpu.memory_space<vmem>>, vector<16x128xbf16>,
    %c0_266 = arith.constant 0 : index
    %c0_267 = arith.constant 0 : index
    %238 = vector.load %arg20[%c0_266, %c0_267] : memref<16x256xbf16, #tpu.memory_space<vmem>>, vector<16x256xbf16>
    %c3_268 = arith.constant 3 : index
    %c0_269 = arith.constant 0 : index
    %c0_270 = arith.constant 0 : index
    %239 = vector.load %arg10[%c3_268, %c0_269, %c0_270] : memref<4x256x128xbf16, #tpu.memory_space<vmem>>, vector<1x256x128xbf16>
    %240 = vector.shape_cast %239 : vector<1x256x128xbf16> to vector<256x128xbf16>
    %cst_271 = arith.constant dense<0.000000e+00> : vector<16x128xf32>
    %241 = tpu.matmul %238, %240, %cst_271 {dimension_numbers = #tpu.dot_dimension_numbers<[1], [0], [0], [1], [0, 0, 1, 1], [], []>} : vector<16x256xbf16>, vector<256x128xbf16>, vector<16x128xf32> -> vector<16x128xf32>
    %c3_272 = arith.constant 3 : index
    %c2_273 = arith.constant 2 : index
    %c0_274 = arith.constant 0 : index
    %c0_275 = arith.constant 0 : index
    %242 = vector.load %arg12[%c3_272, %c2_273, %c0_274, %c0_275] : memref<4x4x1x128xf32, #tpu.memory_space<vmem>>, vector<1x1x1x128xf32>
    %243 = vector.shape_cast %242 : vector<1x1x1x128xf32> to vector<1x128xf32>
    %244 = vector.broadcast %243 : vector<1x128xf32> to vector<16x128xf32>
    %245 = arith.addf %241, %244 : vector<16x128xf32>
    %cst_276 = arith.constant 0.000000e+00 : f32
    %246 = vector.broadcast %cst_276 : f32 to vector<16x128xf32>
    %247 = arith.maximumf %245, %246 : vector<16x128xf32>
    %248 = arith.truncf %247 : vector<16x128xf32> to vector<16x128xbf16>
    %c3_277 = arith.constant 3 : index
    %c0_278 = arith.constant 0 : index
    %c0_279 = arith.constant 0 : index
    %249 = vector.load %arg11[%c3_277, %c0_278, %c0_279] : memref<4x128x128xbf16, #tpu.memory_space<vmem>>, vector<1x128x128xbf16>
    %250 = vector.shape_cast %249 : vector<1x128x128xbf16> to vector<128x128xbf16>
    %cst_280 = arith.constant dense<0.000000e+00> : vector<16x128xf32>
    %251 = tpu.matmul %248, %250, %cst_280 {dimension_numbers = #tpu.dot_dimension_numbers<[1], [0], [0], [1], [0, 0, 1, 1], [], []>} : vector<16x128xbf16>, vector<128x128xbf16>, vector<16x128xf32> -> vector<16x128xf32>
    %c3_281 = arith.constant 3 : index
    %c3_282 = arith.constant 3 : index
    %c0_283 = arith.constant 0 : index
    %c0_284 = arith.constant 0 : index
    %252 = vector.load %arg12[%c3_281, %c3_282, %c0_283, %c0_284] : memref<4x4x1x128xf32, #tpu.memory_space<vmem>>, vector<1x1x1x128xf32>
    %253 = vector.shape_cast %252 : vector<1x1x1x128xf32> to vector<1x128xf32>
    %254 = vector.broadcast %253 : vector<1x128xf32> to vector<16x128xf32>
    %255 = arith.addf %251, %254 : vector<16x128xf32>
    %cst_285 = arith.constant 0.000000e+00 : f32
    %256 = vector.broadcast %cst_285 : f32 to vector<16x128xf32>
    %257 = arith.maximumf %255, %256 : vector<16x128xf32>
    %c0_286 = arith.constant 0 : index
    %c0_287 = arith.constant 0 : index
    %258 = vector.load %arg17[%c0_286, %c0_287] : memref<16x128xf32, #tpu.memory_space<vmem>>, vector<16x128xf32>
    %259 = arith.addf %258, %257 : vector<16x128xf32>
    %c0_288 = arith.constant 0 : index
    %c0_289 = arith.constant 0 : index
    %260 = vector.load %arg17[%c0_288, %c0_289] : memref<16x128xf32, #tpu.memory_space<vmem>>, vector<16x128xf32>
    tpu.vector_store %arg17[%c0_288, %c0_289], %259 {strides = array<i32>} : memref<16x128xf32, #tpu.memory_space<vmem>>, vector<16x128xf32>,
    %c0_290 = arith.constant 0 : index
    %c0_291 = arith.constant 0 : index
    %261 = vector.load %arg17[%c0_290, %c0_291] : memref<16x128xf32, #tpu.memory_space<vmem>>, vector<16x128xf32>
    %262 = arith.truncf %261 : vector<16x128xf32> to vector<16x128xbf16>
    %c0_292 = arith.constant 0 : index
    %c0_293 = arith.constant 0 : index
    %263 = vector.load %arg18[%c0_292, %c0_293] : memref<16x128xbf16, #tpu.memory_space<vmem>>, vector<16x128xbf16>
    tpu.vector_store %arg18[%c0_292, %c0_293], %262 {strides = array<i32>} : memref<16x128xbf16, #tpu.memory_space<vmem>>, vector<16x128xbf16>,
    %c0_294 = arith.constant 0 : index
    %c0_295 = arith.constant 0 : index
    %264 = vector.load %arg5[%c0_294, %c0_295] : memref<8x16xbf16, #tpu.memory_space<vmem>>, vector<8x16xbf16>
    %c0_296 = arith.constant 0 : index
    %c0_297 = arith.constant 0 : index
    %265 = vector.load %arg18[%c0_296, %c0_297] : memref<16x128xbf16, #tpu.memory_space<vmem>>, vector<16x128xbf16>
    %cst_298 = arith.constant dense<0.000000e+00> : vector<8x128xf32>
    %266 = tpu.matmul %264, %265, %cst_298 {dimension_numbers = #tpu.dot_dimension_numbers<[1], [0], [0], [1], [0, 0, 1, 1], [], []>} : vector<8x16xbf16>, vector<16x128xbf16>, vector<8x128xf32> -> vector<8x128xf32>
    %c0_299 = arith.constant 0 : index
    %c0_300 = arith.constant 0 : index
    %267 = vector.load %arg15[%c0_299, %c0_300] : memref<8x128xf32, #tpu.memory_space<vmem>>, vector<8x128xf32>
    %268 = arith.mulf %266, %267 : vector<8x128xf32>
    %269 = arith.truncf %268 : vector<8x128xf32> to vector<8x128xbf16>
    %c0_301 = arith.constant 0 : index
    %c0_302 = arith.constant 0 : index
    %270 = vector.load %arg13[%c0_301, %c0_302] : memref<128x128xbf16, #tpu.memory_space<vmem>>, vector<128x128xbf16>
    %cst_303 = arith.constant dense<0.000000e+00> : vector<8x128xf32>
    %271 = tpu.matmul %269, %270, %cst_303 {dimension_numbers = #tpu.dot_dimension_numbers<[1], [0], [0], [1], [0, 0, 1, 1], [], []>} : vector<8x128xbf16>, vector<128x128xbf16>, vector<8x128xf32> -> vector<8x128xf32>
    %c0_304 = arith.constant 0 : index
    %c0_305 = arith.constant 0 : index
    %272 = vector.load %arg14[%c0_304, %c0_305] : memref<1x128xf32, #tpu.memory_space<vmem>>, vector<1x128xf32>
    %273 = vector.broadcast %272 : vector<1x128xf32> to vector<8x128xf32>
    %274 = arith.addf %271, %273 : vector<8x128xf32>
    %c0_306 = arith.constant 0 : index
    %c0_307 = arith.constant 0 : index
    %275 = vector.load %arg16[%c0_306, %c0_307] : memref<8x128xf32, #tpu.memory_space<vmem>>, vector<8x128xf32>
    tpu.vector_store %arg16[%c0_306, %c0_307], %274 {strides = array<i32>} : memref<8x128xf32, #tpu.memory_space<vmem>>, vector<8x128xf32>,
    return
  }
}

</mosaic_0001>

<llo_original>
// kernel: gnn_forward.1
$region0: #{gnn_forward.1}
  #allocation0 [shape = 'u32[]', space=smem, size = 0x4, offset = 0x4, fixed_abs, tag = 'smem constant byte address 0x4 - core index']
  #allocation1 [shape = 'u32[144,128]{1,0:T(1,128)}', space=vmem, size = 0x12000, scoped, tag = 'internal scratch']
  #allocation2 [shape = 'f32[16,128]{1,0:T(8,128)}', space=vmem, size = 0x2000, scoped, tag = 'scratch operand']
  #allocation3 [shape = 'bf16[16,128]{1,0:T(16,128)(2,1)}', space=vmem, size = 0x1000, scoped, tag = 'scratch operand']
  #allocation4 [shape = 'bf16[32,384]{1,0:T(16,128)(2,1)}', space=vmem, size = 0x6000, scoped, tag = 'scratch operand']
  #allocation5 [shape = 'bf16[16,256]{1,0:T(16,128)(2,1)}', space=vmem, size = 0x2000, scoped, tag = 'scratch operand']
  %s0 = inlined_call_operand.vmem [shape: bf16[16,128], index: 0, kind: input, shape index: {}]
  %s1 = inlined_call_operand.vmem [shape: bf16[32,128], index: 1, kind: input, shape index: {}]
  %s2 = inlined_call_operand.vmem [shape: bf16[32,16], index: 2, kind: input, shape index: {}]
  %s3 = inlined_call_operand.vmem [shape: bf16[32,16], index: 3, kind: input, shape index: {}]
  %s4 = inlined_call_operand.vmem [shape: bf16[16,32], index: 4, kind: input, shape index: {}]
  %s5 = inlined_call_operand.vmem [shape: bf16[8,16], index: 5, kind: input, shape index: {}]
  %s6 = inlined_call_operand.vmem [shape: bf16[128,128], index: 6, kind: input, shape index: {}]
  %s7 = inlined_call_operand.vmem [shape: f32[1,128], index: 7, kind: input, shape index: {}]
  %s8 = inlined_call_operand.vmem [shape: bf16[4,384,128], index: 8, kind: input, shape index: {}]
  %s9 = inlined_call_operand.vmem [shape: bf16[4,128,128], index: 9, kind: input, shape index: {}]
  %s10 = inlined_call_operand.vmem [shape: bf16[4,256,128], index: 10, kind: input, shape index: {}]
  %s11 = inlined_call_operand.vmem [shape: bf16[4,128,128], index: 11, kind: input, shape index: {}]
  %s12 = inlined_call_operand.vmem [shape: f32[4,4,1,128], index: 12, kind: input, shape index: {}]
  %s13 = inlined_call_operand.vmem [shape: bf16[128,128], index: 13, kind: input, shape index: {}]
  %s14 = inlined_call_operand.vmem [shape: f32[1,128], index: 14, kind: input, shape index: {}]
  %s15 = inlined_call_operand.vmem [shape: f32[8,128], index: 15, kind: input, shape index: {}]
  %s16 = inlined_call_operand.vmem [shape: f32[8,128], index: 16, kind: output, shape index: {}]
  %s17 = sld [smem:[#allocation0]]
  $region74: #{gnn_forward.1} parent=0
    _
  %s19 = ssub.s32 1, %s17
  %s20 = scalar_select 0, %s19, %s17
  // Predicated region
  $region2: #{gnn_forward.1} parent=0 // pred_check
    _
  $region3: #{gnn_forward.1} parent=0 // pred_check_branch
    %22 = sbr.rel (0) target = $region5
  $region4: #{gnn_forward.1} parent=0 // pred_region
    _
  $region5: #{gnn_forward.1} parent=0 // pred_fallthru
    _
  // Predicated region
  $region6: #{gnn_forward.1} parent=0 // pred_check
    _
  $region7: #{gnn_forward.1} parent=0 // pred_check_branch
    %24 = sbr.rel (0) target = $region9
  $region8: #{gnn_forward.1} parent=0 // pred_region
    _
  $region9: #{gnn_forward.1} parent=0 // pred_fallthru
    _
  // Predicated region
  $region10: #{gnn_forward.1} parent=0 // pred_check
    _
  $region11: #{gnn_forward.1} parent=0 // pred_check_branch
    %26 = sbr.rel (0) target = $region13
  $region12: #{gnn_forward.1} parent=0 // pred_region
    _
  $region13: #{gnn_forward.1} parent=0 // pred_fallthru
    _
  // Predicated region
  $region14: #{gnn_forward.1} parent=0 // pred_check
    _
  $region15: #{gnn_forward.1} parent=0 // pred_check_branch
    %28 = sbr.rel (0) target = $region17
  $region16: #{gnn_forward.1} parent=0 // pred_region
    _
  $region17: #{gnn_forward.1} parent=0 // pred_fallthru
    _
  // Predicated region
  $region18: #{gnn_forward.1} parent=0 // pred_check
    _
  $region19: #{gnn_forward.1} parent=0 // pred_check_branch
    %30 = sbr.rel (0) target = $region21
  $region20: #{gnn_forward.1} parent=0 // pred_region
    _
  $region21: #{gnn_forward.1} parent=0 // pred_fallthru
    _
  // Predicated region
  $region22: #{gnn_forward.1} parent=0 // pred_check
    _
  $region23: #{gnn_forward.1} parent=0 // pred_check_branch
    %32 = sbr.rel (0) target = $region25
  $region24: #{gnn_forward.1} parent=0 // pred_region
    _
  $region25: #{gnn_forward.1} parent=0 // pred_fallthru
    _
  // Predicated region
  $region26: #{gnn_forward.1} parent=0 // pred_check
    _
  $region27: #{gnn_forward.1} parent=0 // pred_check_branch
    %34 = sbr.rel (0) target = $region29
  $region28: #{gnn_forward.1} parent=0 // pred_region
    _
  $region29: #{gnn_forward.1} parent=0 // pred_fallthru
    _
  // Predicated region
  $region30: #{gnn_forward.1} parent=0 // pred_check
    _
  $region31: #{gnn_forward.1} parent=0 // pred_check_branch
    %36 = sbr.rel (0) target = $region33
  $region32: #{gnn_forward.1} parent=0 // pred_region
    _
  $region33: #{gnn_forward.1} parent=0 // pred_fallthru
    _
  // Predicated region
  $region34: #{gnn_forward.1} parent=0 // pred_check
    _
  $region35: #{gnn_forward.1} parent=0 // pred_check_branch
    %38 = sbr.rel (0) target = $region37
  $region36: #{gnn_forward.1} parent=0 // pred_region
    _
  $region37: #{gnn_forward.1} parent=0 // pred_fallthru
    _
  // Predicated region
  $region38: #{gnn_forward.1} parent=0 // pred_check
    _
  $region39: #{gnn_forward.1} parent=0 // pred_check_branch
    %40 = sbr.rel (0) target = $region41
  $region40: #{gnn_forward.1} parent=0 // pred_region
    _
  $region41: #{gnn_forward.1} parent=0 // pred_fallthru
    _
  // Predicated region
  $region42: #{gnn_forward.1} parent=0 // pred_check
    _
  $region43: #{gnn_forward.1} parent=0 // pred_check_branch
    %42 = sbr.rel (0) target = $region45
  $region44: #{gnn_forward.1} parent=0 // pred_region
    _
  $region45: #{gnn_forward.1} parent=0 // pred_fallthru
    _
  // Predicated region
  $region46: #{gnn_forward.1} parent=0 // pred_check
    _
  $region47: #{gnn_forward.1} parent=0 // pred_check_branch
    %44 = sbr.rel (0) target = $region49
  $region48: #{gnn_forward.1} parent=0 // pred_region
    _
  $region49: #{gnn_forward.1} parent=0 // pred_fallthru
    _
  // Predicated region
  $region50: #{gnn_forward.1} parent=0 // pred_check
    _
  $region51: #{gnn_forward.1} parent=0 // pred_check_branch
    %46 = sbr.rel (0) target = $region53
  $region52: #{gnn_forward.1} parent=0 // pred_region
    _
  $region53: #{gnn_forward.1} parent=0 // pred_fallthru
    _
  // Predicated region
  $region54: #{gnn_forward.1} parent=0 // pred_check
    _
  $region55: #{gnn_forward.1} parent=0 // pred_check_branch
    %48 = sbr.rel (0) target = $region57
  $region56: #{gnn_forward.1} parent=0 // pred_region
    _
  $region57: #{gnn_forward.1} parent=0 // pred_fallthru
    _
  // Predicated region
  $region58: #{gnn_forward.1} parent=0 // pred_check
    _
  $region59: #{gnn_forward.1} parent=0 // pred_check_branch
    %50 = sbr.rel (0) target = $region61
  $region60: #{gnn_forward.1} parent=0 // pred_region
    _
  $region61: #{gnn_forward.1} parent=0 // pred_fallthru
    _
  // Predicated region
  $region62: #{gnn_forward.1} parent=0 // pred_check
    _
  $region63: #{gnn_forward.1} parent=0 // pred_check_branch
    %52 = sbr.rel (0) target = $region65
  $region64: #{gnn_forward.1} parent=0 // pred_region
    _
  $region65: #{gnn_forward.1} parent=0 // pred_fallthru
    _
  %v54 = vld [vmem:[%s0] sm:$0xf]
  %v55 = vld [vmem:[%s0 + $0x4] sm:$0xf]
  %v56 = vld [vmem:[%s6] sm:$0xf]
  %v57 = vld [vmem:[%s6 + $0x4] sm:$0xf]
  %v58 = vld [vmem:[%s6 + $0x8] sm:$0xf]
  %v59 = vld [vmem:[%s6 + $0xc] sm:$0xf]
  %v60 = vld [vmem:[%s6 + $0x10] sm:$0xf]
  %v61 = vld [vmem:[%s6 + $0x14] sm:$0xf]
  %v62 = vld [vmem:[%s6 + $0x18] sm:$0xf]
  %v63 = vld [vmem:[%s6 + $0x1c] sm:$0xf]
  %v64 = vld [vmem:[%s6 + $0x20] sm:$0xf]
  %v65 = vld [vmem:[%s6 + $0x24] sm:$0xf]
  %v66 = vld [vmem:[%s6 + $0x28] sm:$0xf]
  %v67 = vld [vmem:[%s6 + $0x2c] sm:$0xf]
  %v68 = vld [vmem:[%s6 + $0x30] sm:$0xf]
  %v69 = vld [vmem:[%s6 + $0x34] sm:$0xf]
  %v70 = vld [vmem:[%s6 + $0x38] sm:$0xf]
  %v71 = vld [vmem:[%s6 + $0x3c] sm:$0xf]
  %v72 = vld [vmem:[%s7] sm:$0x1]
  %v74 = vlaneseq
  %v75 = vshrl.u32 %v74, 7
  %v76 = vsub.s32 0, %v75
  %v77 = vrot.slane %v72, %v76
  %v81 = vunpack.c.l.b16 %v54
  %v82 = vunpack.c.l.b16 %v55
  %v83 = vpack.c.b16 %v82, %v81
  %v101 = vunpack.c.l.b16 %v56
  %v102 = vunpack.c.l.b16 %v57
  %v103 = vunpack.c.l.b16 %v58
  %v104 = vunpack.c.l.b16 %v59
  %v105 = vunpack.c.l.b16 %v60
  %v106 = vunpack.c.l.b16 %v61
  %v107 = vunpack.c.l.b16 %v62
  %v108 = vunpack.c.l.b16 %v63
  %v109 = vunpack.c.l.b16 %v64
  %v110 = vunpack.c.l.b16 %v65
  %v111 = vunpack.c.l.b16 %v66
  %v112 = vunpack.c.l.b16 %v67
  %v113 = vunpack.c.l.b16 %v68
  %v114 = vunpack.c.l.b16 %v69
  %v115 = vunpack.c.l.b16 %v70
  %v116 = vunpack.c.l.b16 %v71
  %v117 = vpack.c.b16 %v102, %v101
  %v118 = vpack.c.b16 %v104, %v103
  %v119 = vpack.c.b16 %v106, %v105
  %v120 = vpack.c.b16 %v108, %v107
  %v121 = vpack.c.b16 %v110, %v109
  %v122 = vpack.c.b16 %v112, %v111
  %v123 = vpack.c.b16 %v114, %v113
  %v124 = vpack.c.b16 %v116, %v115
  %133 = vmatprep.subr.bf16.mxu0 0
  %134 = vmatpush1.bf16.msra.mxu0 %v117
  %135 = vmatprep.subr.bf16.mxu0 0
  %136 = vmatpush1.bf16.msra.mxu0 %v118
  %137 = vmatprep.subr.bf16.mxu0 0
  %138 = vmatpush1.bf16.msra.mxu0 %v119
  %139 = vmatprep.subr.bf16.mxu0 0
  %140 = vmatpush1.bf16.msra.mxu0 %v120
  %141 = vmatprep.subr.bf16.mxu0 0
  %142 = vmatpush1.bf16.msra.mxu0 %v121
  %143 = vmatprep.subr.bf16.mxu0 0
  %144 = vmatpush1.bf16.msra.mxu0 %v122
  %145 = vmatprep.subr.bf16.mxu0 0
  %146 = vmatpush1.bf16.msra.mxu0 %v123
  %147 = vmatprep.subr.bf16.mxu0 0
  %148 = vmatpush1.bf16.msra.mxu0 %v124
  %149 = vmatprep.subr.bf16.mxu0 0
  %150 = vmatpush1.bf16.msra.mxu0 0
  %151 = vmatprep.subr.bf16.mxu0 0
  %152 = vmatpush1.bf16.msra.mxu0 0
  %153 = vmatprep.subr.bf16.mxu0 0
  %154 = vmatpush1.bf16.msra.mxu0 0
  %155 = vmatprep.subr.bf16.mxu0 0
  %156 = vmatpush1.bf16.msra.mxu0 0
  %157 = vmatprep.subr.bf16.mxu0 0
  %158 = vmatpush1.bf16.msra.mxu0 0
  %159 = vmatprep.subr.bf16.mxu0 0
  %160 = vmatpush1.bf16.msra.mxu0 0
  %161 = vmatprep.subr.bf16.mxu0 0
  %162 = vmatpush1.bf16.msra.mxu0 0
  %163 = vmatprep.subr.bf16.mxu0 0
  %164 = vmatpush1.bf16.msra.mxu0 0
  %165 = vmatprep.mubr.bf16.mxu0 0
  %166 = vmatmul.mubr.bf16.gmra.mrb[0].mxu0 %v83
  %v167 = vpop.f32.mrb[0].mxu0
  %v168 = vadd.f32 %v77, %v167
  %v169 = vpop.f32.mrb[0].mxu0
  %v170 = vpop.f32.mrb[0].mxu0
  %v171 = vadd.f32 %v77, %v170
  %v172 = vpop.f32.mrb[0].mxu0
  %173 = vdwg.mxu0
  %174 = vst [vmem:[#allocation2] sm:$0xff] %v168
  %175 = vst [vmem:[#allocation2 + $0x8] sm:$0xff] %v171
  %v176 = vld [vmem:[%s1] sm:$0xf]
  %v177 = vld [vmem:[%s1 + $0x4] sm:$0xf]
  %v178 = vld [vmem:[%s1 + $0x8] sm:$0xf]
  %v179 = vld [vmem:[%s1 + $0xc] sm:$0xf]
  %v184 = vunpack.c.l.b16 %v176
  %v185 = vunpack.c.l.b16 %v177
  %v186 = vunpack.c.l.b16 %v178
  %v187 = vunpack.c.l.b16 %v179
  %v188 = vpack.c.b16 %v185, %v184
  %v189 = vpack.c.b16 %v187, %v186
  %192 = vst [vmem:[#allocation4 + $0x10] sm:$0xff] %v188
  %193 = vst [vmem:[#allocation4 + $0x28] sm:$0xff] %v189
  %v194 = vld [vmem:[#allocation2] sm:$0xff]
  %v195 = vld [vmem:[#allocation2 + $0x8] sm:$0xff]
  %v196 = vpack.c.bf16 %v195, %v194
  %197 = vst [vmem:[#allocation3] sm:$0xff] %v196
  %v198 = vld [vmem:[%s2] sm:$0xf]
  %v199 = vld [vmem:[%s2 + $0x4] sm:$0xf]
  %v200 = vld [vmem:[%s2 + $0x8] sm:$0xf]
  %v201 = vld [vmem:[%s2 + $0xc] sm:$0xf]
  %v202 = vld [vmem:[#allocation3] sm:$0xff]
  %v207 = vunpack.c.l.b16 %v198
  %v208 = vunpack.c.l.b16 %v199
  %v209 = vunpack.c.l.b16 %v200
  %v210 = vunpack.c.l.b16 %v201
  %v211 = vpack.c.b16 %v208, %v207
  %v212 = vpack.c.b16 %v210, %v209
  %vm213 = vcmask 130048
  %v215 = vsel %vm213, %v211, 0
  %v218 = vsel %vm213, %v212, 0
  %220 = vmatprep.subr.bf16.mxu0 0
  %221 = vmatpush1.bf16.msra.mxu0 %v202
  %222 = vmatprep.subr.bf16.mxu0 0
  %223 = vmatpush1.bf16.msra.mxu0 0
  %224 = vmatprep.subr.bf16.mxu0 0
  %225 = vmatpush1.bf16.msra.mxu0 0
  %226 = vmatprep.subr.bf16.mxu0 0
  %227 = vmatpush1.bf16.msra.mxu0 0
  %228 = vmatprep.subr.bf16.mxu0 0
  %229 = vmatpush1.bf16.msra.mxu0 0
  %230 = vmatprep.subr.bf16.mxu0 0
  %231 = vmatpush1.bf16.msra.mxu0 0
  %232 = vmatprep.subr.bf16.mxu0 0
  %233 = vmatpush1.bf16.msra.mxu0 0
  %234 = vmatprep.subr.bf16.mxu0 0
  %235 = vmatpush1.bf16.msra.mxu0 0
  %236 = vmatprep.subr.bf16.mxu0 0
  %237 = vmatpush1.bf16.msra.mxu0 0
  %238 = vmatprep.subr.bf16.mxu0 0
  %239 = vmatpush1.bf16.msra.mxu0 0
  %240 = vmatprep.subr.bf16.mxu0 0
  %241 = vmatpush1.bf16.msra.mxu0 0
  %242 = vmatprep.subr.bf16.mxu0 0
  %243 = vmatpush1.bf16.msra.mxu0 0
  %244 = vmatprep.subr.bf16.mxu0 0
  %245 = vmatpush1.bf16.msra.mxu0 0
  %246 = vmatprep.subr.bf16.mxu0 0
  %247 = vmatpush1.bf16.msra.mxu0 0
  %248 = vmatprep.subr.bf16.mxu0 0
  %249 = vmatpush1.bf16.msra.mxu0 0
  %250 = vmatprep.subr.bf16.mxu0 0
  %251 = vmatpush1.bf16.msra.mxu0 0
  %252 = vmatprep.mubr.bf16.mxu0 0
  %253 = vmatmul.mubr.bf16.gmra.mrb[0].mxu0 %v215
  %v254 = vpop.f32.mrb[0].mxu0
  %v255 = vadd.f32 0.0, %v254
  %v256 = vpop.f32.mrb[0].mxu0
  %v257 = vpop.f32.mrb[0].mxu0
  %v258 = vadd.f32 0.0, %v257
  %v259 = vpop.f32.mrb[0].mxu0
  %260 = vmatprep.mubr.bf16.mxu0 0
  %261 = vmatmul.mubr.bf16.gmra.mrb[0].mxu0 %v218
  %v262 = vpop.f32.mrb[0].mxu0
  %v263 = vadd.f32 0.0, %v262
  %v264 = vpop.f32.mrb[0].mxu0
  %v265 = vpop.f32.mrb[0].mxu0
  %v266 = vadd.f32 0.0, %v265
  %v267 = vpop.f32.mrb[0].mxu0
  %268 = vdwg.mxu0
  %v269 = vpack.c.bf16 %v258, %v255
  %v270 = vpack.c.bf16 %v266, %v263
  %271 = vst [vmem:[#allocation4] sm:$0xff] %v269
  %272 = vst [vmem:[#allocation4 + $0x18] sm:$0xff] %v270
  %v273 = vld [vmem:[%s3] sm:$0xf]
  %v274 = vld [vmem:[%s3 + $0x4] sm:$0xf]
  %v275 = vld [vmem:[%s3 + $0x8] sm:$0xf]
  %v276 = vld [vmem:[%s3 + $0xc] sm:$0xf]
  %v277 = vld [vmem:[#allocation3] sm:$0xff]
  %v282 = vunpack.c.l.b16 %v273
  %v283 = vunpack.c.l.b16 %v274
  %v284 = vunpack.c.l.b16 %v275
  %v285 = vunpack.c.l.b16 %v276
  %v286 = vpack.c.b16 %v283, %v282
  %v287 = vpack.c.b16 %v285, %v284
  %v289 = vsel %vm213, %v286, 0
  %v292 = vsel %vm213, %v287, 0
  %294 = vmatprep.subr.bf16.mxu0 0
  %295 = vmatpush1.bf16.msra.mxu0 %v277
  %296 = vmatprep.subr.bf16.mxu0 0
  %297 = vmatpush1.bf16.msra.mxu0 0
  %298 = vmatprep.subr.bf16.mxu0 0
  %299 = vmatpush1.bf16.msra.mxu0 0
  %300 = vmatprep.subr.bf16.mxu0 0
  %301 = vmatpush1.bf16.msra.mxu0 0
  %302 = vmatprep.subr.bf16.mxu0 0
  %303 = vmatpush1.bf16.msra.mxu0 0
  %304 = vmatprep.subr.bf16.mxu0 0
  %305 = vmatpush1.bf16.msra.mxu0 0
  %306 = vmatprep.subr.bf16.mxu0 0
  %307 = vmatpush1.bf16.msra.mxu0 0
  %308 = vmatprep.subr.bf16.mxu0 0
  %309 = vmatpush1.bf16.msra.mxu0 0
  %310 = vmatprep.subr.bf16.mxu0 0
  %311 = vmatpush1.bf16.msra.mxu0 0
  %312 = vmatprep.subr.bf16.mxu0 0
  %313 = vmatpush1.bf16.msra.mxu0 0
  %314 = vmatprep.subr.bf16.mxu0 0
  %315 = vmatpush1.bf16.msra.mxu0 0
  %316 = vmatprep.subr.bf16.mxu0 0
  %317 = vmatpush1.bf16.msra.mxu0 0
  %318 = vmatprep.subr.bf16.mxu0 0
  %319 = vmatpush1.bf16.msra.mxu0 0
  %320 = vmatprep.subr.bf16.mxu0 0
  %321 = vmatpush1.bf16.msra.mxu0 0
  %322 = vmatprep.subr.bf16.mxu0 0
  %323 = vmatpush1.bf16.msra.mxu0 0
  %324 = vmatprep.subr.bf16.mxu0 0
  %325 = vmatpush1.bf16.msra.mxu0 0
  %326 = vmatprep.mubr.bf16.mxu0 0
  %327 = vmatmul.mubr.bf16.gmra.mrb[0].mxu0 %v289
  %v328 = vpop.f32.mrb[0].mxu0
  %v329 = vadd.f32 0.0, %v328
  %v330 = vpop.f32.mrb[0].mxu0
  %v331 = vpop.f32.mrb[0].mxu0
  %v332 = vadd.f32 0.0, %v331
  %v333 = vpop.f32.mrb[0].mxu0
  %334 = vmatprep.mubr.bf16.mxu0 0
  %335 = vmatmul.mubr.bf16.gmra.mrb[0].mxu0 %v292
  %v336 = vpop.f32.mrb[0].mxu0
  %v337 = vadd.f32 0.0, %v336
  %v338 = vpop.f32.mrb[0].mxu0
  %v339 = vpop.f32.mrb[0].mxu0
  %v340 = vadd.f32 0.0, %v339
  %v341 = vpop.f32.mrb[0].mxu0
  %342 = vdwg.mxu0
  %v343 = vpack.c.bf16 %v332, %v329
  %v344 = vpack.c.bf16 %v340, %v337
  %345 = vst [vmem:[#allocation4 + $0x8] sm:$0xff] %v343
  %346 = vst [vmem:[#allocation4 + $0x20] sm:$0xff] %v344
  %v347 = vld [vmem:[#allocation4] sm:$0xff]
  %v348 = vld [vmem:[#allocation4 + $0x8] sm:$0xff]
  %v349 = vld [vmem:[#allocation4 + $0x10] sm:$0xff]
  %v350 = vld [vmem:[#allocation4 + $0x18] sm:$0xff]
  %v351 = vld [vmem:[#allocation4 + $0x20] sm:$0xff]
  %v352 = vld [vmem:[#allocation4 + $0x28] sm:$0xff]
  %v353 = vld [vmem:[%s8] sm:$0xf]
  %v354 = vld [vmem:[%s8 + $0x4] sm:$0xf]
  %v355 = vld [vmem:[%s8 + $0x8] sm:$0xf]
  %v356 = vld [vmem:[%s8 + $0xc] sm:$0xf]
  %v357 = vld [vmem:[%s8 + $0x10] sm:$0xf]
  %v358 = vld [vmem:[%s8 + $0x14] sm:$0xf]
  %v359 = vld [vmem:[%s8 + $0x18] sm:$0xf]
  %v360 = vld [vmem:[%s8 + $0x1c] sm:$0xf]
  %v361 = vld [vmem:[%s8 + $0x20] sm:$0xf]
  %v362 = vld [vmem:[%s8 + $0x24] sm:$0xf]
  %v363 = vld [vmem:[%s8 + $0x28] sm:$0xf]
  %v364 = vld [vmem:[%s8 + $0x2c] sm:$0xf]
  %v365 = vld [vmem:[%s8 + $0x30] sm:$0xf]
  %v366 = vld [vmem:[%s8 + $0x34] sm:$0xf]
  %v367 = vld [vmem:[%s8 + $0x38] sm:$0xf]
  %v368 = vld [vmem:[%s8 + $0x3c] sm:$0xf]
  %v369 = vld [vmem:[%s8 + $0x40] sm:$0xf]
  %v370 = vld [vmem:[%s8 + $0x44] sm:$0xf]
  %v371 = vld [vmem:[%s8 + $0x48] sm:$0xf]
  %v372 = vld [vmem:[%s8 + $0x4c] sm:$0xf]
  %v373 = vld [vmem:[%s8 + $0x50] sm:$0xf]
  %v374 = vld [vmem:[%s8 + $0x54] sm:$0xf]
  %v375 = vld [vmem:[%s8 + $0x58] sm:$0xf]
  %v376 = vld [vmem:[%s8 + $0x5c] sm:$0xf]
  %v377 = vld [vmem:[%s8 + $0x60] sm:$0xf]
  %v378 = vld [vmem:[%s8 + $0x64] sm:$0xf]
  %v379 = vld [vmem:[%s8 + $0x68] sm:$0xf]
  %v380 = vld [vmem:[%s8 + $0x6c] sm:$0xf]
  %v381 = vld [vmem:[%s8 + $0x70] sm:$0xf]
  %v382 = vld [vmem:[%s8 + $0x74] sm:$0xf]
  %v383 = vld [vmem:[%s8 + $0x78] sm:$0xf]
  %v384 = vld [vmem:[%s8 + $0x7c] sm:$0xf]
  %v385 = vld [vmem:[%s8 + $0x80] sm:$0xf]
  %v386 = vld [vmem:[%s8 + $0x84] sm:$0xf]
  %v387 = vld [vmem:[%s8 + $0x88] sm:$0xf]
  %v388 = vld [vmem:[%s8 + $0x8c] sm:$0xf]
  %v389 = vld [vmem:[%s8 + $0x90] sm:$0xf]
  %v390 = vld [vmem:[%s8 + $0x94] sm:$0xf]
  %v391 = vld [vmem:[%s8 + $0x98] sm:$0xf]
  %v392 = vld [vmem:[%s8 + $0x9c] sm:$0xf]
  %v393 = vld [vmem:[%s8 + $0xa0] sm:$0xf]
  %v394 = vld [vmem:[%s8 + $0xa4] sm:$0xf]
  %v395 = vld [vmem:[%s8 + $0xa8] sm:$0xf]
  %v396 = vld [vmem:[%s8 + $0xac] sm:$0xf]
  %v397 = vld [vmem:[%s8 + $0xb0] sm:$0xf]
  %v398 = vld [vmem:[%s8 + $0xb4] sm:$0xf]
  %v399 = vld [vmem:[%s8 + $0xb8] sm:$0xf]
  %v400 = vld [vmem:[%s8 + $0xbc] sm:$0xf]
  %v401 = vld [vmem:[%s12] sm:$0x1]
  %v403 = vlaneseq
  %v404 = vshrl.u32 %v403, 7
  %v405 = vsub.s32 0, %v404
  %v406 = vrot.slane %v401, %v405
  %v456 = vunpack.c.l.b16 %v353
  %v457 = vunpack.c.l.b16 %v354
  %v458 = vunpack.c.l.b16 %v355
  %v459 = vunpack.c.l.b16 %v356
  %v460 = vunpack.c.l.b16 %v357
  %v461 = vunpack.c.l.b16 %v358
  %v462 = vunpack.c.l.b16 %v359
  %v463 = vunpack.c.l.b16 %v360
  %v464 = vunpack.c.l.b16 %v361
  %v465 = vunpack.c.l.b16 %v362
  %v466 = vunpack.c.l.b16 %v363
  %v467 = vunpack.c.l.b16 %v364
  %v468 = vunpack.c.l.b16 %v365
  %v469 = vunpack.c.l.b16 %v366
  %v470 = vunpack.c.l.b16 %v367
  %v471 = vunpack.c.l.b16 %v368
  %v472 = vunpack.c.l.b16 %v369
  %v473 = vunpack.c.l.b16 %v370
  %v474 = vunpack.c.l.b16 %v371
  %v475 = vunpack.c.l.b16 %v372
  %v476 = vunpack.c.l.b16 %v373
  %v477 = vunpack.c.l.b16 %v374
  %v478 = vunpack.c.l.b16 %v375
  %v479 = vunpack.c.l.b16 %v376
  %v480 = vunpack.c.l.b16 %v377
  %v481 = vunpack.c.l.b16 %v378
  %v482 = vunpack.c.l.b16 %v379
  %v483 = vunpack.c.l.b16 %v380
  %v484 = vunpack.c.l.b16 %v381
  %v485 = vunpack.c.l.b16 %v382
  %v486 = vunpack.c.l.b16 %v383
  %v487 = vunpack.c.l.b16 %v384
  %v488 = vunpack.c.l.b16 %v385
  %v489 = vunpack.c.l.b16 %v386
  %v490 = vunpack.c.l.b16 %v387
  %v491 = vunpack.c.l.b16 %v388
  %v492 = vunpack.c.l.b16 %v389
  %v493 = vunpack.c.l.b16 %v390
  %v494 = vunpack.c.l.b16 %v391
  %v495 = vunpack.c.l.b16 %v392
  %v496 = vunpack.c.l.b16 %v393
  %v497 = vunpack.c.l.b16 %v394
  %v498 = vunpack.c.l.b16 %v395
  %v499 = vunpack.c.l.b16 %v396
  %v500 = vunpack.c.l.b16 %v397
  %v501 = vunpack.c.l.b16 %v398
  %v502 = vunpack.c.l.b16 %v399
  %v503 = vunpack.c.l.b16 %v400
  %v504 = vpack.c.b16 %v457, %v456
  %v505 = vpack.c.b16 %v459, %v458
  %v506 = vpack.c.b16 %v461, %v460
  %v507 = vpack.c.b16 %v463, %v462
  %v508 = vpack.c.b16 %v465, %v464
  %v509 = vpack.c.b16 %v467, %v466
  %v510 = vpack.c.b16 %v469, %v468
  %v511 = vpack.c.b16 %v471, %v470
  %v512 = vpack.c.b16 %v473, %v472
  %v513 = vpack.c.b16 %v475, %v474
  %v514 = vpack.c.b16 %v477, %v476
  %v515 = vpack.c.b16 %v479, %v478
  %v516 = vpack.c.b16 %v481, %v480
  %v517 = vpack.c.b16 %v483, %v482
  %v518 = vpack.c.b16 %v485, %v484
  %v519 = vpack.c.b16 %v487, %v486
  %v520 = vpack.c.b16 %v489, %v488
  %v521 = vpack.c.b16 %v491, %v490
  %v522 = vpack.c.b16 %v493, %v492
  %v523 = vpack.c.b16 %v495, %v494
  %v524 = vpack.c.b16 %v497, %v496
  %v525 = vpack.c.b16 %v499, %v498
  %v526 = vpack.c.b16 %v501, %v500
  %v527 = vpack.c.b16 %v503, %v502
  %552 = vmatprep.subr.bf16.mxu0 0
  %553 = vmatpush1.bf16.msra.mxu0 %v504
  %554 = vmatprep.subr.bf16.mxu0 0
  %555 = vmatpush1.bf16.msra.mxu0 %v505
  %556 = vmatprep.subr.bf16.mxu0 0
  %557 = vmatpush1.bf16.msra.mxu0 %v506
  %558 = vmatprep.subr.bf16.mxu0 0
  %559 = vmatpush1.bf16.msra.mxu0 %v507
  %560 = vmatprep.subr.bf16.mxu0 0
  %561 = vmatpush1.bf16.msra.mxu0 %v508
  %562 = vmatprep.subr.bf16.mxu0 0
  %563 = vmatpush1.bf16.msra.mxu0 %v509
  %564 = vmatprep.subr.bf16.mxu0 0
  %565 = vmatpush1.bf16.msra.mxu0 %v510
  %566 = vmatprep.subr.bf16.mxu0 0
  %567 = vmatpush1.bf16.msra.mxu0 %v511
  %568 = vmatprep.subr.bf16.mxu0 0
  %569 = vmatpush1.bf16.msra.mxu0 %v512
  %570 = vmatprep.subr.bf16.mxu0 0
  %571 = vmatpush1.bf16.msra.mxu0 %v513
  %572 = vmatprep.subr.bf16.mxu0 0
  %573 = vmatpush1.bf16.msra.mxu0 %v514
  %574 = vmatprep.subr.bf16.mxu0 0
  %575 = vmatpush1.bf16.msra.mxu0 %v515
  %576 = vmatprep.subr.bf16.mxu0 0
  %577 = vmatpush1.bf16.msra.mxu0 %v516
  %578 = vmatprep.subr.bf16.mxu0 0
  %579 = vmatpush1.bf16.msra.mxu0 %v517
  %580 = vmatprep.subr.bf16.mxu0 0
  %581 = vmatpush1.bf16.msra.mxu0 %v518
  %582 = vmatprep.subr.bf16.mxu0 0
  %583 = vmatpush1.bf16.msra.mxu0 %v519
  %584 = vmatprep.mubr.bf16.mxu0 %v348
  %585 = vmatmul.mubr.bf16.gmra.mrb[0].mxu0 %v347
  %v586 = vpop.f32.mrb[0].mxu0
  %v587 = vadd.f32 %v406, %v586
  %v588 = vpop.f32.mrb[0].mxu0
  %v589 = vpop.f32.mrb[0].mxu0
  %v590 = vadd.f32 %v406, %v589
  %v591 = vpop.f32.mrb[0].mxu0
  %592 = vmatprep.mubr.bf16.mxu0 %v351
  %593 = vmatmul.mubr.bf16.gmra.mrb[0].mxu0 %v350
  %v594 = vpop.f32.mrb[0].mxu0
  %v595 = vadd.f32 %v406, %v594
  %v596 = vpop.f32.mrb[0].mxu0
  %v597 = vpop.f32.mrb[0].mxu0
  %v598 = vadd.f32 %v406, %v597
  %v599 = vpop.f32.mrb[0].mxu0
  %600 = vdwg.mxu0
  %601 = vmatprep.subr.bf16.mxu0 0
  %602 = vmatpush1.bf16.msra.mxu0 %v520
  %603 = vmatprep.subr.bf16.mxu0 0
  %604 = vmatpush1.bf16.msra.mxu0 %v521
  %605 = vmatprep.subr.bf16.mxu0 0
  %606 = vmatpush1.bf16.msra.mxu0 %v522
  %607 = vmatprep.subr.bf16.mxu0 0
  %608 = vmatpush1.bf16.msra.mxu0 %v523
  %609 = vmatprep.subr.bf16.mxu0 0
  %610 = vmatpush1.bf16.msra.mxu0 %v524
  %611 = vmatprep.subr.bf16.mxu0 0
  %612 = vmatpush1.bf16.msra.mxu0 %v525
  %613 = vmatprep.subr.bf16.mxu0 0
  %614 = vmatpush1.bf16.msra.mxu0 %v526
  %615 = vmatprep.subr.bf16.mxu0 0
  %616 = vmatpush1.bf16.msra.mxu0 %v527
  %617 = vmatprep.subr.bf16.mxu0 0
  %618 = vmatpush1.bf16.msra.mxu0 0
  %619 = vmatprep.subr.bf16.mxu0 0
  %620 = vmatpush1.bf16.msra.mxu0 0
  %621 = vmatprep.subr.bf16.mxu0 0
  %622 = vmatpush1.bf16.msra.mxu0 0
  %623 = vmatprep.subr.bf16.mxu0 0
  %624 = vmatpush1.bf16.msra.mxu0 0
  %625 = vmatprep.subr.bf16.mxu0 0
  %626 = vmatpush1.bf16.msra.mxu0 0
  %627 = vmatprep.subr.bf16.mxu0 0
  %628 = vmatpush1.bf16.msra.mxu0 0
  %629 = vmatprep.subr.bf16.mxu0 0
  %630 = vmatpush1.bf16.msra.mxu0 0
  %631 = vmatprep.subr.bf16.mxu0 0
  %632 = vmatpush1.bf16.msra.mxu0 0
  %633 = vmatprep.mubr.bf16.mxu0 0
  %634 = vmatmul.mubr.bf16.gmra.mrb[0].mxu0 %v349
  %v635 = vpop.f32.mrb[0].mxu0
  %v636 = vadd.f32 %v587, %v635
  %v637 = vpop.f32.mrb[0].mxu0
  %v638 = vpop.f32.mrb[0].mxu0
  %v639 = vadd.f32 %v590, %v638
  %v640 = vpop.f32.mrb[0].mxu0
  %641 = vmatprep.mubr.bf16.mxu0 0
  %642 = vmatmul.mubr.bf16.gmra.mrb[0].mxu0 %v352
  %v643 = vpop.f32.mrb[0].mxu0
  %v644 = vadd.f32 %v595, %v643
  %v645 = vpop.f32.mrb[0].mxu0
  %v646 = vpop.f32.mrb[0].mxu0
  %v647 = vadd.f32 %v598, %v646
  %v648 = vpop.f32.mrb[0].mxu0
  %649 = vdwg.mxu0
  %v650 = vmax.f32 %v636, 0.0
  %v651 = vmax.f32 %v639, 0.0
  %v652 = vmax.f32 %v644, 0.0
  %v653 = vmax.f32 %v647, 0.0
  %v654 = vpack.c.bf16 %v651, %v650
  %v655 = vpack.c.bf16 %v653, %v652
  %v656 = vld [vmem:[%s9] sm:$0xf]
  %v657 = vld [vmem:[%s9 + $0x4] sm:$0xf]
  %v658 = vld [vmem:[%s9 + $0x8] sm:$0xf]
  %v659 = vld [vmem:[%s9 + $0xc] sm:$0xf]
  %v660 = vld [vmem:[%s9 + $0x10] sm:$0xf]
  %v661 = vld [vmem:[%s9 + $0x14] sm:$0xf]
  %v662 = vld [vmem:[%s9 + $0x18] sm:$0xf]
  %v663 = vld [vmem:[%s9 + $0x1c] sm:$0xf]
  %v664 = vld [vmem:[%s9 + $0x20] sm:$0xf]
  %v665 = vld [vmem:[%s9 + $0x24] sm:$0xf]
  %v666 = vld [vmem:[%s9 + $0x28] sm:$0xf]
  %v667 = vld [vmem:[%s9 + $0x2c] sm:$0xf]
  %v668 = vld [vmem:[%s9 + $0x30] sm:$0xf]
  %v669 = vld [vmem:[%s9 + $0x34] sm:$0xf]
  %v670 = vld [vmem:[%s9 + $0x38] sm:$0xf]
  %v671 = vld [vmem:[%s9 + $0x3c] sm:$0xf]
  %s672 = scalar_lea.vmem %s12, 1
  %v673 = vld [vmem:[%s672] sm:$0x1]
  %v675 = vlaneseq
  %v676 = vshrl.u32 %v675, 7
  %v677 = vsub.s32 0, %v676
  %v678 = vrot.slane %v673, %v677
  %v696 = vunpack.c.l.b16 %v656
  %v697 = vunpack.c.l.b16 %v657
  %v698 = vunpack.c.l.b16 %v658
  %v699 = vunpack.c.l.b16 %v659
  %v700 = vunpack.c.l.b16 %v660
  %v701 = vunpack.c.l.b16 %v661
  %v702 = vunpack.c.l.b16 %v662
  %v703 = vunpack.c.l.b16 %v663
  %v704 = vunpack.c.l.b16 %v664
  %v705 = vunpack.c.l.b16 %v665
  %v706 = vunpack.c.l.b16 %v666
  %v707 = vunpack.c.l.b16 %v667
  %v708 = vunpack.c.l.b16 %v668
  %v709 = vunpack.c.l.b16 %v669
  %v710 = vunpack.c.l.b16 %v670
  %v711 = vunpack.c.l.b16 %v671
  %v712 = vpack.c.b16 %v697, %v696
  %v713 = vpack.c.b16 %v699, %v698
  %v714 = vpack.c.b16 %v701, %v700
  %v715 = vpack.c.b16 %v703, %v702
  %v716 = vpack.c.b16 %v705, %v704
  %v717 = vpack.c.b16 %v707, %v706
  %v718 = vpack.c.b16 %v709, %v708
  %v719 = vpack.c.b16 %v711, %v710
  %728 = vmatprep.subr.bf16.mxu0 0
  %729 = vmatpush1.bf16.msra.mxu0 %v712
  %730 = vmatprep.subr.bf16.mxu0 0
  %731 = vmatpush1.bf16.msra.mxu0 %v713
  %732 = vmatprep.subr.bf16.mxu0 0
  %733 = vmatpush1.bf16.msra.mxu0 %v714
  %734 = vmatprep.subr.bf16.mxu0 0
  %735 = vmatpush1.bf16.msra.mxu0 %v715
  %736 = vmatprep.subr.bf16.mxu0 0
  %737 = vmatpush1.bf16.msra.mxu0 %v716
  %738 = vmatprep.subr.bf16.mxu0 0
  %739 = vmatpush1.bf16.msra.mxu0 %v717
  %740 = vmatprep.subr.bf16.mxu0 0
  %741 = vmatpush1.bf16.msra.mxu0 %v718
  %742 = vmatprep.subr.bf16.mxu0 0
  %743 = vmatpush1.bf16.msra.mxu0 %v719
  %744 = vmatprep.subr.bf16.mxu0 0
  %745 = vmatpush1.bf16.msra.mxu0 0
  %746 = vmatprep.subr.bf16.mxu0 0
  %747 = vmatpush1.bf16.msra.mxu0 0
  %748 = vmatprep.subr.bf16.mxu0 0
  %749 = vmatpush1.bf16.msra.mxu0 0
  %750 = vmatprep.subr.bf16.mxu0 0
  %751 = vmatpush1.bf16.msra.mxu0 0
  %752 = vmatprep.subr.bf16.mxu0 0
  %753 = vmatpush1.bf16.msra.mxu0 0
  %754 = vmatprep.subr.bf16.mxu0 0
  %755 = vmatpush1.bf16.msra.mxu0 0
  %756 = vmatprep.subr.bf16.mxu0 0
  %757 = vmatpush1.bf16.msra.mxu0 0
  %758 = vmatprep.subr.bf16.mxu0 0
  %759 = vmatpush1.bf16.msra.mxu0 0
  %760 = vmatprep.mubr.bf16.mxu0 0
  %761 = vmatmul.mubr.bf16.gmra.mrb[0].mxu0 %v654
  %v762 = vpop.f32.mrb[0].mxu0
  %v763 = vadd.f32 %v678, %v762
  %v764 = vpop.f32.mrb[0].mxu0
  %v765 = vpop.f32.mrb[0].mxu0
  %v766 = vadd.f32 %v678, %v765
  %v767 = vpop.f32.mrb[0].mxu0
  %768 = vmatprep.mubr.bf16.mxu0 0
  %769 = vmatmul.mubr.bf16.gmra.mrb[0].mxu0 %v655
  %v770 = vpop.f32.mrb[0].mxu0
  %v771 = vadd.f32 %v678, %v770
  %v772 = vpop.f32.mrb[0].mxu0
  %v773 = vpop.f32.mrb[0].mxu0
  %v774 = vadd.f32 %v678, %v773
  %v775 = vpop.f32.mrb[0].mxu0
  %776 = vdwg.mxu0
  %v777 = vmax.f32 %v763, 0.0
  %v778 = vmax.f32 %v766, 0.0
  %v779 = vmax.f32 %v771, 0.0
  %v780 = vmax.f32 %v774, 0.0
  %v781 = vpack.c.bf16 %v778, %v777
  %v782 = vpack.c.bf16 %v780, %v779
  %v783 = vld [vmem:[%s4] sm:$0xf]
  %v784 = vld [vmem:[%s4 + $0x4] sm:$0xf]
  %v787 = vunpack.c.l.b16 %v783
  %v788 = vunpack.c.l.b16 %v784
  %v789 = vpack.c.b16 %v788, %v787
  %vm790 = vcmask 261120
  %v792 = vsel %vm790, %v789, 0
  %794 = vmatprep.subr.bf16.mxu0 0
  %795 = vmatpush1.bf16.msra.mxu0 %v781
  %796 = vmatprep.subr.bf16.mxu0 0
  %797 = vmatpush1.bf16.msra.mxu0 %v782
  %798 = vmatprep.subr.bf16.mxu0 0
  %799 = vmatpush1.bf16.msra.mxu0 0
  %800 = vmatprep.subr.bf16.mxu0 0
  %801 = vmatpush1.bf16.msra.mxu0 0
  %802 = vmatprep.subr.bf16.mxu0 0
  %803 = vmatpush1.bf16.msra.mxu0 0
  %804 = vmatprep.subr.bf16.mxu0 0
  %805 = vmatpush1.bf16.msra.mxu0 0
  %806 = vmatprep.subr.bf16.mxu0 0
  %807 = vmatpush1.bf16.msra.mxu0 0
  %808 = vmatprep.subr.bf16.mxu0 0
  %809 = vmatpush1.bf16.msra.mxu0 0
  %810 = vmatprep.subr.bf16.mxu0 0
  %811 = vmatpush1.bf16.msra.mxu0 0
  %812 = vmatprep.subr.bf16.mxu0 0
  %813 = vmatpush1.bf16.msra.mxu0 0
  %814 = vmatprep.subr.bf16.mxu0 0
  %815 = vmatpush1.bf16.msra.mxu0 0
  %816 = vmatprep.subr.bf16.mxu0 0
  %817 = vmatpush1.bf16.msra.mxu0 0
  %818 = vmatprep.subr.bf16.mxu0 0
  %819 = vmatpush1.bf16.msra.mxu0 0
  %820 = vmatprep.subr.bf16.mxu0 0
  %821 = vmatpush1.bf16.msra.mxu0 0
  %822 = vmatprep.subr.bf16.mxu0 0
  %823 = vmatpush1.bf16.msra.mxu0 0
  %824 = vmatprep.subr.bf16.mxu0 0
  %825 = vmatpush1.bf16.msra.mxu0 0
  %826 = vmatprep.mubr.bf16.mxu0 0
  %827 = vmatmul.mubr.bf16.gmra.mrb[0].mxu0 %v792
  %v828 = vpop.f32.mrb[0].mxu0
  %v829 = vadd.f32 0.0, %v828
  %v830 = vpop.f32.mrb[0].mxu0
  %v831 = vpop.f32.mrb[0].mxu0
  %v832 = vadd.f32 0.0, %v831
  %v833 = vpop.f32.mrb[0].mxu0
  %834 = vdwg.mxu0
  %v835 = vld [vmem:[#allocation3] sm:$0xff]
  %836 = vst [vmem:[#allocation5] sm:$0xff] %v835
  %v837 = vpack.c.bf16 %v832, %v829
  %838 = vst [vmem:[#allocation5 + $0x8] sm:$0xff] %v837
  %v839 = vld [vmem:[#allocation5] sm:$0xff]
  %v840 = vld [vmem:[#allocation5 + $0x8] sm:$0xff]
  %v841 = vld [vmem:[%s10] sm:$0xf]
  %v842 = vld [vmem:[%s10 + $0x4] sm:$0xf]
  %v843 = vld [vmem:[%s10 + $0x8] sm:$0xf]
  %v844 = vld [vmem:[%s10 + $0xc] sm:$0xf]
  %v845 = vld [vmem:[%s10 + $0x10] sm:$0xf]
  %v846 = vld [vmem:[%s10 + $0x14] sm:$0xf]
  %v847 = vld [vmem:[%s10 + $0x18] sm:$0xf]
  %v848 = vld [vmem:[%s10 + $0x1c] sm:$0xf]
  %v849 = vld [vmem:[%s10 + $0x20] sm:$0xf]
  %v850 = vld [vmem:[%s10 + $0x24] sm:$0xf]
  %v851 = vld [vmem:[%s10 + $0x28] sm:$0xf]
  %v852 = vld [vmem:[%s10 + $0x2c] sm:$0xf]
  %v853 = vld [vmem:[%s10 + $0x30] sm:$0xf]
  %v854 = vld [vmem:[%s10 + $0x34] sm:$0xf]
  %v855 = vld [vmem:[%s10 + $0x38] sm:$0xf]
  %v856 = vld [vmem:[%s10 + $0x3c] sm:$0xf]
  %v857 = vld [vmem:[%s10 + $0x40] sm:$0xf]
  %v858 = vld [vmem:[%s10 + $0x44] sm:$0xf]
  %v859 = vld [vmem:[%s10 + $0x48] sm:$0xf]
  %v860 = vld [vmem:[%s10 + $0x4c] sm:$0xf]
  %v861 = vld [vmem:[%s10 + $0x50] sm:$0xf]
  %v862 = vld [vmem:[%s10 + $0x54] sm:$0xf]
  %v863 = vld [vmem:[%s10 + $0x58] sm:$0xf]
  %v864 = vld [vmem:[%s10 + $0x5c] sm:$0xf]
  %v865 = vld [vmem:[%s10 + $0x60] sm:$0xf]
  %v866 = vld [vmem:[%s10 + $0x64] sm:$0xf]
  %v867 = vld [vmem:[%s10 + $0x68] sm:$0xf]
  %v868 = vld [vmem:[%s10 + $0x6c] sm:$0xf]
  %v869 = vld [vmem:[%s10 + $0x70] sm:$0xf]
  %v870 = vld [vmem:[%s10 + $0x74] sm:$0xf]
  %v871 = vld [vmem:[%s10 + $0x78] sm:$0xf]
  %v872 = vld [vmem:[%s10 + $0x7c] sm:$0xf]
  %s873 = scalar_lea.vmem %s12, 2
  %v874 = vld [vmem:[%s873] sm:$0x1]
  %v876 = vlaneseq
  %v877 = vshrl.u32 %v876, 7
  %v878 = vsub.s32 0, %v877
  %v879 = vrot.slane %v874, %v878
  %v913 = vunpack.c.l.b16 %v841
  %v914 = vunpack.c.l.b16 %v842
  %v915 = vunpack.c.l.b16 %v843
  %v916 = vunpack.c.l.b16 %v844
  %v917 = vunpack.c.l.b16 %v845
  %v918 = vunpack.c.l.b16 %v846
  %v919 = vunpack.c.l.b16 %v847
  %v920 = vunpack.c.l.b16 %v848
  %v921 = vunpack.c.l.b16 %v849
  %v922 = vunpack.c.l.b16 %v850
  %v923 = vunpack.c.l.b16 %v851
  %v924 = vunpack.c.l.b16 %v852
  %v925 = vunpack.c.l.b16 %v853
  %v926 = vunpack.c.l.b16 %v854
  %v927 = vunpack.c.l.b16 %v855
  %v928 = vunpack.c.l.b16 %v856
  %v929 = vunpack.c.l.b16 %v857
  %v930 = vunpack.c.l.b16 %v858
  %v931 = vunpack.c.l.b16 %v859
  %v932 = vunpack.c.l.b16 %v860
  %v933 = vunpack.c.l.b16 %v861
  %v934 = vunpack.c.l.b16 %v862
  %v935 = vunpack.c.l.b16 %v863
  %v936 = vunpack.c.l.b16 %v864
  %v937 = vunpack.c.l.b16 %v865
  %v938 = vunpack.c.l.b16 %v866
  %v939 = vunpack.c.l.b16 %v867
  %v940 = vunpack.c.l.b16 %v868
  %v941 = vunpack.c.l.b16 %v869
  %v942 = vunpack.c.l.b16 %v870
  %v943 = vunpack.c.l.b16 %v871
  %v944 = vunpack.c.l.b16 %v872
  %v945 = vpack.c.b16 %v914, %v913
  %v946 = vpack.c.b16 %v916, %v915
  %v947 = vpack.c.b16 %v918, %v917
  %v948 = vpack.c.b16 %v920, %v919
  %v949 = vpack.c.b16 %v922, %v921
  %v950 = vpack.c.b16 %v924, %v923
  %v951 = vpack.c.b16 %v926, %v925
  %v952 = vpack.c.b16 %v928, %v927
  %v953 = vpack.c.b16 %v930, %v929
  %v954 = vpack.c.b16 %v932, %v931
  %v955 = vpack.c.b16 %v934, %v933
  %v956 = vpack.c.b16 %v936, %v935
  %v957 = vpack.c.b16 %v938, %v937
  %v958 = vpack.c.b16 %v940, %v939
  %v959 = vpack.c.b16 %v942, %v941
  %v960 = vpack.c.b16 %v944, %v943
  %977 = vmatprep.subr.bf16.mxu0 0
  %978 = vmatpush1.bf16.msra.mxu0 %v945
  %979 = vmatprep.subr.bf16.mxu0 0
  %980 = vmatpush1.bf16.msra.mxu0 %v946
  %981 = vmatprep.subr.bf16.mxu0 0
  %982 = vmatpush1.bf16.msra.mxu0 %v947
  %983 = vmatprep.subr.bf16.mxu0 0
  %984 = vmatpush1.bf16.msra.mxu0 %v948
  %985 = vmatprep.subr.bf16.mxu0 0
  %986 = vmatpush1.bf16.msra.mxu0 %v949
  %987 = vmatprep.subr.bf16.mxu0 0
  %988 = vmatpush1.bf16.msra.mxu0 %v950
  %989 = vmatprep.subr.bf16.mxu0 0
  %990 = vmatpush1.bf16.msra.mxu0 %v951
  %991 = vmatprep.subr.bf16.mxu0 0
  %992 = vmatpush1.bf16.msra.mxu0 %v952
  %993 = vmatprep.subr.bf16.mxu0 0
  %994 = vmatpush1.bf16.msra.mxu0 %v953
  %995 = vmatprep.subr.bf16.mxu0 0
  %996 = vmatpush1.bf16.msra.mxu0 %v954
  %997 = vmatprep.subr.bf16.mxu0 0
  %998 = vmatpush1.bf16.msra.mxu0 %v955
  %999 = vmatprep.subr.bf16.mxu0 0
  %1000 = vmatpush1.bf16.msra.mxu0 %v956
  %1001 = vmatprep.subr.bf16.mxu0 0
  %1002 = vmatpush1.bf16.msra.mxu0 %v957
  %1003 = vmatprep.subr.bf16.mxu0 0
  %1004 = vmatpush1.bf16.msra.mxu0 %v958
  %1005 = vmatprep.subr.bf16.mxu0 0
  %1006 = vmatpush1.bf16.msra.mxu0 %v959
  %1007 = vmatprep.subr.bf16.mxu0 0
  %1008 = vmatpush1.bf16.msra.mxu0 %v960
  %1009 = vmatprep.mubr.bf16.mxu0 %v840
  %1010 = vmatmul.mubr.bf16.gmra.mrb[0].mxu0 %v839
  %v1011 = vpop.f32.mrb[0].mxu0
  %v1012 = vadd.f32 %v879, %v1011
  %v1013 = vpop.f32.mrb[0].mxu0
  %v1014 = vpop.f32.mrb[0].mxu0
  %v1015 = vadd.f32 %v879, %v1014
  %v1016 = vpop.f32.mrb[0].mxu0
  %1017 = vdwg.mxu0
  %v1018 = vmax.f32 %v1012, 0.0
  %v1019 = vmax.f32 %v1015, 0.0
  %v1020 = vpack.c.bf16 %v1019, %v1018
  %v1021 = vld [vmem:[%s11] sm:$0xf]
  %v1022 = vld [vmem:[%s11 + $0x4] sm:$0xf]
  %v1023 = vld [vmem:[%s11 + $0x8] sm:$0xf]
  %v1024 = vld [vmem:[%s11 + $0xc] sm:$0xf]
  %v1025 = vld [vmem:[%s11 + $0x10] sm:$0xf]
  %v1026 = vld [vmem:[%s11 + $0x14] sm:$0xf]
  %v1027 = vld [vmem:[%s11 + $0x18] sm:$0xf]
  %v1028 = vld [vmem:[%s11 + $0x1c] sm:$0xf]
  %v1029 = vld [vmem:[%s11 + $0x20] sm:$0xf]
  %v1030 = vld [vmem:[%s11 + $0x24] sm:$0xf]
  %v1031 = vld [vmem:[%s11 + $0x28] sm:$0xf]
  %v1032 = vld [vmem:[%s11 + $0x2c] sm:$0xf]
  %v1033 = vld [vmem:[%s11 + $0x30] sm:$0xf]
  %v1034 = vld [vmem:[%s11 + $0x34] sm:$0xf]
  %v1035 = vld [vmem:[%s11 + $0x38] sm:$0xf]
  %v1036 = vld [vmem:[%s11 + $0x3c] sm:$0xf]
  %s1037 = scalar_lea.vmem %s12, 3
  %v1038 = vld [vmem:[%s1037] sm:$0x1]
  %v1040 = vlaneseq
  %v1041 = vshrl.u32 %v1040, 7
  %v1042 = vsub.s32 0, %v1041
  %v1043 = vrot.slane %v1038, %v1042
  %v1061 = vunpack.c.l.b16 %v1021
  %v1062 = vunpack.c.l.b16 %v1022
  %v1063 = vunpack.c.l.b16 %v1023
  %v1064 = vunpack.c.l.b16 %v1024
  %v1065 = vunpack.c.l.b16 %v1025
  %v1066 = vunpack.c.l.b16 %v1026
  %v1067 = vunpack.c.l.b16 %v1027
  %v1068 = vunpack.c.l.b16 %v1028
  %v1069 = vunpack.c.l.b16 %v1029
  %v1070 = vunpack.c.l.b16 %v1030
  %v1071 = vunpack.c.l.b16 %v1031
  %v1072 = vunpack.c.l.b16 %v1032
  %v1073 = vunpack.c.l.b16 %v1033
  %v1074 = vunpack.c.l.b16 %v1034
  %v1075 = vunpack.c.l.b16 %v1035
  %v1076 = vunpack.c.l.b16 %v1036
  %v1077 = vpack.c.b16 %v1062, %v1061
  %v1078 = vpack.c.b16 %v1064, %v1063
  %v1079 = vpack.c.b16 %v1066, %v1065
  %v1080 = vpack.c.b16 %v1068, %v1067
  %v1081 = vpack.c.b16 %v1070, %v1069
  %v1082 = vpack.c.b16 %v1072, %v1071
  %v1083 = vpack.c.b16 %v1074, %v1073
  %v1084 = vpack.c.b16 %v1076, %v1075
  %1093 = vmatprep.subr.bf16.mxu0 0
  %1094 = vmatpush1.bf16.msra.mxu0 %v1077
  %1095 = vmatprep.subr.bf16.mxu0 0
  %1096 = vmatpush1.bf16.msra.mxu0 %v1078
  %1097 = vmatprep.subr.bf16.mxu0 0
  %1098 = vmatpush1.bf16.msra.mxu0 %v1079
  %1099 = vmatprep.subr.bf16.mxu0 0
  %1100 = vmatpush1.bf16.msra.mxu0 %v1080
  %1101 = vmatprep.subr.bf16.mxu0 0
  %1102 = vmatpush1.bf16.msra.mxu0 %v1081
  %1103 = vmatprep.subr.bf16.mxu0 0
  %1104 = vmatpush1.bf16.msra.mxu0 %v1082
  %1105 = vmatprep.subr.bf16.mxu0 0
  %1106 = vmatpush1.bf16.msra.mxu0 %v1083
  %1107 = vmatprep.subr.bf16.mxu0 0
  %1108 = vmatpush1.bf16.msra.mxu0 %v1084
  %1109 = vmatprep.subr.bf16.mxu0 0
  %1110 = vmatpush1.bf16.msra.mxu0 0
  %1111 = vmatprep.subr.bf16.mxu0 0
  %1112 = vmatpush1.bf16.msra.mxu0 0
  %1113 = vmatprep.subr.bf16.mxu0 0
  %1114 = vmatpush1.bf16.msra.mxu0 0
  %1115 = vmatprep.subr.bf16.mxu0 0
  %1116 = vmatpush1.bf16.msra.mxu0 0
  %1117 = vmatprep.subr.bf16.mxu0 0
  %1118 = vmatpush1.bf16.msra.mxu0 0
  %1119 = vmatprep.subr.bf16.mxu0 0
  %1120 = vmatpush1.bf16.msra.mxu0 0
  %1121 = vmatprep.subr.bf16.mxu0 0
  %1122 = vmatpush1.bf16.msra.mxu0 0
  %1123 = vmatprep.subr.bf16.mxu0 0
  %1124 = vmatpush1.bf16.msra.mxu0 0
  %1125 = vmatprep.mubr.bf16.mxu0 0
  %1126 = vmatmul.mubr.bf16.gmra.mrb[0].mxu0 %v1020
  %v1127 = vpop.f32.mrb[0].mxu0
  %v1128 = vadd.f32 %v1043, %v1127
  %v1129 = vpop.f32.mrb[0].mxu0
  %v1130 = vpop.f32.mrb[0].mxu0
  %v1131 = vadd.f32 %v1043, %v1130
  %v1132 = vpop.f32.mrb[0].mxu0
  %1133 = vdwg.mxu0
  %v1134 = vmax.f32 %v1128, 0.0
  %v1135 = vmax.f32 %v1131, 0.0
  %v1136 = vld [vmem:[#allocation2] sm:$0xff]
  %v1137 = vld [vmem:[#allocation2 + $0x8] sm:$0xff]
  %v1138 = vadd.f32 %v1136, %v1134
  %v1139 = vadd.f32 %v1137, %v1135
  %1140 = vst [vmem:[#allocation2] sm:$0xff] %v1138
  %1141 = vst [vmem:[#allocation2 + $0x8] sm:$0xff] %v1139
  %v1142 = vld [vmem:[#allocation2] sm:$0xff]
  %v1143 = vld [vmem:[#allocation2 + $0x8] sm:$0xff]
  %v1144 = vpack.c.bf16 %v1143, %v1142
  %1145 = vst [vmem:[#allocation3] sm:$0xff] %v1144
  %v1146 = vld [vmem:[%s2] sm:$0xf]
  %v1147 = vld [vmem:[%s2 + $0x4] sm:$0xf]
  %v1148 = vld [vmem:[%s2 + $0x8] sm:$0xf]
  %v1149 = vld [vmem:[%s2 + $0xc] sm:$0xf]
  %v1150 = vld [vmem:[#allocation3] sm:$0xff]
  %v1155 = vunpack.c.l.b16 %v1146
  %v1156 = vunpack.c.l.b16 %v1147
  %v1157 = vunpack.c.l.b16 %v1148
  %v1158 = vunpack.c.l.b16 %v1149
  %v1159 = vpack.c.b16 %v1156, %v1155
  %v1160 = vpack.c.b16 %v1158, %v1157
  %v1162 = vsel %vm213, %v1159, 0
  %v1165 = vsel %vm213, %v1160, 0
  %1167 = vmatprep.subr.bf16.mxu0 0
  %1168 = vmatpush1.bf16.msra.mxu0 %v1150
  %1169 = vmatprep.subr.bf16.mxu0 0
  %1170 = vmatpush1.bf16.msra.mxu0 0
  %1171 = vmatprep.subr.bf16.mxu0 0
  %1172 = vmatpush1.bf16.msra.mxu0 0
  %1173 = vmatprep.subr.bf16.mxu0 0
  %1174 = vmatpush1.bf16.msra.mxu0 0
  %1175 = vmatprep.subr.bf16.mxu0 0
  %1176 = vmatpush1.bf16.msra.mxu0 0
  %1177 = vmatprep.subr.bf16.mxu0 0
  %1178 = vmatpush1.bf16.msra.mxu0 0
  %1179 = vmatprep.subr.bf16.mxu0 0
  %1180 = vmatpush1.bf16.msra.mxu0 0
  %1181 = vmatprep.subr.bf16.mxu0 0
  %1182 = vmatpush1.bf16.msra.mxu0 0
  %1183 = vmatprep.subr.bf16.mxu0 0
  %1184 = vmatpush1.bf16.msra.mxu0 0
  %1185 = vmatprep.subr.bf16.mxu0 0
  %1186 = vmatpush1.bf16.msra.mxu0 0
  %1187 = vmatprep.subr.bf16.mxu0 0
  %1188 = vmatpush1.bf16.msra.mxu0 0
  %1189 = vmatprep.subr.bf16.mxu0 0
  %1190 = vmatpush1.bf16.msra.mxu0 0
  %1191 = vmatprep.subr.bf16.mxu0 0
  %1192 = vmatpush1.bf16.msra.mxu0 0
  %1193 = vmatprep.subr.bf16.mxu0 0
  %1194 = vmatpush1.bf16.msra.mxu0 0
  %1195 = vmatprep.subr.bf16.mxu0 0
  %1196 = vmatpush1.bf16.msra.mxu0 0
  %1197 = vmatprep.subr.bf16.mxu0 0
  %1198 = vmatpush1.bf16.msra.mxu0 0
  %1199 = vmatprep.mubr.bf16.mxu0 0
  %1200 = vmatmul.mubr.bf16.gmra.mrb[0].mxu0 %v1162
  %v1201 = vpop.f32.mrb[0].mxu0
  %v1202 = vadd.f32 0.0, %v1201
  %v1203 = vpop.f32.mrb[0].mxu0
  %v1204 = vpop.f32.mrb[0].mxu0
  %v1205 = vadd.f32 0.0, %v1204
  %v1206 = vpop.f32.mrb[0].mxu0
  %1207 = vmatprep.mubr.bf16.mxu0 0
  %1208 = vmatmul.mubr.bf16.gmra.mrb[0].mxu0 %v1165
  %v1209 = vpop.f32.mrb[0].mxu0
  %v1210 = vadd.f32 0.0, %v1209
  %v1211 = vpop.f32.mrb[0].mxu0
  %v1212 = vpop.f32.mrb[0].mxu0
  %v1213 = vadd.f32 0.0, %v1212
  %v1214 = vpop.f32.mrb[0].mxu0
  %1215 = vdwg.mxu0
  %v1216 = vpack.c.bf16 %v1205, %v1202
  %v1217 = vpack.c.bf16 %v1213, %v1210
  %1218 = vst [vmem:[#allocation4] sm:$0xff] %v1216
  %1219 = vst [vmem:[#allocation4 + $0x18] sm:$0xff] %v1217
  %v1220 = vld [vmem:[%s3] sm:$0xf]
  %v1221 = vld [vmem:[%s3 + $0x4] sm:$0xf]
  %v1222 = vld [vmem:[%s3 + $0x8] sm:$0xf]
  %v1223 = vld [vmem:[%s3 + $0xc] sm:$0xf]
  %v1224 = vld [vmem:[#allocation3] sm:$0xff]
  %v1229 = vunpack.c.l.b16 %v1220
  %v1230 = vunpack.c.l.b16 %v1221
  %v1231 = vunpack.c.l.b16 %v1222
  %v1232 = vunpack.c.l.b16 %v1223
  %v1233 = vpack.c.b16 %v1230, %v1229
  %v1234 = vpack.c.b16 %v1232, %v1231
  %v1236 = vsel %vm213, %v1233, 0
  %v1239 = vsel %vm213, %v1234, 0
  %1241 = vmatprep.subr.bf16.mxu0 0
  %1242 = vmatpush1.bf16.msra.mxu0 %v1224
  %1243 = vmatprep.subr.bf16.mxu0 0
  %1244 = vmatpush1.bf16.msra.mxu0 0
  %1245 = vmatprep.subr.bf16.mxu0 0
  %1246 = vmatpush1.bf16.msra.mxu0 0
  %1247 = vmatprep.subr.bf16.mxu0 0
  %1248 = vmatpush1.bf16.msra.mxu0 0
  %1249 = vmatprep.subr.bf16.mxu0 0
  %1250 = vmatpush1.bf16.msra.mxu0 0
  %1251 = vmatprep.subr.bf16.mxu0 0
  %1252 = vmatpush1.bf16.msra.mxu0 0
  %1253 = vmatprep.subr.bf16.mxu0 0
  %1254 = vmatpush1.bf16.msra.mxu0 0
  %1255 = vmatprep.subr.bf16.mxu0 0
  %1256 = vmatpush1.bf16.msra.mxu0 0
  %1257 = vmatprep.subr.bf16.mxu0 0
  %1258 = vmatpush1.bf16.msra.mxu0 0
  %1259 = vmatprep.subr.bf16.mxu0 0
  %1260 = vmatpush1.bf16.msra.mxu0 0
  %1261 = vmatprep.subr.bf16.mxu0 0
  %1262 = vmatpush1.bf16.msra.mxu0 0
  %1263 = vmatprep.subr.bf16.mxu0 0
  %1264 = vmatpush1.bf16.msra.mxu0 0
  %1265 = vmatprep.subr.bf16.mxu0 0
  %1266 = vmatpush1.bf16.msra.mxu0 0
  %1267 = vmatprep.subr.bf16.mxu0 0
  %1268 = vmatpush1.bf16.msra.mxu0 0
  %1269 = vmatprep.subr.bf16.mxu0 0
  %1270 = vmatpush1.bf16.msra.mxu0 0
  %1271 = vmatprep.subr.bf16.mxu0 0
  %1272 = vmatpush1.bf16.msra.mxu0 0
  %1273 = vmatprep.mubr.bf16.mxu0 0
  %1274 = vmatmul.mubr.bf16.gmra.mrb[0].mxu0 %v1236
  %v1275 = vpop.f32.mrb[0].mxu0
  %v1276 = vadd.f32 0.0, %v1275
  %v1277 = vpop.f32.mrb[0].mxu0
  %v1278 = vpop.f32.mrb[0].mxu0
  %v1279 = vadd.f32 0.0, %v1278
  %v1280 = vpop.f32.mrb[0].mxu0
  %1281 = vmatprep.mubr.bf16.mxu0 0
  %1282 = vmatmul.mubr.bf16.gmra.mrb[0].mxu0 %v1239
  %v1283 = vpop.f32.mrb[0].mxu0
  %v1284 = vadd.f32 0.0, %v1283
  %v1285 = vpop.f32.mrb[0].mxu0
  %v1286 = vpop.f32.mrb[0].mxu0
  %v1287 = vadd.f32 0.0, %v1286
  %v1288 = vpop.f32.mrb[0].mxu0
  %1289 = vdwg.mxu0
  %v1290 = vpack.c.bf16 %v1279, %v1276
  %v1291 = vpack.c.bf16 %v1287, %v1284
  %1292 = vst [vmem:[#allocation4 + $0x8] sm:$0xff] %v1290
  %1293 = vst [vmem:[#allocation4 + $0x20] sm:$0xff] %v1291
  %v1294 = vld [vmem:[#allocation4] sm:$0xff]
  %v1295 = vld [vmem:[#allocation4 + $0x8] sm:$0xff]
  %v1296 = vld [vmem:[#allocation4 + $0x10] sm:$0xff]
  %v1297 = vld [vmem:[#allocation4 + $0x18] sm:$0xff]
  %v1298 = vld [vmem:[#allocation4 + $0x20] sm:$0xff]
  %v1299 = vld [vmem:[#allocation4 + $0x28] sm:$0xff]
  %s1300 = scalar_lea.vmem %s8, 192
  %v1301 = vld [vmem:[%s1300] sm:$0xf]
  %v1302 = vld [vmem:[%s1300 + $0x4] sm:$0xf]
  %v1303 = vld [vmem:[%s1300 + $0x8] sm:$0xf]
  %v1304 = vld [vmem:[%s1300 + $0xc] sm:$0xf]
  %v1305 = vld [vmem:[%s1300 + $0x10] sm:$0xf]
  %v1306 = vld [vmem:[%s1300 + $0x14] sm:$0xf]
  %v1307 = vld [vmem:[%s1300 + $0x18] sm:$0xf]
  %v1308 = vld [vmem:[%s1300 + $0x1c] sm:$0xf]
  %v1309 = vld [vmem:[%s1300 + $0x20] sm:$0xf]
  %v1310 = vld [vmem:[%s1300 + $0x24] sm:$0xf]
  %v1311 = vld [vmem:[%s1300 + $0x28] sm:$0xf]
  %v1312 = vld [vmem:[%s1300 + $0x2c] sm:$0xf]
  %v1313 = vld [vmem:[%s1300 + $0x30] sm:$0xf]
  %v1314 = vld [vmem:[%s1300 + $0x34] sm:$0xf]
  %v1315 = vld [vmem:[%s1300 + $0x38] sm:$0xf]
  %v1316 = vld [vmem:[%s1300 + $0x3c] sm:$0xf]
  %v1317 = vld [vmem:[%s1300 + $0x40] sm:$0xf]
  %v1318 = vld [vmem:[%s1300 + $0x44] sm:$0xf]
  %v1319 = vld [vmem:[%s1300 + $0x48] sm:$0xf]
  %v1320 = vld [vmem:[%s1300 + $0x4c] sm:$0xf]
  %v1321 = vld [vmem:[%s1300 + $0x50] sm:$0xf]
  %v1322 = vld [vmem:[%s1300 + $0x54] sm:$0xf]
  %v1323 = vld [vmem:[%s1300 + $0x58] sm:$0xf]
  %v1324 = vld [vmem:[%s1300 + $0x5c] sm:$0xf]
  %v1325 = vld [vmem:[%s1300 + $0x60] sm:$0xf]
  %v1326 = vld [vmem:[%s1300 + $0x64] sm:$0xf]
  %v1327 = vld [vmem:[%s1300 + $0x68] sm:$0xf]
  %v1328 = vld [vmem:[%s1300 + $0x6c] sm:$0xf]
  %v1329 = vld [vmem:[%s1300 + $0x70] sm:$0xf]
  %v1330 = vld [vmem:[%s1300 + $0x74] sm:$0xf]
  %v1331 = vld [vmem:[%s1300 + $0x78] sm:$0xf]
  %v1332 = vld [vmem:[%s1300 + $0x7c] sm:$0xf]
  %v1333 = vld [vmem:[%s1300 + $0x80] sm:$0xf]
  %v1334 = vld [vmem:[%s1300 + $0x84] sm:$0xf]
  %v1335 = vld [vmem:[%s1300 + $0x88] sm:$0xf]
  %v1336 = vld [vmem:[%s1300 + $0x8c] sm:$0xf]
  %v1337 = vld [vmem:[%s1300 + $0x90] sm:$0xf]
  %v1338 = vld [vmem:[%s1300 + $0x94] sm:$0xf]
  %v1339 = vld [vmem:[%s1300 + $0x98] sm:$0xf]
  %v1340 = vld [vmem:[%s1300 + $0x9c] sm:$0xf]
  %v1341 = vld [vmem:[%s1300 + $0xa0] sm:$0xf]
  %v1342 = vld [vmem:[%s1300 + $0xa4] sm:$0xf]
  %v1343 = vld [vmem:[%s1300 + $0xa8] sm:$0xf]
  %v1344 = vld [vmem:[%s1300 + $0xac] sm:$0xf]
  %v1345 = vld [vmem:[%s1300 + $0xb0] sm:$0xf]
  %v1346 = vld [vmem:[%s1300 + $0xb4] sm:$0xf]
  %v1347 = vld [vmem:[%s1300 + $0xb8] sm:$0xf]
  %v1348 = vld [vmem:[%s1300 + $0xbc] sm:$0xf]
  %s1349 = scalar_lea.vmem %s12, 4
  %v1350 = vld [vmem:[%s1349] sm:$0x1]
  %v1352 = vlaneseq
  %v1353 = vshrl.u32 %v1352, 7
  %v1354 = vsub.s32 0, %v1353
  %v1355 = vrot.slane %v1350, %v1354
  %v1405 = vunpack.c.l.b16 %v1301
  %v1406 = vunpack.c.l.b16 %v1302
  %v1407 = vunpack.c.l.b16 %v1303
  %v1408 = vunpack.c.l.b16 %v1304
  %v1409 = vunpack.c.l.b16 %v1305
  %v1410 = vunpack.c.l.b16 %v1306
  %v1411 = vunpack.c.l.b16 %v1307
  %v1412 = vunpack.c.l.b16 %v1308
  %v1413 = vunpack.c.l.b16 %v1309
  %v1414 = vunpack.c.l.b16 %v1310
  %v1415 = vunpack.c.l.b16 %v1311
  %v1416 = vunpack.c.l.b16 %v1312
  %v1417 = vunpack.c.l.b16 %v1313
  %v1418 = vunpack.c.l.b16 %v1314
  %v1419 = vunpack.c.l.b16 %v1315
  %v1420 = vunpack.c.l.b16 %v1316
  %v1421 = vunpack.c.l.b16 %v1317
  %v1422 = vunpack.c.l.b16 %v1318
  %v1423 = vunpack.c.l.b16 %v1319
  %v1424 = vunpack.c.l.b16 %v1320
  %v1425 = vunpack.c.l.b16 %v1321
  %v1426 = vunpack.c.l.b16 %v1322
  %v1427 = vunpack.c.l.b16 %v1323
  %v1428 = vunpack.c.l.b16 %v1324
  %v1429 = vunpack.c.l.b16 %v1325
  %v1430 = vunpack.c.l.b16 %v1326
  %v1431 = vunpack.c.l.b16 %v1327
  %v1432 = vunpack.c.l.b16 %v1328
  %v1433 = vunpack.c.l.b16 %v1329
  %v1434 = vunpack.c.l.b16 %v1330
  %v1435 = vunpack.c.l.b16 %v1331
  %v1436 = vunpack.c.l.b16 %v1332
  %v1437 = vunpack.c.l.b16 %v1333
  %v1438 = vunpack.c.l.b16 %v1334
  %v1439 = vunpack.c.l.b16 %v1335
  %v1440 = vunpack.c.l.b16 %v1336
  %v1441 = vunpack.c.l.b16 %v1337
  %v1442 = vunpack.c.l.b16 %v1338
  %v1443 = vunpack.c.l.b16 %v1339
  %v1444 = vunpack.c.l.b16 %v1340
  %v1445 = vunpack.c.l.b16 %v1341
  %v1446 = vunpack.c.l.b16 %v1342
  %v1447 = vunpack.c.l.b16 %v1343
  %v1448 = vunpack.c.l.b16 %v1344
  %v1449 = vunpack.c.l.b16 %v1345
  %v1450 = vunpack.c.l.b16 %v1346
  %v1451 = vunpack.c.l.b16 %v1347
  %v1452 = vunpack.c.l.b16 %v1348
  %v1453 = vpack.c.b16 %v1406, %v1405
  %v1454 = vpack.c.b16 %v1408, %v1407
  %v1455 = vpack.c.b16 %v1410, %v1409
  %v1456 = vpack.c.b16 %v1412, %v1411
  %v1457 = vpack.c.b16 %v1414, %v1413
  %v1458 = vpack.c.b16 %v1416, %v1415
  %v1459 = vpack.c.b16 %v1418, %v1417
  %v1460 = vpack.c.b16 %v1420, %v1419
  %v1461 = vpack.c.b16 %v1422, %v1421
  %v1462 = vpack.c.b16 %v1424, %v1423
  %v1463 = vpack.c.b16 %v1426, %v1425
  %v1464 = vpack.c.b16 %v1428, %v1427
  %v1465 = vpack.c.b16 %v1430, %v1429
  %v1466 = vpack.c.b16 %v1432, %v1431
  %v1467 = vpack.c.b16 %v1434, %v1433
  %v1468 = vpack.c.b16 %v1436, %v1435
  %v1469 = vpack.c.b16 %v1438, %v1437
  %v1470 = vpack.c.b16 %v1440, %v1439
  %v1471 = vpack.c.b16 %v1442, %v1441
  %v1472 = vpack.c.b16 %v1444, %v1443
  %v1473 = vpack.c.b16 %v1446, %v1445
  %v1474 = vpack.c.b16 %v1448, %v1447
  %v1475 = vpack.c.b16 %v1450, %v1449
  %v1476 = vpack.c.b16 %v1452, %v1451
  %1501 = vmatprep.subr.bf16.mxu0 0
  %1502 = vmatpush1.bf16.msra.mxu0 %v1453
  %1503 = vmatprep.subr.bf16.mxu0 0
  %1504 = vmatpush1.bf16.msra.mxu0 %v1454
  %1505 = vmatprep.subr.bf16.mxu0 0
  %1506 = vmatpush1.bf16.msra.mxu0 %v1455
  %1507 = vmatprep.subr.bf16.mxu0 0
  %1508 = vmatpush1.bf16.msra.mxu0 %v1456
  %1509 = vmatprep.subr.bf16.mxu0 0
  %1510 = vmatpush1.bf16.msra.mxu0 %v1457
  %1511 = vmatprep.subr.bf16.mxu0 0
  %1512 = vmatpush1.bf16.msra.mxu0 %v1458
  %1513 = vmatprep.subr.bf16.mxu0 0
  %1514 = vmatpush1.bf16.msra.mxu0 %v1459
  %1515 = vmatprep.subr.bf16.mxu0 0
  %1516 = vmatpush1.bf16.msra.mxu0 %v1460
  %1517 = vmatprep.subr.bf16.mxu0 0
  %1518 = vmatpush1.bf16.msra.mxu0 %v1461
  %1519 = vmatprep.subr.bf16.mxu0 0
  %1520 = vmatpush1.bf16.msra.mxu0 %v1462
  %1521 = vmatprep.subr.bf16.mxu0 0
  %1522 = vmatpush1.bf16.msra.mxu0 %v1463
  %1523 = vmatprep.subr.bf16.mxu0 0
  %1524 = vmatpush1.bf16.msra.mxu0 %v1464
  %1525 = vmatprep.subr.bf16.mxu0 0
  %1526 = vmatpush1.bf16.msra.mxu0 %v1465
  %1527 = vmatprep.subr.bf16.mxu0 0
  %1528 = vmatpush1.bf16.msra.mxu0 %v1466
  %1529 = vmatprep.subr.bf16.mxu0 0
  %1530 = vmatpush1.bf16.msra.mxu0 %v1467
  %1531 = vmatprep.subr.bf16.mxu0 0
  %1532 = vmatpush1.bf16.msra.mxu0 %v1468
  %1533 = vmatprep.mubr.bf16.mxu0 %v1295
  %1534 = vmatmul.mubr.bf16.gmra.mrb[0].mxu0 %v1294
  %v1535 = vpop.f32.mrb[0].mxu0
  %v1536 = vadd.f32 %v1355, %v1535
  %v1537 = vpop.f32.mrb[0].mxu0
  %v1538 = vpop.f32.mrb[0].mxu0
  %v1539 = vadd.f32 %v1355, %v1538
  %v1540 = vpop.f32.mrb[0].mxu0
  %1541 = vmatprep.mubr.bf16.mxu0 %v1298
  %1542 = vmatmul.mubr.bf16.gmra.mrb[0].mxu0 %v1297
  %v1543 = vpop.f32.mrb[0].mxu0
  %v1544 = vadd.f32 %v1355, %v1543
  %v1545 = vpop.f32.mrb[0].mxu0
  %v1546 = vpop.f32.mrb[0].mxu0
  %v1547 = vadd.f32 %v1355, %v1546
  %v1548 = vpop.f32.mrb[0].mxu0
  %1549 = vdwg.mxu0
  %1550 = vmatprep.subr.bf16.mxu0 0
  %1551 = vmatpush1.bf16.msra.mxu0 %v1469
  %1552 = vmatprep.subr.bf16.mxu0 0
  %1553 = vmatpush1.bf16.msra.mxu0 %v1470
  %1554 = vmatprep.subr.bf16.mxu0 0
  %1555 = vmatpush1.bf16.msra.mxu0 %v1471
  %1556 = vmatprep.subr.bf16.mxu0 0
  %1557 = vmatpush1.bf16.msra.mxu0 %v1472
  %1558 = vmatprep.subr.bf16.mxu0 0
  %1559 = vmatpush1.bf16.msra.mxu0 %v1473
  %1560 = vmatprep.subr.bf16.mxu0 0
  %1561 = vmatpush1.bf16.msra.mxu0 %v1474
  %1562 = vmatprep.subr.bf16.mxu0 0
  %1563 = vmatpush1.bf16.msra.mxu0 %v1475
  %1564 = vmatprep.subr.bf16.mxu0 0
  %1565 = vmatpush1.bf16.msra.mxu0 %v1476
  %1566 = vmatprep.subr.bf16.mxu0 0
  %1567 = vmatpush1.bf16.msra.mxu0 0
  %1568 = vmatprep.subr.bf16.mxu0 0
  %1569 = vmatpush1.bf16.msra.mxu0 0
  %1570 = vmatprep.subr.bf16.mxu0 0
  %1571 = vmatpush1.bf16.msra.mxu0 0
  %1572 = vmatprep.subr.bf16.mxu0 0
  %1573 = vmatpush1.bf16.msra.mxu0 0
  %1574 = vmatprep.subr.bf16.mxu0 0
  %1575 = vmatpush1.bf16.msra.mxu0 0
  %1576 = vmatprep.subr.bf16.mxu0 0
  %1577 = vmatpush1.bf16.msra.mxu0 0
  %1578 = vmatprep.subr.bf16.mxu0 0
  %1579 = vmatpush1.bf16.msra.mxu0 0
  %1580 = vmatprep.subr.bf16.mxu0 0
  %1581 = vmatpush1.bf16.msra.mxu0 0
  %1582 = vmatprep.mubr.bf16.mxu0 0
  %1583 = vmatmul.mubr.bf16.gmra.mrb[0].mxu0 %v1296
  %v1584 = vpop.f32.mrb[0].mxu0
  %v1585 = vadd.f32 %v1536, %v1584
  %v1586 = vpop.f32.mrb[0].mxu0
  %v1587 = vpop.f32.mrb[0].mxu0
  %v1588 = vadd.f32 %v1539, %v1587
  %v1589 = vpop.f32.mrb[0].mxu0
  %1590 = vmatprep.mubr.bf16.mxu0 0
  %1591 = vmatmul.mubr.bf16.gmra.mrb[0].mxu0 %v1299
  %v1592 = vpop.f32.mrb[0].mxu0
  %v1593 = vadd.f32 %v1544, %v1592
  %v1594 = vpop.f32.mrb[0].mxu0
  %v1595 = vpop.f32.mrb[0].mxu0
  %v1596 = vadd.f32 %v1547, %v1595
  %v1597 = vpop.f32.mrb[0].mxu0
  %1598 = vdwg.mxu0
  %v1599 = vmax.f32 %v1585, 0.0
  %v1600 = vmax.f32 %v1588, 0.0
  %v1601 = vmax.f32 %v1593, 0.0
  %v1602 = vmax.f32 %v1596, 0.0
  %v1603 = vpack.c.bf16 %v1600, %v1599
  %v1604 = vpack.c.bf16 %v1602, %v1601
  %s1605 = scalar_lea.vmem %s9, 64
  %v1606 = vld [vmem:[%s1605] sm:$0xf]
  %v1607 = vld [vmem:[%s1605 + $0x4] sm:$0xf]
  %v1608 = vld [vmem:[%s1605 + $0x8] sm:$0xf]
  %v1609 = vld [vmem:[%s1605 + $0xc] sm:$0xf]
  %v1610 = vld [vmem:[%s1605 + $0x10] sm:$0xf]
  %v1611 = vld [vmem:[%s1605 + $0x14] sm:$0xf]
  %v1612 = vld [vmem:[%s1605 + $0x18] sm:$0xf]
  %v1613 = vld [vmem:[%s1605 + $0x1c] sm:$0xf]
  %v1614 = vld [vmem:[%s1605 + $0x20] sm:$0xf]
  %v1615 = vld [vmem:[%s1605 + $0x24] sm:$0xf]
  %v1616 = vld [vmem:[%s1605 + $0x28] sm:$0xf]
  %v1617 = vld [vmem:[%s1605 + $0x2c] sm:$0xf]
  %v1618 = vld [vmem:[%s1605 + $0x30] sm:$0xf]
  %v1619 = vld [vmem:[%s1605 + $0x34] sm:$0xf]
  %v1620 = vld [vmem:[%s1605 + $0x38] sm:$0xf]
  %v1621 = vld [vmem:[%s1605 + $0x3c] sm:$0xf]
  %s1622 = scalar_lea.vmem %s12, 5
  %v1623 = vld [vmem:[%s1622] sm:$0x1]
  %v1625 = vlaneseq
  %v1626 = vshrl.u32 %v1625, 7
  %v1627 = vsub.s32 0, %v1626
  %v1628 = vrot.slane %v1623, %v1627
  %v1646 = vunpack.c.l.b16 %v1606
  %v1647 = vunpack.c.l.b16 %v1607
  %v1648 = vunpack.c.l.b16 %v1608
  %v1649 = vunpack.c.l.b16 %v1609
  %v1650 = vunpack.c.l.b16 %v1610
  %v1651 = vunpack.c.l.b16 %v1611
  %v1652 = vunpack.c.l.b16 %v1612
  %v1653 = vunpack.c.l.b16 %v1613
  %v1654 = vunpack.c.l.b16 %v1614
  %v1655 = vunpack.c.l.b16 %v1615
  %v1656 = vunpack.c.l.b16 %v1616
  %v1657 = vunpack.c.l.b16 %v1617
  %v1658 = vunpack.c.l.b16 %v1618
  %v1659 = vunpack.c.l.b16 %v1619
  %v1660 = vunpack.c.l.b16 %v1620
  %v1661 = vunpack.c.l.b16 %v1621
  %v1662 = vpack.c.b16 %v1647, %v1646
  %v1663 = vpack.c.b16 %v1649, %v1648
  %v1664 = vpack.c.b16 %v1651, %v1650
  %v1665 = vpack.c.b16 %v1653, %v1652
  %v1666 = vpack.c.b16 %v1655, %v1654
  %v1667 = vpack.c.b16 %v1657, %v1656
  %v1668 = vpack.c.b16 %v1659, %v1658
  %v1669 = vpack.c.b16 %v1661, %v1660
  %1678 = vmatprep.subr.bf16.mxu0 0
  %1679 = vmatpush1.bf16.msra.mxu0 %v1662
  %1680 = vmatprep.subr.bf16.mxu0 0
  %1681 = vmatpush1.bf16.msra.mxu0 %v1663
  %1682 = vmatprep.subr.bf16.mxu0 0
  %1683 = vmatpush1.bf16.msra.mxu0 %v1664
  %1684 = vmatprep.subr.bf16.mxu0 0
  %1685 = vmatpush1.bf16.msra.mxu0 %v1665
  %1686 = vmatprep.subr.bf16.mxu0 0
  %1687 = vmatpush1.bf16.msra.mxu0 %v1666
  %1688 = vmatprep.subr.bf16.mxu0 0
  %1689 = vmatpush1.bf16.msra.mxu0 %v1667
  %1690 = vmatprep.subr.bf16.mxu0 0
  %1691 = vmatpush1.bf16.msra.mxu0 %v1668
  %1692 = vmatprep.subr.bf16.mxu0 0
  %1693 = vmatpush1.bf16.msra.mxu0 %v1669
  %1694 = vmatprep.subr.bf16.mxu0 0
  %1695 = vmatpush1.bf16.msra.mxu0 0
  %1696 = vmatprep.subr.bf16.mxu0 0
  %1697 = vmatpush1.bf16.msra.mxu0 0
  %1698 = vmatprep.subr.bf16.mxu0 0
  %1699 = vmatpush1.bf16.msra.mxu0 0
  %1700 = vmatprep.subr.bf16.mxu0 0
  %1701 = vmatpush1.bf16.msra.mxu0 0
  %1702 = vmatprep.subr.bf16.mxu0 0
  %1703 = vmatpush1.bf16.msra.mxu0 0
  %1704 = vmatprep.subr.bf16.mxu0 0
  %1705 = vmatpush1.bf16.msra.mxu0 0
  %1706 = vmatprep.subr.bf16.mxu0 0
  %1707 = vmatpush1.bf16.msra.mxu0 0
  %1708 = vmatprep.subr.bf16.mxu0 0
  %1709 = vmatpush1.bf16.msra.mxu0 0
  %1710 = vmatprep.mubr.bf16.mxu0 0
  %1711 = vmatmul.mubr.bf16.gmra.mrb[0].mxu0 %v1603
  %v1712 = vpop.f32.mrb[0].mxu0
  %v1713 = vadd.f32 %v1628, %v1712
  %v1714 = vpop.f32.mrb[0].mxu0
  %v1715 = vpop.f32.mrb[0].mxu0
  %v1716 = vadd.f32 %v1628, %v1715
  %v1717 = vpop.f32.mrb[0].mxu0
  %1718 = vmatprep.mubr.bf16.mxu0 0
  %1719 = vmatmul.mubr.bf16.gmra.mrb[0].mxu0 %v1604
  %v1720 = vpop.f32.mrb[0].mxu0
  %v1721 = vadd.f32 %v1628, %v1720
  %v1722 = vpop.f32.mrb[0].mxu0
  %v1723 = vpop.f32.mrb[0].mxu0
  %v1724 = vadd.f32 %v1628, %v1723
  %v1725 = vpop.f32.mrb[0].mxu0
  %1726 = vdwg.mxu0
  %v1727 = vmax.f32 %v1713, 0.0
  %v1728 = vmax.f32 %v1716, 0.0
  %v1729 = vmax.f32 %v1721, 0.0
  %v1730 = vmax.f32 %v1724, 0.0
  %v1731 = vpack.c.bf16 %v1728, %v1727
  %v1732 = vpack.c.bf16 %v1730, %v1729
  %v1733 = vld [vmem:[%s4] sm:$0xf]
  %v1734 = vld [vmem:[%s4 + $0x4] sm:$0xf]
  %v1737 = vunpack.c.l.b16 %v1733
  %v1738 = vunpack.c.l.b16 %v1734
  %v1739 = vpack.c.b16 %v1738, %v1737
  %v1741 = vsel %vm790, %v1739, 0
  %1743 = vmatprep.subr.bf16.mxu0 0
  %1744 = vmatpush1.bf16.msra.mxu0 %v1731
  %1745 = vmatprep.subr.bf16.mxu0 0
  %1746 = vmatpush1.bf16.msra.mxu0 %v1732
  %1747 = vmatprep.subr.bf16.mxu0 0
  %1748 = vmatpush1.bf16.msra.mxu0 0
  %1749 = vmatprep.subr.bf16.mxu0 0
  %1750 = vmatpush1.bf16.msra.mxu0 0
  %1751 = vmatprep.subr.bf16.mxu0 0
  %1752 = vmatpush1.bf16.msra.mxu0 0
  %1753 = vmatprep.subr.bf16.mxu0 0
  %1754 = vmatpush1.bf16.msra.mxu0 0
  %1755 = vmatprep.subr.bf16.mxu0 0
  %1756 = vmatpush1.bf16.msra.mxu0 0
  %1757 = vmatprep.subr.bf16.mxu0 0
  %1758 = vmatpush1.bf16.msra.mxu0 0
  %1759 = vmatprep.subr.bf16.mxu0 0
  %1760 = vmatpush1.bf16.msra.mxu0 0
  %1761 = vmatprep.subr.bf16.mxu0 0
  %1762 = vmatpush1.bf16.msra.mxu0 0
  %1763 = vmatprep.subr.bf16.mxu0 0
  %1764 = vmatpush1.bf16.msra.mxu0 0
  %1765 = vmatprep.subr.bf16.mxu0 0
  %1766 = vmatpush1.bf16.msra.mxu0 0
  %1767 = vmatprep.subr.bf16.mxu0 0
  %1768 = vmatpush1.bf16.msra.mxu0 0
  %1769 = vmatprep.subr.bf16.mxu0 0
  %1770 = vmatpush1.bf16.msra.mxu0 0
  %1771 = vmatprep.subr.bf16.mxu0 0
  %1772 = vmatpush1.bf16.msra.mxu0 0
  %1773 = vmatprep.subr.bf16.mxu0 0
  %1774 = vmatpush1.bf16.msra.mxu0 0
  %1775 = vmatprep.mubr.bf16.mxu0 0
  %1776 = vmatmul.mubr.bf16.gmra.mrb[0].mxu0 %v1741
  %v1777 = vpop.f32.mrb[0].mxu0
  %v1778 = vadd.f32 0.0, %v1777
  %v1779 = vpop.f32.mrb[0].mxu0
  %v1780 = vpop.f32.mrb[0].mxu0
  %v1781 = vadd.f32 0.0, %v1780
  %v1782 = vpop.f32.mrb[0].mxu0
  %1783 = vdwg.mxu0
  %v1784 = vld [vmem:[#allocation3] sm:$0xff]
  %1785 = vst [vmem:[#allocation5] sm:$0xff] %v1784
  %v1786 = vpack.c.bf16 %v1781, %v1778
  %1787 = vst [vmem:[#allocation5 + $0x8] sm:$0xff] %v1786
  %v1788 = vld [vmem:[#allocation5] sm:$0xff]
  %v1789 = vld [vmem:[#allocation5 + $0x8] sm:$0xff]
  %s1790 = scalar_lea.vmem %s10, 128
  %v1791 = vld [vmem:[%s1790] sm:$0xf]
  %v1792 = vld [vmem:[%s1790 + $0x4] sm:$0xf]
  %v1793 = vld [vmem:[%s1790 + $0x8] sm:$0xf]
  %v1794 = vld [vmem:[%s1790 + $0xc] sm:$0xf]
  %v1795 = vld [vmem:[%s1790 + $0x10] sm:$0xf]
  %v1796 = vld [vmem:[%s1790 + $0x14] sm:$0xf]
  %v1797 = vld [vmem:[%s1790 + $0x18] sm:$0xf]
  %v1798 = vld [vmem:[%s1790 + $0x1c] sm:$0xf]
  %v1799 = vld [vmem:[%s1790 + $0x20] sm:$0xf]
  %v1800 = vld [vmem:[%s1790 + $0x24] sm:$0xf]
  %v1801 = vld [vmem:[%s1790 + $0x28] sm:$0xf]
  %v1802 = vld [vmem:[%s1790 + $0x2c] sm:$0xf]
  %v1803 = vld [vmem:[%s1790 + $0x30] sm:$0xf]
  %v1804 = vld [vmem:[%s1790 + $0x34] sm:$0xf]
  %v1805 = vld [vmem:[%s1790 + $0x38] sm:$0xf]
  %v1806 = vld [vmem:[%s1790 + $0x3c] sm:$0xf]
  %v1807 = vld [vmem:[%s1790 + $0x40] sm:$0xf]
  %v1808 = vld [vmem:[%s1790 + $0x44] sm:$0xf]
  %v1809 = vld [vmem:[%s1790 + $0x48] sm:$0xf]
  %v1810 = vld [vmem:[%s1790 + $0x4c] sm:$0xf]
  %v1811 = vld [vmem:[%s1790 + $0x50] sm:$0xf]
  %v1812 = vld [vmem:[%s1790 + $0x54] sm:$0xf]
  %v1813 = vld [vmem:[%s1790 + $0x58] sm:$0xf]
  %v1814 = vld [vmem:[%s1790 + $0x5c] sm:$0xf]
  %v1815 = vld [vmem:[%s1790 + $0x60] sm:$0xf]
  %v1816 = vld [vmem:[%s1790 + $0x64] sm:$0xf]
  %v1817 = vld [vmem:[%s1790 + $0x68] sm:$0xf]
  %v1818 = vld [vmem:[%s1790 + $0x6c] sm:$0xf]
  %v1819 = vld [vmem:[%s1790 + $0x70] sm:$0xf]
  %v1820 = vld [vmem:[%s1790 + $0x74] sm:$0xf]
  %v1821 = vld [vmem:[%s1790 + $0x78] sm:$0xf]
  %v1822 = vld [vmem:[%s1790 + $0x7c] sm:$0xf]
  %s1823 = scalar_lea.vmem %s12, 6
  %v1824 = vld [vmem:[%s1823] sm:$0x1]
  %v1826 = vlaneseq
  %v1827 = vshrl.u32 %v1826, 7
  %v1828 = vsub.s32 0, %v1827
  %v1829 = vrot.slane %v1824, %v1828
  %v1863 = vunpack.c.l.b16 %v1791
  %v1864 = vunpack.c.l.b16 %v1792
  %v1865 = vunpack.c.l.b16 %v1793
  %v1866 = vunpack.c.l.b16 %v1794
  %v1867 = vunpack.c.l.b16 %v1795
  %v1868 = vunpack.c.l.b16 %v1796
  %v1869 = vunpack.c.l.b16 %v1797
  %v1870 = vunpack.c.l.b16 %v1798
  %v1871 = vunpack.c.l.b16 %v1799
  %v1872 = vunpack.c.l.b16 %v1800
  %v1873 = vunpack.c.l.b16 %v1801
  %v1874 = vunpack.c.l.b16 %v1802
  %v1875 = vunpack.c.l.b16 %v1803
  %v1876 = vunpack.c.l.b16 %v1804
  %v1877 = vunpack.c.l.b16 %v1805
  %v1878 = vunpack.c.l.b16 %v1806
  %v1879 = vunpack.c.l.b16 %v1807
  %v1880 = vunpack.c.l.b16 %v1808
  %v1881 = vunpack.c.l.b16 %v1809
  %v1882 = vunpack.c.l.b16 %v1810
  %v1883 = vunpack.c.l.b16 %v1811
  %v1884 = vunpack.c.l.b16 %v1812
  %v1885 = vunpack.c.l.b16 %v1813
  %v1886 = vunpack.c.l.b16 %v1814
  %v1887 = vunpack.c.l.b16 %v1815
  %v1888 = vunpack.c.l.b16 %v1816
  %v1889 = vunpack.c.l.b16 %v1817
  %v1890 = vunpack.c.l.b16 %v1818
  %v1891 = vunpack.c.l.b16 %v1819
  %v1892 = vunpack.c.l.b16 %v1820
  %v1893 = vunpack.c.l.b16 %v1821
  %v1894 = vunpack.c.l.b16 %v1822
  %v1895 = vpack.c.b16 %v1864, %v1863
  %v1896 = vpack.c.b16 %v1866, %v1865
  %v1897 = vpack.c.b16 %v1868, %v1867
  %v1898 = vpack.c.b16 %v1870, %v1869
  %v1899 = vpack.c.b16 %v1872, %v1871
  %v1900 = vpack.c.b16 %v1874, %v1873
  %v1901 = vpack.c.b16 %v1876, %v1875
  %v1902 = vpack.c.b16 %v1878, %v1877
  %v1903 = vpack.c.b16 %v1880, %v1879
  %v1904 = vpack.c.b16 %v1882, %v1881
  %v1905 = vpack.c.b16 %v1884, %v1883
  %v1906 = vpack.c.b16 %v1886, %v1885
  %v1907 = vpack.c.b16 %v1888, %v1887
  %v1908 = vpack.c.b16 %v1890, %v1889
  %v1909 = vpack.c.b16 %v1892, %v1891
  %v1910 = vpack.c.b16 %v1894, %v1893
  %1927 = vmatprep.subr.bf16.mxu0 0
  %1928 = vmatpush1.bf16.msra.mxu0 %v1895
  %1929 = vmatprep.subr.bf16.mxu0 0
  %1930 = vmatpush1.bf16.msra.mxu0 %v1896
  %1931 = vmatprep.subr.bf16.mxu0 0
  %1932 = vmatpush1.bf16.msra.mxu0 %v1897
  %1933 = vmatprep.subr.bf16.mxu0 0
  %1934 = vmatpush1.bf16.msra.mxu0 %v1898
  %1935 = vmatprep.subr.bf16.mxu0 0
  %1936 = vmatpush1.bf16.msra.mxu0 %v1899
  %1937 = vmatprep.subr.bf16.mxu0 0
  %1938 = vmatpush1.bf16.msra.mxu0 %v1900
  %1939 = vmatprep.subr.bf16.mxu0 0
  %1940 = vmatpush1.bf16.msra.mxu0 %v1901
  %1941 = vmatprep.subr.bf16.mxu0 0
  %1942 = vmatpush1.bf16.msra.mxu0 %v1902
  %1943 = vmatprep.subr.bf16.mxu0 0
  %1944 = vmatpush1.bf16.msra.mxu0 %v1903
  %1945 = vmatprep.subr.bf16.mxu0 0
  %1946 = vmatpush1.bf16.msra.mxu0 %v1904
  %1947 = vmatprep.subr.bf16.mxu0 0
  %1948 = vmatpush1.bf16.msra.mxu0 %v1905
  %1949 = vmatprep.subr.bf16.mxu0 0
  %1950 = vmatpush1.bf16.msra.mxu0 %v1906
  %1951 = vmatprep.subr.bf16.mxu0 0
  %1952 = vmatpush1.bf16.msra.mxu0 %v1907
  %1953 = vmatprep.subr.bf16.mxu0 0
  %1954 = vmatpush1.bf16.msra.mxu0 %v1908
  %1955 = vmatprep.subr.bf16.mxu0 0
  %1956 = vmatpush1.bf16.msra.mxu0 %v1909
  %1957 = vmatprep.subr.bf16.mxu0 0
  %1958 = vmatpush1.bf16.msra.mxu0 %v1910
  %1959 = vmatprep.mubr.bf16.mxu0 %v1789
  %1960 = vmatmul.mubr.bf16.gmra.mrb[0].mxu0 %v1788
  %v1961 = vpop.f32.mrb[0].mxu0
  %v1962 = vadd.f32 %v1829, %v1961
  %v1963 = vpop.f32.mrb[0].mxu0
  %v1964 = vpop.f32.mrb[0].mxu0
  %v1965 = vadd.f32 %v1829, %v1964
  %v1966 = vpop.f32.mrb[0].mxu0
  %1967 = vdwg.mxu0
  %v1968 = vmax.f32 %v1962, 0.0
  %v1969 = vmax.f32 %v1965, 0.0
  %v1970 = vpack.c.bf16 %v1969, %v1968
  %s1971 = scalar_lea.vmem %s11, 64
  %v1972 = vld [vmem:[%s1971] sm:$0xf]
  %v1973 = vld [vmem:[%s1971 + $0x4] sm:$0xf]
  %v1974 = vld [vmem:[%s1971 + $0x8] sm:$0xf]
  %v1975 = vld [vmem:[%s1971 + $0xc] sm:$0xf]
  %v1976 = vld [vmem:[%s1971 + $0x10] sm:$0xf]
  %v1977 = vld [vmem:[%s1971 + $0x14] sm:$0xf]
  %v1978 = vld [vmem:[%s1971 + $0x18] sm:$0xf]
  %v1979 = vld [vmem:[%s1971 + $0x1c] sm:$0xf]
  %v1980 = vld [vmem:[%s1971 + $0x20] sm:$0xf]
  %v1981 = vld [vmem:[%s1971 + $0x24] sm:$0xf]
  %v1982 = vld [vmem:[%s1971 + $0x28] sm:$0xf]
  %v1983 = vld [vmem:[%s1971 + $0x2c] sm:$0xf]
  %v1984 = vld [vmem:[%s1971 + $0x30] sm:$0xf]
  %v1985 = vld [vmem:[%s1971 + $0x34] sm:$0xf]
  %v1986 = vld [vmem:[%s1971 + $0x38] sm:$0xf]
  %v1987 = vld [vmem:[%s1971 + $0x3c] sm:$0xf]
  %s1988 = scalar_lea.vmem %s12, 7
  %v1989 = vld [vmem:[%s1988] sm:$0x1]
  %v1991 = vlaneseq
  %v1992 = vshrl.u32 %v1991, 7
  %v1993 = vsub.s32 0, %v1992
  %v1994 = vrot.slane %v1989, %v1993
  %v2012 = vunpack.c.l.b16 %v1972
  %v2013 = vunpack.c.l.b16 %v1973
  %v2014 = vunpack.c.l.b16 %v1974
  %v2015 = vunpack.c.l.b16 %v1975
  %v2016 = vunpack.c.l.b16 %v1976
  %v2017 = vunpack.c.l.b16 %v1977
  %v2018 = vunpack.c.l.b16 %v1978
  %v2019 = vunpack.c.l.b16 %v1979
  %v2020 = vunpack.c.l.b16 %v1980
  %v2021 = vunpack.c.l.b16 %v1981
  %v2022 = vunpack.c.l.b16 %v1982
  %v2023 = vunpack.c.l.b16 %v1983
  %v2024 = vunpack.c.l.b16 %v1984
  %v2025 = vunpack.c.l.b16 %v1985
  %v2026 = vunpack.c.l.b16 %v1986
  %v2027 = vunpack.c.l.b16 %v1987
  %v2028 = vpack.c.b16 %v2013, %v2012
  %v2029 = vpack.c.b16 %v2015, %v2014
  %v2030 = vpack.c.b16 %v2017, %v2016
  %v2031 = vpack.c.b16 %v2019, %v2018
  %v2032 = vpack.c.b16 %v2021, %v2020
  %v2033 = vpack.c.b16 %v2023, %v2022
  %v2034 = vpack.c.b16 %v2025, %v2024
  %v2035 = vpack.c.b16 %v2027, %v2026
  %2044 = vmatprep.subr.bf16.mxu0 0
  %2045 = vmatpush1.bf16.msra.mxu0 %v2028
  %2046 = vmatprep.subr.bf16.mxu0 0
  %2047 = vmatpush1.bf16.msra.mxu0 %v2029
  %2048 = vmatprep.subr.bf16.mxu0 0
  %2049 = vmatpush1.bf16.msra.mxu0 %v2030
  %2050 = vmatprep.subr.bf16.mxu0 0
  %2051 = vmatpush1.bf16.msra.mxu0 %v2031
  %2052 = vmatprep.subr.bf16.mxu0 0
  %2053 = vmatpush1.bf16.msra.mxu0 %v2032
  %2054 = vmatprep.subr.bf16.mxu0 0
  %2055 = vmatpush1.bf16.msra.mxu0 %v2033
  %2056 = vmatprep.subr.bf16.mxu0 0
  %2057 = vmatpush1.bf16.msra.mxu0 %v2034
  %2058 = vmatprep.subr.bf16.mxu0 0
  %2059 = vmatpush1.bf16.msra.mxu0 %v2035
  %2060 = vmatprep.subr.bf16.mxu0 0
  %2061 = vmatpush1.bf16.msra.mxu0 0
  %2062 = vmatprep.subr.bf16.mxu0 0
  %2063 = vmatpush1.bf16.msra.mxu0 0
  %2064 = vmatprep.subr.bf16.mxu0 0
  %2065 = vmatpush1.bf16.msra.mxu0 0
  %2066 = vmatprep.subr.bf16.mxu0 0
  %2067 = vmatpush1.bf16.msra.mxu0 0
  %2068 = vmatprep.subr.bf16.mxu0 0
  %2069 = vmatpush1.bf16.msra.mxu0 0
  %2070 = vmatprep.subr.bf16.mxu0 0
  %2071 = vmatpush1.bf16.msra.mxu0 0
  %2072 = vmatprep.subr.bf16.mxu0 0
  %2073 = vmatpush1.bf16.msra.mxu0 0
  %2074 = vmatprep.subr.bf16.mxu0 0
  %2075 = vmatpush1.bf16.msra.mxu0 0
  %2076 = vmatprep.mubr.bf16.mxu0 0
  %2077 = vmatmul.mubr.bf16.gmra.mrb[0].mxu0 %v1970
  %v2078 = vpop.f32.mrb[0].mxu0
  %v2079 = vadd.f32 %v1994, %v2078
  %v2080 = vpop.f32.mrb[0].mxu0
  %v2081 = vpop.f32.mrb[0].mxu0
  %v2082 = vadd.f32 %v1994, %v2081
  %v2083 = vpop.f32.mrb[0].mxu0
  %2084 = vdwg.mxu0
  %v2085 = vmax.f32 %v2079, 0.0
  %v2086 = vmax.f32 %v2082, 0.0
  %v2087 = vld [vmem:[#allocation2] sm:$0xff]
  %v2088 = vld [vmem:[#allocation2 + $0x8] sm:$0xff]
  %v2089 = vadd.f32 %v2087, %v2085
  %v2090 = vadd.f32 %v2088, %v2086
  %2091 = vst [vmem:[#allocation2] sm:$0xff] %v2089
  %2092 = vst [vmem:[#allocation2 + $0x8] sm:$0xff] %v2090
  %v2093 = vld [vmem:[#allocation2] sm:$0xff]
  %v2094 = vld [vmem:[#allocation2 + $0x8] sm:$0xff]
  %v2095 = vpack.c.bf16 %v2094, %v2093
  %2096 = vst [vmem:[#allocation3] sm:$0xff] %v2095
  %v2097 = vld [vmem:[%s2] sm:$0xf]
  %v2098 = vld [vmem:[%s2 + $0x4] sm:$0xf]
  %v2099 = vld [vmem:[%s2 + $0x8] sm:$0xf]
  %v2100 = vld [vmem:[%s2 + $0xc] sm:$0xf]
  %v2101 = vld [vmem:[#allocation3] sm:$0xff]
  %v2106 = vunpack.c.l.b16 %v2097
  %v2107 = vunpack.c.l.b16 %v2098
  %v2108 = vunpack.c.l.b16 %v2099
  %v2109 = vunpack.c.l.b16 %v2100
  %v2110 = vpack.c.b16 %v2107, %v2106
  %v2111 = vpack.c.b16 %v2109, %v2108
  %v2113 = vsel %vm213, %v2110, 0
  %v2116 = vsel %vm213, %v2111, 0
  %2118 = vmatprep.subr.bf16.mxu0 0
  %2119 = vmatpush1.bf16.msra.mxu0 %v2101
  %2120 = vmatprep.subr.bf16.mxu0 0
  %2121 = vmatpush1.bf16.msra.mxu0 0
  %2122 = vmatprep.subr.bf16.mxu0 0
  %2123 = vmatpush1.bf16.msra.mxu0 0
  %2124 = vmatprep.subr.bf16.mxu0 0
  %2125 = vmatpush1.bf16.msra.mxu0 0
  %2126 = vmatprep.subr.bf16.mxu0 0
  %2127 = vmatpush1.bf16.msra.mxu0 0
  %2128 = vmatprep.subr.bf16.mxu0 0
  %2129 = vmatpush1.bf16.msra.mxu0 0
  %2130 = vmatprep.subr.bf16.mxu0 0
  %2131 = vmatpush1.bf16.msra.mxu0 0
  %2132 = vmatprep.subr.bf16.mxu0 0
  %2133 = vmatpush1.bf16.msra.mxu0 0
  %2134 = vmatprep.subr.bf16.mxu0 0
  %2135 = vmatpush1.bf16.msra.mxu0 0
  %2136 = vmatprep.subr.bf16.mxu0 0
  %2137 = vmatpush1.bf16.msra.mxu0 0
  %2138 = vmatprep.subr.bf16.mxu0 0
  %2139 = vmatpush1.bf16.msra.mxu0 0
  %2140 = vmatprep.subr.bf16.mxu0 0
  %2141 = vmatpush1.bf16.msra.mxu0 0
  %2142 = vmatprep.subr.bf16.mxu0 0
  %2143 = vmatpush1.bf16.msra.mxu0 0
  %2144 = vmatprep.subr.bf16.mxu0 0
  %2145 = vmatpush1.bf16.msra.mxu0 0
  %2146 = vmatprep.subr.bf16.mxu0 0
  %2147 = vmatpush1.bf16.msra.mxu0 0
  %2148 = vmatprep.subr.bf16.mxu0 0
  %2149 = vmatpush1.bf16.msra.mxu0 0
  %2150 = vmatprep.mubr.bf16.mxu0 0
  %2151 = vmatmul.mubr.bf16.gmra.mrb[0].mxu0 %v2113
  %v2152 = vpop.f32.mrb[0].mxu0
  %v2153 = vadd.f32 0.0, %v2152
  %v2154 = vpop.f32.mrb[0].mxu0
  %v2155 = vpop.f32.mrb[0].mxu0
  %v2156 = vadd.f32 0.0, %v2155
  %v2157 = vpop.f32.mrb[0].mxu0
  %2158 = vmatprep.mubr.bf16.mxu0 0
  %2159 = vmatmul.mubr.bf16.gmra.mrb[0].mxu0 %v2116
  %v2160 = vpop.f32.mrb[0].mxu0
  %v2161 = vadd.f32 0.0, %v2160
  %v2162 = vpop.f32.mrb[0].mxu0
  %v2163 = vpop.f32.mrb[0].mxu0
  %v2164 = vadd.f32 0.0, %v2163
  %v2165 = vpop.f32.mrb[0].mxu0
  %2166 = vdwg.mxu0
  %v2167 = vpack.c.bf16 %v2156, %v2153
  %v2168 = vpack.c.bf16 %v2164, %v2161
  %2169 = vst [vmem:[#allocation4] sm:$0xff] %v2167
  %2170 = vst [vmem:[#allocation4 + $0x18] sm:$0xff] %v2168
  %v2171 = vld [vmem:[%s3] sm:$0xf]
  %v2172 = vld [vmem:[%s3 + $0x4] sm:$0xf]
  %v2173 = vld [vmem:[%s3 + $0x8] sm:$0xf]
  %v2174 = vld [vmem:[%s3 + $0xc] sm:$0xf]
  %v2175 = vld [vmem:[#allocation3] sm:$0xff]
  %v2180 = vunpack.c.l.b16 %v2171
  %v2181 = vunpack.c.l.b16 %v2172
  %v2182 = vunpack.c.l.b16 %v2173
  %v2183 = vunpack.c.l.b16 %v2174
  %v2184 = vpack.c.b16 %v2181, %v2180
  %v2185 = vpack.c.b16 %v2183, %v2182
  %v2187 = vsel %vm213, %v2184, 0
  %v2190 = vsel %vm213, %v2185, 0
  %2192 = vmatprep.subr.bf16.mxu0 0
  %2193 = vmatpush1.bf16.msra.mxu0 %v2175
  %2194 = vmatprep.subr.bf16.mxu0 0
  %2195 = vmatpush1.bf16.msra.mxu0 0
  %2196 = vmatprep.subr.bf16.mxu0 0
  %2197 = vmatpush1.bf16.msra.mxu0 0
  %2198 = vmatprep.subr.bf16.mxu0 0
  %2199 = vmatpush1.bf16.msra.mxu0 0
  %2200 = vmatprep.subr.bf16.mxu0 0
  %2201 = vmatpush1.bf16.msra.mxu0 0
  %2202 = vmatprep.subr.bf16.mxu0 0
  %2203 = vmatpush1.bf16.msra.mxu0 0
  %2204 = vmatprep.subr.bf16.mxu0 0
  %2205 = vmatpush1.bf16.msra.mxu0 0
  %2206 = vmatprep.subr.bf16.mxu0 0
  %2207 = vmatpush1.bf16.msra.mxu0 0
  %2208 = vmatprep.subr.bf16.mxu0 0
  %2209 = vmatpush1.bf16.msra.mxu0 0
  %2210 = vmatprep.subr.bf16.mxu0 0
  %2211 = vmatpush1.bf16.msra.mxu0 0
  %2212 = vmatprep.subr.bf16.mxu0 0
  %2213 = vmatpush1.bf16.msra.mxu0 0
  %2214 = vmatprep.subr.bf16.mxu0 0
  %2215 = vmatpush1.bf16.msra.mxu0 0
  %2216 = vmatprep.subr.bf16.mxu0 0
  %2217 = vmatpush1.bf16.msra.mxu0 0
  %2218 = vmatprep.subr.bf16.mxu0 0
  %2219 = vmatpush1.bf16.msra.mxu0 0
  %2220 = vmatprep.subr.bf16.mxu0 0
  %2221 = vmatpush1.bf16.msra.mxu0 0
  %2222 = vmatprep.subr.bf16.mxu0 0
  %2223 = vmatpush1.bf16.msra.mxu0 0
  %2224 = vmatprep.mubr.bf16.mxu0 0
  %2225 = vmatmul.mubr.bf16.gmra.mrb[0].mxu0 %v2187
  %v2226 = vpop.f32.mrb[0].mxu0
  %v2227 = vadd.f32 0.0, %v2226
  %v2228 = vpop.f32.mrb[0].mxu0
  %v2229 = vpop.f32.mrb[0].mxu0
  %v2230 = vadd.f32 0.0, %v2229
  %v2231 = vpop.f32.mrb[0].mxu0
  %2232 = vmatprep.mubr.bf16.mxu0 0
  %2233 = vmatmul.mubr.bf16.gmra.mrb[0].mxu0 %v2190
  %v2234 = vpop.f32.mrb[0].mxu0
  %v2235 = vadd.f32 0.0, %v2234
  %v2236 = vpop.f32.mrb[0].mxu0
  %v2237 = vpop.f32.mrb[0].mxu0
  %v2238 = vadd.f32 0.0, %v2237
  %v2239 = vpop.f32.mrb[0].mxu0
  %2240 = vdwg.mxu0
  %v2241 = vpack.c.bf16 %v2230, %v2227
  %v2242 = vpack.c.bf16 %v2238, %v2235
  %2243 = vst [vmem:[#allocation4 + $0x8] sm:$0xff] %v2241
  %2244 = vst [vmem:[#allocation4 + $0x20] sm:$0xff] %v2242
  %v2245 = vld [vmem:[#allocation4] sm:$0xff]
  %v2246 = vld [vmem:[#allocation4 + $0x8] sm:$0xff]
  %v2247 = vld [vmem:[#allocation4 + $0x10] sm:$0xff]
  %v2248 = vld [vmem:[#allocation4 + $0x18] sm:$0xff]
  %v2249 = vld [vmem:[#allocation4 + $0x20] sm:$0xff]
  %v2250 = vld [vmem:[#allocation4 + $0x28] sm:$0xff]
  %s2251 = scalar_lea.vmem %s8, 384
  %v2252 = vld [vmem:[%s2251] sm:$0xf]
  %v2253 = vld [vmem:[%s2251 + $0x4] sm:$0xf]
  %v2254 = vld [vmem:[%s2251 + $0x8] sm:$0xf]
  %v2255 = vld [vmem:[%s2251 + $0xc] sm:$0xf]
  %v2256 = vld [vmem:[%s2251 + $0x10] sm:$0xf]
  %v2257 = vld [vmem:[%s2251 + $0x14] sm:$0xf]
  %v2258 = vld [vmem:[%s2251 + $0x18] sm:$0xf]
  %v2259 = vld [vmem:[%s2251 + $0x1c] sm:$0xf]
  %v2260 = vld [vmem:[%s2251 + $0x20] sm:$0xf]
  %v2261 = vld [vmem:[%s2251 + $0x24] sm:$0xf]
  %v2262 = vld [vmem:[%s2251 + $0x28] sm:$0xf]
  %v2263 = vld [vmem:[%s2251 + $0x2c] sm:$0xf]
  %v2264 = vld [vmem:[%s2251 + $0x30] sm:$0xf]
  %v2265 = vld [vmem:[%s2251 + $0x34] sm:$0xf]
  %v2266 = vld [vmem:[%s2251 + $0x38] sm:$0xf]
  %v2267 = vld [vmem:[%s2251 + $0x3c] sm:$0xf]
  %v2268 = vld [vmem:[%s2251 + $0x40] sm:$0xf]
  %v2269 = vld [vmem:[%s2251 + $0x44] sm:$0xf]
  %v2270 = vld [vmem:[%s2251 + $0x48] sm:$0xf]
  %v2271 = vld [vmem:[%s2251 + $0x4c] sm:$0xf]
  %v2272 = vld [vmem:[%s2251 + $0x50] sm:$0xf]
  %v2273 = vld [vmem:[%s2251 + $0x54] sm:$0xf]
  %v2274 = vld [vmem:[%s2251 + $0x58] sm:$0xf]
  %v2275 = vld [vmem:[%s2251 + $0x5c] sm:$0xf]
  %v2276 = vld [vmem:[%s2251 + $0x60] sm:$0xf]
  %v2277 = vld [vmem:[%s2251 + $0x64] sm:$0xf]
  %v2278 = vld [vmem:[%s2251 + $0x68] sm:$0xf]
  %v2279 = vld [vmem:[%s2251 + $0x6c] sm:$0xf]
  %v2280 = vld [vmem:[%s2251 + $0x70] sm:$0xf]
  %v2281 = vld [vmem:[%s2251 + $0x74] sm:$0xf]
  %v2282 = vld [vmem:[%s2251 + $0x78] sm:$0xf]
  %v2283 = vld [vmem:[%s2251 + $0x7c] sm:$0xf]
  %v2284 = vld [vmem:[%s2251 + $0x80] sm:$0xf]
  %v2285 = vld [vmem:[%s2251 + $0x84] sm:$0xf]
  %v2286 = vld [vmem:[%s2251 + $0x88] sm:$0xf]
  %v2287 = vld [vmem:[%s2251 + $0x8c] sm:$0xf]
  %v2288 = vld [vmem:[%s2251 + $0x90] sm:$0xf]
  %v2289 = vld [vmem:[%s2251 + $0x94] sm:$0xf]
  %v2290 = vld [vmem:[%s2251 + $0x98] sm:$0xf]
  %v2291 = vld [vmem:[%s2251 + $0x9c] sm:$0xf]
  %v2292 = vld [vmem:[%s2251 + $0xa0] sm:$0xf]
  %v2293 = vld [vmem:[%s2251 + $0xa4] sm:$0xf]
  %v2294 = vld [vmem:[%s2251 + $0xa8] sm:$0xf]
  %v2295 = vld [vmem:[%s2251 + $0xac] sm:$0xf]
  %v2296 = vld [vmem:[%s2251 + $0xb0] sm:$0xf]
  %v2297 = vld [vmem:[%s2251 + $0xb4] sm:$0xf]
  %v2298 = vld [vmem:[%s2251 + $0xb8] sm:$0xf]
  %v2299 = vld [vmem:[%s2251 + $0xbc] sm:$0xf]
  %s2300 = scalar_lea.vmem %s12, 8
  %v2301 = vld [vmem:[%s2300] sm:$0x1]
  %v2303 = vlaneseq
  %v2304 = vshrl.u32 %v2303, 7
  %v2305 = vsub.s32 0, %v2304
  %v2306 = vrot.slane %v2301, %v2305
  %v2356 = vunpack.c.l.b16 %v2252
  %v2357 = vunpack.c.l.b16 %v2253
  %v2358 = vunpack.c.l.b16 %v2254
  %v2359 = vunpack.c.l.b16 %v2255
  %v2360 = vunpack.c.l.b16 %v2256
  %v2361 = vunpack.c.l.b16 %v2257
  %v2362 = vunpack.c.l.b16 %v2258
  %v2363 = vunpack.c.l.b16 %v2259
  %v2364 = vunpack.c.l.b16 %v2260
  %v2365 = vunpack.c.l.b16 %v2261
  %v2366 = vunpack.c.l.b16 %v2262
  %v2367 = vunpack.c.l.b16 %v2263
  %v2368 = vunpack.c.l.b16 %v2264
  %v2369 = vunpack.c.l.b16 %v2265
  %v2370 = vunpack.c.l.b16 %v2266
  %v2371 = vunpack.c.l.b16 %v2267
  %v2372 = vunpack.c.l.b16 %v2268
  %v2373 = vunpack.c.l.b16 %v2269
  %v2374 = vunpack.c.l.b16 %v2270
  %v2375 = vunpack.c.l.b16 %v2271
  %v2376 = vunpack.c.l.b16 %v2272
  %v2377 = vunpack.c.l.b16 %v2273
  %v2378 = vunpack.c.l.b16 %v2274
  %v2379 = vunpack.c.l.b16 %v2275
  %v2380 = vunpack.c.l.b16 %v2276
  %v2381 = vunpack.c.l.b16 %v2277
  %v2382 = vunpack.c.l.b16 %v2278
  %v2383 = vunpack.c.l.b16 %v2279
  %v2384 = vunpack.c.l.b16 %v2280
  %v2385 = vunpack.c.l.b16 %v2281
  %v2386 = vunpack.c.l.b16 %v2282
  %v2387 = vunpack.c.l.b16 %v2283
  %v2388 = vunpack.c.l.b16 %v2284
  %v2389 = vunpack.c.l.b16 %v2285
  %v2390 = vunpack.c.l.b16 %v2286
  %v2391 = vunpack.c.l.b16 %v2287
  %v2392 = vunpack.c.l.b16 %v2288
  %v2393 = vunpack.c.l.b16 %v2289
  %v2394 = vunpack.c.l.b16 %v2290
  %v2395 = vunpack.c.l.b16 %v2291
  %v2396 = vunpack.c.l.b16 %v2292
  %v2397 = vunpack.c.l.b16 %v2293
  %v2398 = vunpack.c.l.b16 %v2294
  %v2399 = vunpack.c.l.b16 %v2295
  %v2400 = vunpack.c.l.b16 %v2296
  %v2401 = vunpack.c.l.b16 %v2297
  %v2402 = vunpack.c.l.b16 %v2298
  %v2403 = vunpack.c.l.b16 %v2299
  %v2404 = vpack.c.b16 %v2357, %v2356
  %v2405 = vpack.c.b16 %v2359, %v2358
  %v2406 = vpack.c.b16 %v2361, %v2360
  %v2407 = vpack.c.b16 %v2363, %v2362
  %v2408 = vpack.c.b16 %v2365, %v2364
  %v2409 = vpack.c.b16 %v2367, %v2366
  %v2410 = vpack.c.b16 %v2369, %v2368
  %v2411 = vpack.c.b16 %v2371, %v2370
  %v2412 = vpack.c.b16 %v2373, %v2372
  %v2413 = vpack.c.b16 %v2375, %v2374
  %v2414 = vpack.c.b16 %v2377, %v2376
  %v2415 = vpack.c.b16 %v2379, %v2378
  %v2416 = vpack.c.b16 %v2381, %v2380
  %v2417 = vpack.c.b16 %v2383, %v2382
  %v2418 = vpack.c.b16 %v2385, %v2384
  %v2419 = vpack.c.b16 %v2387, %v2386
  %v2420 = vpack.c.b16 %v2389, %v2388
  %v2421 = vpack.c.b16 %v2391, %v2390
  %v2422 = vpack.c.b16 %v2393, %v2392
  %v2423 = vpack.c.b16 %v2395, %v2394
  %v2424 = vpack.c.b16 %v2397, %v2396
  %v2425 = vpack.c.b16 %v2399, %v2398
  %v2426 = vpack.c.b16 %v2401, %v2400
  %v2427 = vpack.c.b16 %v2403, %v2402
  %2452 = vmatprep.subr.bf16.mxu0 0
  %2453 = vmatpush1.bf16.msra.mxu0 %v2404
  %2454 = vmatprep.subr.bf16.mxu0 0
  %2455 = vmatpush1.bf16.msra.mxu0 %v2405
  %2456 = vmatprep.subr.bf16.mxu0 0
  %2457 = vmatpush1.bf16.msra.mxu0 %v2406
  %2458 = vmatprep.subr.bf16.mxu0 0
  %2459 = vmatpush1.bf16.msra.mxu0 %v2407
  %2460 = vmatprep.subr.bf16.mxu0 0
  %2461 = vmatpush1.bf16.msra.mxu0 %v2408
  %2462 = vmatprep.subr.bf16.mxu0 0
  %2463 = vmatpush1.bf16.msra.mxu0 %v2409
  %2464 = vmatprep.subr.bf16.mxu0 0
  %2465 = vmatpush1.bf16.msra.mxu0 %v2410
  %2466 = vmatprep.subr.bf16.mxu0 0
  %2467 = vmatpush1.bf16.msra.mxu0 %v2411
  %2468 = vmatprep.subr.bf16.mxu0 0
  %2469 = vmatpush1.bf16.msra.mxu0 %v2412
  %2470 = vmatprep.subr.bf16.mxu0 0
  %2471 = vmatpush1.bf16.msra.mxu0 %v2413
  %2472 = vmatprep.subr.bf16.mxu0 0
  %2473 = vmatpush1.bf16.msra.mxu0 %v2414
  %2474 = vmatprep.subr.bf16.mxu0 0
  %2475 = vmatpush1.bf16.msra.mxu0 %v2415
  %2476 = vmatprep.subr.bf16.mxu0 0
  %2477 = vmatpush1.bf16.msra.mxu0 %v2416
  %2478 = vmatprep.subr.bf16.mxu0 0
  %2479 = vmatpush1.bf16.msra.mxu0 %v2417
  %2480 = vmatprep.subr.bf16.mxu0 0
  %2481 = vmatpush1.bf16.msra.mxu0 %v2418
  %2482 = vmatprep.subr.bf16.mxu0 0
  %2483 = vmatpush1.bf16.msra.mxu0 %v2419
  %2484 = vmatprep.mubr.bf16.mxu0 %v2246
  %2485 = vmatmul.mubr.bf16.gmra.mrb[0].mxu0 %v2245
  %v2486 = vpop.f32.mrb[0].mxu0
  %v2487 = vadd.f32 %v2306, %v2486
  %v2488 = vpop.f32.mrb[0].mxu0
  %v2489 = vpop.f32.mrb[0].mxu0
  %v2490 = vadd.f32 %v2306, %v2489
  %v2491 = vpop.f32.mrb[0].mxu0
  %2492 = vmatprep.mubr.bf16.mxu0 %v2249
  %2493 = vmatmul.mubr.bf16.gmra.mrb[0].mxu0 %v2248
  %v2494 = vpop.f32.mrb[0].mxu0
  %v2495 = vadd.f32 %v2306, %v2494
  %v2496 = vpop.f32.mrb[0].mxu0
  %v2497 = vpop.f32.mrb[0].mxu0
  %v2498 = vadd.f32 %v2306, %v2497
  %v2499 = vpop.f32.mrb[0].mxu0
  %2500 = vdwg.mxu0
  %2501 = vmatprep.subr.bf16.mxu0 0
  %2502 = vmatpush1.bf16.msra.mxu0 %v2420
  %2503 = vmatprep.subr.bf16.mxu0 0
  %2504 = vmatpush1.bf16.msra.mxu0 %v2421
  %2505 = vmatprep.subr.bf16.mxu0 0
  %2506 = vmatpush1.bf16.msra.mxu0 %v2422
  %2507 = vmatprep.subr.bf16.mxu0 0
  %2508 = vmatpush1.bf16.msra.mxu0 %v2423
  %2509 = vmatprep.subr.bf16.mxu0 0
  %2510 = vmatpush1.bf16.msra.mxu0 %v2424
  %2511 = vmatprep.subr.bf16.mxu0 0
  %2512 = vmatpush1.bf16.msra.mxu0 %v2425
  %2513 = vmatprep.subr.bf16.mxu0 0
  %2514 = vmatpush1.bf16.msra.mxu0 %v2426
  %2515 = vmatprep.subr.bf16.mxu0 0
  %2516 = vmatpush1.bf16.msra.mxu0 %v2427
  %2517 = vmatprep.subr.bf16.mxu0 0
  %2518 = vmatpush1.bf16.msra.mxu0 0
  %2519 = vmatprep.subr.bf16.mxu0 0
  %2520 = vmatpush1.bf16.msra.mxu0 0
  %2521 = vmatprep.subr.bf16.mxu0 0
  %2522 = vmatpush1.bf16.msra.mxu0 0
  %2523 = vmatprep.subr.bf16.mxu0 0
  %2524 = vmatpush1.bf16.msra.mxu0 0
  %2525 = vmatprep.subr.bf16.mxu0 0
  %2526 = vmatpush1.bf16.msra.mxu0 0
  %2527 = vmatprep.subr.bf16.mxu0 0
  %2528 = vmatpush1.bf16.msra.mxu0 0
  %2529 = vmatprep.subr.bf16.mxu0 0
  %2530 = vmatpush1.bf16.msra.mxu0 0
  %2531 = vmatprep.subr.bf16.mxu0 0
  %2532 = vmatpush1.bf16.msra.mxu0 0
  %2533 = vmatprep.mubr.bf16.mxu0 0
  %2534 = vmatmul.mubr.bf16.gmra.mrb[0].mxu0 %v2247
  %v2535 = vpop.f32.mrb[0].mxu0
  %v2536 = vadd.f32 %v2487, %v2535
  %v2537 = vpop.f32.mrb[0].mxu0
  %v2538 = vpop.f32.mrb[0].mxu0
  %v2539 = vadd.f32 %v2490, %v2538
  %v2540 = vpop.f32.mrb[0].mxu0
  %2541 = vmatprep.mubr.bf16.mxu0 0
  %2542 = vmatmul.mubr.bf16.gmra.mrb[0].mxu0 %v2250
  %v2543 = vpop.f32.mrb[0].mxu0
  %v2544 = vadd.f32 %v2495, %v2543
  %v2545 = vpop.f32.mrb[0].mxu0
  %v2546 = vpop.f32.mrb[0].mxu0
  %v2547 = vadd.f32 %v2498, %v2546
  %v2548 = vpop.f32.mrb[0].mxu0
  %2549 = vdwg.mxu0
  %v2550 = vmax.f32 %v2536, 0.0
  %v2551 = vmax.f32 %v2539, 0.0
  %v2552 = vmax.f32 %v2544, 0.0
  %v2553 = vmax.f32 %v2547, 0.0
  %v2554 = vpack.c.bf16 %v2551, %v2550
  %v2555 = vpack.c.bf16 %v2553, %v2552
  %s2556 = scalar_lea.vmem %s9, 128
  %v2557 = vld [vmem:[%s2556] sm:$0xf]
  %v2558 = vld [vmem:[%s2556 + $0x4] sm:$0xf]
  %v2559 = vld [vmem:[%s2556 + $0x8] sm:$0xf]
  %v2560 = vld [vmem:[%s2556 + $0xc] sm:$0xf]
  %v2561 = vld [vmem:[%s2556 + $0x10] sm:$0xf]
  %v2562 = vld [vmem:[%s2556 + $0x14] sm:$0xf]
  %v2563 = vld [vmem:[%s2556 + $0x18] sm:$0xf]
  %v2564 = vld [vmem:[%s2556 + $0x1c] sm:$0xf]
  %v2565 = vld [vmem:[%s2556 + $0x20] sm:$0xf]
  %v2566 = vld [vmem:[%s2556 + $0x24] sm:$0xf]
  %v2567 = vld [vmem:[%s2556 + $0x28] sm:$0xf]
  %v2568 = vld [vmem:[%s2556 + $0x2c] sm:$0xf]
  %v2569 = vld [vmem:[%s2556 + $0x30] sm:$0xf]
  %v2570 = vld [vmem:[%s2556 + $0x34] sm:$0xf]
  %v2571 = vld [vmem:[%s2556 + $0x38] sm:$0xf]
  %v2572 = vld [vmem:[%s2556 + $0x3c] sm:$0xf]
  %s2573 = scalar_lea.vmem %s12, 9
  %v2574 = vld [vmem:[%s2573] sm:$0x1]
  %v2576 = vlaneseq
  %v2577 = vshrl.u32 %v2576, 7
  %v2578 = vsub.s32 0, %v2577
  %v2579 = vrot.slane %v2574, %v2578
  %v2597 = vunpack.c.l.b16 %v2557
  %v2598 = vunpack.c.l.b16 %v2558
  %v2599 = vunpack.c.l.b16 %v2559
  %v2600 = vunpack.c.l.b16 %v2560
  %v2601 = vunpack.c.l.b16 %v2561
  %v2602 = vunpack.c.l.b16 %v2562
  %v2603 = vunpack.c.l.b16 %v2563
  %v2604 = vunpack.c.l.b16 %v2564
  %v2605 = vunpack.c.l.b16 %v2565
  %v2606 = vunpack.c.l.b16 %v2566
  %v2607 = vunpack.c.l.b16 %v2567
  %v2608 = vunpack.c.l.b16 %v2568
  %v2609 = vunpack.c.l.b16 %v2569
  %v2610 = vunpack.c.l.b16 %v2570
  %v2611 = vunpack.c.l.b16 %v2571
  %v2612 = vunpack.c.l.b16 %v2572
  %v2613 = vpack.c.b16 %v2598, %v2597
  %v2614 = vpack.c.b16 %v2600, %v2599
  %v2615 = vpack.c.b16 %v2602, %v2601
  %v2616 = vpack.c.b16 %v2604, %v2603
  %v2617 = vpack.c.b16 %v2606, %v2605
  %v2618 = vpack.c.b16 %v2608, %v2607
  %v2619 = vpack.c.b16 %v2610, %v2609
  %v2620 = vpack.c.b16 %v2612, %v2611
  %2629 = vmatprep.subr.bf16.mxu0 0
  %2630 = vmatpush1.bf16.msra.mxu0 %v2613
  %2631 = vmatprep.subr.bf16.mxu0 0
  %2632 = vmatpush1.bf16.msra.mxu0 %v2614
  %2633 = vmatprep.subr.bf16.mxu0 0
  %2634 = vmatpush1.bf16.msra.mxu0 %v2615
  %2635 = vmatprep.subr.bf16.mxu0 0
  %2636 = vmatpush1.bf16.msra.mxu0 %v2616
  %2637 = vmatprep.subr.bf16.mxu0 0
  %2638 = vmatpush1.bf16.msra.mxu0 %v2617
  %2639 = vmatprep.subr.bf16.mxu0 0
  %2640 = vmatpush1.bf16.msra.mxu0 %v2618
  %2641 = vmatprep.subr.bf16.mxu0 0
  %2642 = vmatpush1.bf16.msra.mxu0 %v2619
  %2643 = vmatprep.subr.bf16.mxu0 0
  %2644 = vmatpush1.bf16.msra.mxu0 %v2620
  %2645 = vmatprep.subr.bf16.mxu0 0
  %2646 = vmatpush1.bf16.msra.mxu0 0
  %2647 = vmatprep.subr.bf16.mxu0 0
  %2648 = vmatpush1.bf16.msra.mxu0 0
  %2649 = vmatprep.subr.bf16.mxu0 0
  %2650 = vmatpush1.bf16.msra.mxu0 0
  %2651 = vmatprep.subr.bf16.mxu0 0
  %2652 = vmatpush1.bf16.msra.mxu0 0
  %2653 = vmatprep.subr.bf16.mxu0 0
  %2654 = vmatpush1.bf16.msra.mxu0 0
  %2655 = vmatprep.subr.bf16.mxu0 0
  %2656 = vmatpush1.bf16.msra.mxu0 0
  %2657 = vmatprep.subr.bf16.mxu0 0
  %2658 = vmatpush1.bf16.msra.mxu0 0
  %2659 = vmatprep.subr.bf16.mxu0 0
  %2660 = vmatpush1.bf16.msra.mxu0 0
  %2661 = vmatprep.mubr.bf16.mxu0 0
  %2662 = vmatmul.mubr.bf16.gmra.mrb[0].mxu0 %v2554
  %v2663 = vpop.f32.mrb[0].mxu0
  %v2664 = vadd.f32 %v2579, %v2663
  %v2665 = vpop.f32.mrb[0].mxu0
  %v2666 = vpop.f32.mrb[0].mxu0
  %v2667 = vadd.f32 %v2579, %v2666
  %v2668 = vpop.f32.mrb[0].mxu0
  %2669 = vmatprep.mubr.bf16.mxu0 0
  %2670 = vmatmul.mubr.bf16.gmra.mrb[0].mxu0 %v2555
  %v2671 = vpop.f32.mrb[0].mxu0
  %v2672 = vadd.f32 %v2579, %v2671
  %v2673 = vpop.f32.mrb[0].mxu0
  %v2674 = vpop.f32.mrb[0].mxu0
  %v2675 = vadd.f32 %v2579, %v2674
  %v2676 = vpop.f32.mrb[0].mxu0
  %2677 = vdwg.mxu0
  %v2678 = vmax.f32 %v2664, 0.0
  %v2679 = vmax.f32 %v2667, 0.0
  %v2680 = vmax.f32 %v2672, 0.0
  %v2681 = vmax.f32 %v2675, 0.0
  %v2682 = vpack.c.bf16 %v2679, %v2678
  %v2683 = vpack.c.bf16 %v2681, %v2680
  %v2684 = vld [vmem:[%s4] sm:$0xf]
  %v2685 = vld [vmem:[%s4 + $0x4] sm:$0xf]
  %v2688 = vunpack.c.l.b16 %v2684
  %v2689 = vunpack.c.l.b16 %v2685
  %v2690 = vpack.c.b16 %v2689, %v2688
  %v2692 = vsel %vm790, %v2690, 0
  %2694 = vmatprep.subr.bf16.mxu0 0
  %2695 = vmatpush1.bf16.msra.mxu0 %v2682
  %2696 = vmatprep.subr.bf16.mxu0 0
  %2697 = vmatpush1.bf16.msra.mxu0 %v2683
  %2698 = vmatprep.subr.bf16.mxu0 0
  %2699 = vmatpush1.bf16.msra.mxu0 0
  %2700 = vmatprep.subr.bf16.mxu0 0
  %2701 = vmatpush1.bf16.msra.mxu0 0
  %2702 = vmatprep.subr.bf16.mxu0 0
  %2703 = vmatpush1.bf16.msra.mxu0 0
  %2704 = vmatprep.subr.bf16.mxu0 0
  %2705 = vmatpush1.bf16.msra.mxu0 0
  %2706 = vmatprep.subr.bf16.mxu0 0
  %2707 = vmatpush1.bf16.msra.mxu0 0
  %2708 = vmatprep.subr.bf16.mxu0 0
  %2709 = vmatpush1.bf16.msra.mxu0 0
  %2710 = vmatprep.subr.bf16.mxu0 0
  %2711 = vmatpush1.bf16.msra.mxu0 0
  %2712 = vmatprep.subr.bf16.mxu0 0
  %2713 = vmatpush1.bf16.msra.mxu0 0
  %2714 = vmatprep.subr.bf16.mxu0 0
  %2715 = vmatpush1.bf16.msra.mxu0 0
  %2716 = vmatprep.subr.bf16.mxu0 0
  %2717 = vmatpush1.bf16.msra.mxu0 0
  %2718 = vmatprep.subr.bf16.mxu0 0
  %2719 = vmatpush1.bf16.msra.mxu0 0
  %2720 = vmatprep.subr.bf16.mxu0 0
  %2721 = vmatpush1.bf16.msra.mxu0 0
  %2722 = vmatprep.subr.bf16.mxu0 0
  %2723 = vmatpush1.bf16.msra.mxu0 0
  %2724 = vmatprep.subr.bf16.mxu0 0
  %2725 = vmatpush1.bf16.msra.mxu0 0
  %2726 = vmatprep.mubr.bf16.mxu0 0
  %2727 = vmatmul.mubr.bf16.gmra.mrb[0].mxu0 %v2692
  %v2728 = vpop.f32.mrb[0].mxu0
  %v2729 = vadd.f32 0.0, %v2728
  %v2730 = vpop.f32.mrb[0].mxu0
  %v2731 = vpop.f32.mrb[0].mxu0
  %v2732 = vadd.f32 0.0, %v2731
  %v2733 = vpop.f32.mrb[0].mxu0
  %2734 = vdwg.mxu0
  %v2735 = vld [vmem:[#allocation3] sm:$0xff]
  %2736 = vst [vmem:[#allocation5] sm:$0xff] %v2735
  %v2737 = vpack.c.bf16 %v2732, %v2729
  %2738 = vst [vmem:[#allocation5 + $0x8] sm:$0xff] %v2737
  %v2739 = vld [vmem:[#allocation5] sm:$0xff]
  %v2740 = vld [vmem:[#allocation5 + $0x8] sm:$0xff]
  %s2741 = scalar_lea.vmem %s10, 256
  %v2742 = vld [vmem:[%s2741] sm:$0xf]
  %v2743 = vld [vmem:[%s2741 + $0x4] sm:$0xf]
  %v2744 = vld [vmem:[%s2741 + $0x8] sm:$0xf]
  %v2745 = vld [vmem:[%s2741 + $0xc] sm:$0xf]
  %v2746 = vld [vmem:[%s2741 + $0x10] sm:$0xf]
  %v2747 = vld [vmem:[%s2741 + $0x14] sm:$0xf]
  %v2748 = vld [vmem:[%s2741 + $0x18] sm:$0xf]
  %v2749 = vld [vmem:[%s2741 + $0x1c] sm:$0xf]
  %v2750 = vld [vmem:[%s2741 + $0x20] sm:$0xf]
  %v2751 = vld [vmem:[%s2741 + $0x24] sm:$0xf]
  %v2752 = vld [vmem:[%s2741 + $0x28] sm:$0xf]
  %v2753 = vld [vmem:[%s2741 + $0x2c] sm:$0xf]
  %v2754 = vld [vmem:[%s2741 + $0x30] sm:$0xf]
  %v2755 = vld [vmem:[%s2741 + $0x34] sm:$0xf]
  %v2756 = vld [vmem:[%s2741 + $0x38] sm:$0xf]
  %v2757 = vld [vmem:[%s2741 + $0x3c] sm:$0xf]
  %v2758 = vld [vmem:[%s2741 + $0x40] sm:$0xf]
  %v2759 = vld [vmem:[%s2741 + $0x44] sm:$0xf]
  %v2760 = vld [vmem:[%s2741 + $0x48] sm:$0xf]
  %v2761 = vld [vmem:[%s2741 + $0x4c] sm:$0xf]
  %v2762 = vld [vmem:[%s2741 + $0x50] sm:$0xf]
  %v2763 = vld [vmem:[%s2741 + $0x54] sm:$0xf]
  %v2764 = vld [vmem:[%s2741 + $0x58] sm:$0xf]
  %v2765 = vld [vmem:[%s2741 + $0x5c] sm:$0xf]
  %v2766 = vld [vmem:[%s2741 + $0x60] sm:$0xf]
  %v2767 = vld [vmem:[%s2741 + $0x64] sm:$0xf]
  %v2768 = vld [vmem:[%s2741 + $0x68] sm:$0xf]
  %v2769 = vld [vmem:[%s2741 + $0x6c] sm:$0xf]
  %v2770 = vld [vmem:[%s2741 + $0x70] sm:$0xf]
  %v2771 = vld [vmem:[%s2741 + $0x74] sm:$0xf]
  %v2772 = vld [vmem:[%s2741 + $0x78] sm:$0xf]
  %v2773 = vld [vmem:[%s2741 + $0x7c] sm:$0xf]
  %s2774 = scalar_lea.vmem %s12, 10
  %v2775 = vld [vmem:[%s2774] sm:$0x1]
  %v2777 = vlaneseq
  %v2778 = vshrl.u32 %v2777, 7
  %v2779 = vsub.s32 0, %v2778
  %v2780 = vrot.slane %v2775, %v2779
  %v2814 = vunpack.c.l.b16 %v2742
  %v2815 = vunpack.c.l.b16 %v2743
  %v2816 = vunpack.c.l.b16 %v2744
  %v2817 = vunpack.c.l.b16 %v2745
  %v2818 = vunpack.c.l.b16 %v2746
  %v2819 = vunpack.c.l.b16 %v2747
  %v2820 = vunpack.c.l.b16 %v2748
  %v2821 = vunpack.c.l.b16 %v2749
  %v2822 = vunpack.c.l.b16 %v2750
  %v2823 = vunpack.c.l.b16 %v2751
  %v2824 = vunpack.c.l.b16 %v2752
  %v2825 = vunpack.c.l.b16 %v2753
  %v2826 = vunpack.c.l.b16 %v2754
  %v2827 = vunpack.c.l.b16 %v2755
  %v2828 = vunpack.c.l.b16 %v2756
  %v2829 = vunpack.c.l.b16 %v2757
  %v2830 = vunpack.c.l.b16 %v2758
  %v2831 = vunpack.c.l.b16 %v2759
  %v2832 = vunpack.c.l.b16 %v2760
  %v2833 = vunpack.c.l.b16 %v2761
  %v2834 = vunpack.c.l.b16 %v2762
  %v2835 = vunpack.c.l.b16 %v2763
  %v2836 = vunpack.c.l.b16 %v2764
  %v2837 = vunpack.c.l.b16 %v2765
  %v2838 = vunpack.c.l.b16 %v2766
  %v2839 = vunpack.c.l.b16 %v2767
  %v2840 = vunpack.c.l.b16 %v2768
  %v2841 = vunpack.c.l.b16 %v2769
  %v2842 = vunpack.c.l.b16 %v2770
  %v2843 = vunpack.c.l.b16 %v2771
  %v2844 = vunpack.c.l.b16 %v2772
  %v2845 = vunpack.c.l.b16 %v2773
  %v2846 = vpack.c.b16 %v2815, %v2814
  %v2847 = vpack.c.b16 %v2817, %v2816
  %v2848 = vpack.c.b16 %v2819, %v2818
  %v2849 = vpack.c.b16 %v2821, %v2820
  %v2850 = vpack.c.b16 %v2823, %v2822
  %v2851 = vpack.c.b16 %v2825, %v2824
  %v2852 = vpack.c.b16 %v2827, %v2826
  %v2853 = vpack.c.b16 %v2829, %v2828
  %v2854 = vpack.c.b16 %v2831, %v2830
  %v2855 = vpack.c.b16 %v2833, %v2832
  %v2856 = vpack.c.b16 %v2835, %v2834
  %v2857 = vpack.c.b16 %v2837, %v2836
  %v2858 = vpack.c.b16 %v2839, %v2838
  %v2859 = vpack.c.b16 %v2841, %v2840
  %v2860 = vpack.c.b16 %v2843, %v2842
  %v2861 = vpack.c.b16 %v2845, %v2844
  %2878 = vmatprep.subr.bf16.mxu0 0
  %2879 = vmatpush1.bf16.msra.mxu0 %v2846
  %2880 = vmatprep.subr.bf16.mxu0 0
  %2881 = vmatpush1.bf16.msra.mxu0 %v2847
  %2882 = vmatprep.subr.bf16.mxu0 0
  %2883 = vmatpush1.bf16.msra.mxu0 %v2848
  %2884 = vmatprep.subr.bf16.mxu0 0
  %2885 = vmatpush1.bf16.msra.mxu0 %v2849
  %2886 = vmatprep.subr.bf16.mxu0 0
  %2887 = vmatpush1.bf16.msra.mxu0 %v2850
  %2888 = vmatprep.subr.bf16.mxu0 0
  %2889 = vmatpush1.bf16.msra.mxu0 %v2851
  %2890 = vmatprep.subr.bf16.mxu0 0
  %2891 = vmatpush1.bf16.msra.mxu0 %v2852
  %2892 = vmatprep.subr.bf16.mxu0 0
  %2893 = vmatpush1.bf16.msra.mxu0 %v2853
  %2894 = vmatprep.subr.bf16.mxu0 0
  %2895 = vmatpush1.bf16.msra.mxu0 %v2854
  %2896 = vmatprep.subr.bf16.mxu0 0
  %2897 = vmatpush1.bf16.msra.mxu0 %v2855
  %2898 = vmatprep.subr.bf16.mxu0 0
  %2899 = vmatpush1.bf16.msra.mxu0 %v2856
  %2900 = vmatprep.subr.bf16.mxu0 0
  %2901 = vmatpush1.bf16.msra.mxu0 %v2857
  %2902 = vmatprep.subr.bf16.mxu0 0
  %2903 = vmatpush1.bf16.msra.mxu0 %v2858
  %2904 = vmatprep.subr.bf16.mxu0 0
  %2905 = vmatpush1.bf16.msra.mxu0 %v2859
  %2906 = vmatprep.subr.bf16.mxu0 0
  %2907 = vmatpush1.bf16.msra.mxu0 %v2860
  %2908 = vmatprep.subr.bf16.mxu0 0
  %2909 = vmatpush1.bf16.msra.mxu0 %v2861
  %2910 = vmatprep.mubr.bf16.mxu0 %v2740
  %2911 = vmatmul.mubr.bf16.gmra.mrb[0].mxu0 %v2739
  %v2912 = vpop.f32.mrb[0].mxu0
  %v2913 = vadd.f32 %v2780, %v2912
  %v2914 = vpop.f32.mrb[0].mxu0
  %v2915 = vpop.f32.mrb[0].mxu0
  %v2916 = vadd.f32 %v2780, %v2915
  %v2917 = vpop.f32.mrb[0].mxu0
  %2918 = vdwg.mxu0
  %v2919 = vmax.f32 %v2913, 0.0
  %v2920 = vmax.f32 %v2916, 0.0
  %v2921 = vpack.c.bf16 %v2920, %v2919
  %s2922 = scalar_lea.vmem %s11, 128
  %v2923 = vld [vmem:[%s2922] sm:$0xf]
  %v2924 = vld [vmem:[%s2922 + $0x4] sm:$0xf]
  %v2925 = vld [vmem:[%s2922 + $0x8] sm:$0xf]
  %v2926 = vld [vmem:[%s2922 + $0xc] sm:$0xf]
  %v2927 = vld [vmem:[%s2922 + $0x10] sm:$0xf]
  %v2928 = vld [vmem:[%s2922 + $0x14] sm:$0xf]
  %v2929 = vld [vmem:[%s2922 + $0x18] sm:$0xf]
  %v2930 = vld [vmem:[%s2922 + $0x1c] sm:$0xf]
  %v2931 = vld [vmem:[%s2922 + $0x20] sm:$0xf]
  %v2932 = vld [vmem:[%s2922 + $0x24] sm:$0xf]
  %v2933 = vld [vmem:[%s2922 + $0x28] sm:$0xf]
  %v2934 = vld [vmem:[%s2922 + $0x2c] sm:$0xf]
  %v2935 = vld [vmem:[%s2922 + $0x30] sm:$0xf]
  %v2936 = vld [vmem:[%s2922 + $0x34] sm:$0xf]
  %v2937 = vld [vmem:[%s2922 + $0x38] sm:$0xf]
  %v2938 = vld [vmem:[%s2922 + $0x3c] sm:$0xf]
  %s2939 = scalar_lea.vmem %s12, 11
  %v2940 = vld [vmem:[%s2939] sm:$0x1]
  %v2942 = vlaneseq
  %v2943 = vshrl.u32 %v2942, 7
  %v2944 = vsub.s32 0, %v2943
  %v2945 = vrot.slane %v2940, %v2944
  %v2963 = vunpack.c.l.b16 %v2923
  %v2964 = vunpack.c.l.b16 %v2924
  %v2965 = vunpack.c.l.b16 %v2925
  %v2966 = vunpack.c.l.b16 %v2926
  %v2967 = vunpack.c.l.b16 %v2927
  %v2968 = vunpack.c.l.b16 %v2928
  %v2969 = vunpack.c.l.b16 %v2929
  %v2970 = vunpack.c.l.b16 %v2930
  %v2971 = vunpack.c.l.b16 %v2931
  %v2972 = vunpack.c.l.b16 %v2932
  %v2973 = vunpack.c.l.b16 %v2933
  %v2974 = vunpack.c.l.b16 %v2934
  %v2975 = vunpack.c.l.b16 %v2935
  %v2976 = vunpack.c.l.b16 %v2936
  %v2977 = vunpack.c.l.b16 %v2937
  %v2978 = vunpack.c.l.b16 %v2938
  %v2979 = vpack.c.b16 %v2964, %v2963
  %v2980 = vpack.c.b16 %v2966, %v2965
  %v2981 = vpack.c.b16 %v2968, %v2967
  %v2982 = vpack.c.b16 %v2970, %v2969
  %v2983 = vpack.c.b16 %v2972, %v2971
  %v2984 = vpack.c.b16 %v2974, %v2973
  %v2985 = vpack.c.b16 %v2976, %v2975
  %v2986 = vpack.c.b16 %v2978, %v2977
  %2995 = vmatprep.subr.bf16.mxu0 0
  %2996 = vmatpush1.bf16.msra.mxu0 %v2979
  %2997 = vmatprep.subr.bf16.mxu0 0
  %2998 = vmatpush1.bf16.msra.mxu0 %v2980
  %2999 = vmatprep.subr.bf16.mxu0 0
  %3000 = vmatpush1.bf16.msra.mxu0 %v2981
  %3001 = vmatprep.subr.bf16.mxu0 0
  %3002 = vmatpush1.bf16.msra.mxu0 %v2982
  %3003 = vmatprep.subr.bf16.mxu0 0
  %3004 = vmatpush1.bf16.msra.mxu0 %v2983
  %3005 = vmatprep.subr.bf16.mxu0 0
  %3006 = vmatpush1.bf16.msra.mxu0 %v2984
  %3007 = vmatprep.subr.bf16.mxu0 0
  %3008 = vmatpush1.bf16.msra.mxu0 %v2985
  %3009 = vmatprep.subr.bf16.mxu0 0
  %3010 = vmatpush1.bf16.msra.mxu0 %v2986
  %3011 = vmatprep.subr.bf16.mxu0 0
  %3012 = vmatpush1.bf16.msra.mxu0 0
  %3013 = vmatprep.subr.bf16.mxu0 0
  %3014 = vmatpush1.bf16.msra.mxu0 0
  %3015 = vmatprep.subr.bf16.mxu0 0
  %3016 = vmatpush1.bf16.msra.mxu0 0
  %3017 = vmatprep.subr.bf16.mxu0 0
  %3018 = vmatpush1.bf16.msra.mxu0 0
  %3019 = vmatprep.subr.bf16.mxu0 0
  %3020 = vmatpush1.bf16.msra.mxu0 0
  %3021 = vmatprep.subr.bf16.mxu0 0
  %3022 = vmatpush1.bf16.msra.mxu0 0
  %3023 = vmatprep.subr.bf16.mxu0 0
  %3024 = vmatpush1.bf16.msra.mxu0 0
  %3025 = vmatprep.subr.bf16.mxu0 0
  %3026 = vmatpush1.bf16.msra.mxu0 0
  %3027 = vmatprep.mubr.bf16.mxu0 0
  %3028 = vmatmul.mubr.bf16.gmra.mrb[0].mxu0 %v2921
  %v3029 = vpop.f32.mrb[0].mxu0
  %v3030 = vadd.f32 %v2945, %v3029
  %v3031 = vpop.f32.mrb[0].mxu0
  %v3032 = vpop.f32.mrb[0].mxu0
  %v3033 = vadd.f32 %v2945, %v3032
  %v3034 = vpop.f32.mrb[0].mxu0
  %3035 = vdwg.mxu0
  %v3036 = vmax.f32 %v3030, 0.0
  %v3037 = vmax.f32 %v3033, 0.0
  %v3038 = vld [vmem:[#allocation2] sm:$0xff]
  %v3039 = vld [vmem:[#allocation2 + $0x8] sm:$0xff]
  %v3040 = vadd.f32 %v3038, %v3036
  %v3041 = vadd.f32 %v3039, %v3037
  %3042 = vst [vmem:[#allocation2] sm:$0xff] %v3040
  %3043 = vst [vmem:[#allocation2 + $0x8] sm:$0xff] %v3041
  %v3044 = vld [vmem:[#allocation2] sm:$0xff]
  %v3045 = vld [vmem:[#allocation2 + $0x8] sm:$0xff]
  %v3046 = vpack.c.bf16 %v3045, %v3044
  %3047 = vst [vmem:[#allocation3] sm:$0xff] %v3046
  %v3048 = vld [vmem:[%s2] sm:$0xf]
  %v3049 = vld [vmem:[%s2 + $0x4] sm:$0xf]
  %v3050 = vld [vmem:[%s2 + $0x8] sm:$0xf]
  %v3051 = vld [vmem:[%s2 + $0xc] sm:$0xf]
  %v3052 = vld [vmem:[#allocation3] sm:$0xff]
  %v3057 = vunpack.c.l.b16 %v3048
  %v3058 = vunpack.c.l.b16 %v3049
  %v3059 = vunpack.c.l.b16 %v3050
  %v3060 = vunpack.c.l.b16 %v3051
  %v3061 = vpack.c.b16 %v3058, %v3057
  %v3062 = vpack.c.b16 %v3060, %v3059
  %v3064 = vsel %vm213, %v3061, 0
  %v3067 = vsel %vm213, %v3062, 0
  %3069 = vmatprep.subr.bf16.mxu0 0
  %3070 = vmatpush1.bf16.msra.mxu0 %v3052
  %3071 = vmatprep.subr.bf16.mxu0 0
  %3072 = vmatpush1.bf16.msra.mxu0 0
  %3073 = vmatprep.subr.bf16.mxu0 0
  %3074 = vmatpush1.bf16.msra.mxu0 0
  %3075 = vmatprep.subr.bf16.mxu0 0
  %3076 = vmatpush1.bf16.msra.mxu0 0
  %3077 = vmatprep.subr.bf16.mxu0 0
  %3078 = vmatpush1.bf16.msra.mxu0 0
  %3079 = vmatprep.subr.bf16.mxu0 0
  %3080 = vmatpush1.bf16.msra.mxu0 0
  %3081 = vmatprep.subr.bf16.mxu0 0
  %3082 = vmatpush1.bf16.msra.mxu0 0
  %3083 = vmatprep.subr.bf16.mxu0 0
  %3084 = vmatpush1.bf16.msra.mxu0 0
  %3085 = vmatprep.subr.bf16.mxu0 0
  %3086 = vmatpush1.bf16.msra.mxu0 0
  %3087 = vmatprep.subr.bf16.mxu0 0
  %3088 = vmatpush1.bf16.msra.mxu0 0
  %3089 = vmatprep.subr.bf16.mxu0 0
  %3090 = vmatpush1.bf16.msra.mxu0 0
  %3091 = vmatprep.subr.bf16.mxu0 0
  %3092 = vmatpush1.bf16.msra.mxu0 0
  %3093 = vmatprep.subr.bf16.mxu0 0
  %3094 = vmatpush1.bf16.msra.mxu0 0
  %3095 = vmatprep.subr.bf16.mxu0 0
  %3096 = vmatpush1.bf16.msra.mxu0 0
  %3097 = vmatprep.subr.bf16.mxu0 0
  %3098 = vmatpush1.bf16.msra.mxu0 0
  %3099 = vmatprep.subr.bf16.mxu0 0
  %3100 = vmatpush1.bf16.msra.mxu0 0
  %3101 = vmatprep.mubr.bf16.mxu0 0
  %3102 = vmatmul.mubr.bf16.gmra.mrb[0].mxu0 %v3064
  %v3103 = vpop.f32.mrb[0].mxu0
  %v3104 = vadd.f32 0.0, %v3103
  %v3105 = vpop.f32.mrb[0].mxu0
  %v3106 = vpop.f32.mrb[0].mxu0
  %v3107 = vadd.f32 0.0, %v3106
  %v3108 = vpop.f32.mrb[0].mxu0
  %3109 = vmatprep.mubr.bf16.mxu0 0
  %3110 = vmatmul.mubr.bf16.gmra.mrb[0].mxu0 %v3067
  %v3111 = vpop.f32.mrb[0].mxu0
  %v3112 = vadd.f32 0.0, %v3111
  %v3113 = vpop.f32.mrb[0].mxu0
  %v3114 = vpop.f32.mrb[0].mxu0
  %v3115 = vadd.f32 0.0, %v3114
  %v3116 = vpop.f32.mrb[0].mxu0
  %3117 = vdwg.mxu0
  %v3118 = vpack.c.bf16 %v3107, %v3104
  %v3119 = vpack.c.bf16 %v3115, %v3112
  %3120 = vst [vmem:[#allocation4] sm:$0xff] %v3118
  %3121 = vst [vmem:[#allocation4 + $0x18] sm:$0xff] %v3119
  %v3122 = vld [vmem:[%s3] sm:$0xf]
  %v3123 = vld [vmem:[%s3 + $0x4] sm:$0xf]
  %v3124 = vld [vmem:[%s3 + $0x8] sm:$0xf]
  %v3125 = vld [vmem:[%s3 + $0xc] sm:$0xf]
  %v3126 = vld [vmem:[#allocation3] sm:$0xff]
  %v3131 = vunpack.c.l.b16 %v3122
  %v3132 = vunpack.c.l.b16 %v3123
  %v3133 = vunpack.c.l.b16 %v3124
  %v3134 = vunpack.c.l.b16 %v3125
  %v3135 = vpack.c.b16 %v3132, %v3131
  %v3136 = vpack.c.b16 %v3134, %v3133
  %v3138 = vsel %vm213, %v3135, 0
  %v3141 = vsel %vm213, %v3136, 0
  %3143 = vmatprep.subr.bf16.mxu0 0
  %3144 = vmatpush1.bf16.msra.mxu0 %v3126
  %3145 = vmatprep.subr.bf16.mxu0 0
  %3146 = vmatpush1.bf16.msra.mxu0 0
  %3147 = vmatprep.subr.bf16.mxu0 0
  %3148 = vmatpush1.bf16.msra.mxu0 0
  %3149 = vmatprep.subr.bf16.mxu0 0
  %3150 = vmatpush1.bf16.msra.mxu0 0
  %3151 = vmatprep.subr.bf16.mxu0 0
  %3152 = vmatpush1.bf16.msra.mxu0 0
  %3153 = vmatprep.subr.bf16.mxu0 0
  %3154 = vmatpush1.bf16.msra.mxu0 0
  %3155 = vmatprep.subr.bf16.mxu0 0
  %3156 = vmatpush1.bf16.msra.mxu0 0
  %3157 = vmatprep.subr.bf16.mxu0 0
  %3158 = vmatpush1.bf16.msra.mxu0 0
  %3159 = vmatprep.subr.bf16.mxu0 0
  %3160 = vmatpush1.bf16.msra.mxu0 0
  %3161 = vmatprep.subr.bf16.mxu0 0
  %3162 = vmatpush1.bf16.msra.mxu0 0
  %3163 = vmatprep.subr.bf16.mxu0 0
  %3164 = vmatpush1.bf16.msra.mxu0 0
  %3165 = vmatprep.subr.bf16.mxu0 0
  %3166 = vmatpush1.bf16.msra.mxu0 0
  %3167 = vmatprep.subr.bf16.mxu0 0
  %3168 = vmatpush1.bf16.msra.mxu0 0
  %3169 = vmatprep.subr.bf16.mxu0 0
  %3170 = vmatpush1.bf16.msra.mxu0 0
  %3171 = vmatprep.subr.bf16.mxu0 0
  %3172 = vmatpush1.bf16.msra.mxu0 0
  %3173 = vmatprep.subr.bf16.mxu0 0
  %3174 = vmatpush1.bf16.msra.mxu0 0
  %3175 = vmatprep.mubr.bf16.mxu0 0
  %3176 = vmatmul.mubr.bf16.gmra.mrb[0].mxu0 %v3138
  %v3177 = vpop.f32.mrb[0].mxu0
  %v3178 = vadd.f32 0.0, %v3177
  %v3179 = vpop.f32.mrb[0].mxu0
  %v3180 = vpop.f32.mrb[0].mxu0
  %v3181 = vadd.f32 0.0, %v3180
  %v3182 = vpop.f32.mrb[0].mxu0
  %3183 = vmatprep.mubr.bf16.mxu0 0
  %3184 = vmatmul.mubr.bf16.gmra.mrb[0].mxu0 %v3141
  %v3185 = vpop.f32.mrb[0].mxu0
  %v3186 = vadd.f32 0.0, %v3185
  %v3187 = vpop.f32.mrb[0].mxu0
  %v3188 = vpop.f32.mrb[0].mxu0
  %v3189 = vadd.f32 0.0, %v3188
  %v3190 = vpop.f32.mrb[0].mxu0
  %3191 = vdwg.mxu0
  %v3192 = vpack.c.bf16 %v3181, %v3178
  %v3193 = vpack.c.bf16 %v3189, %v3186
  %3194 = vst [vmem:[#allocation4 + $0x8] sm:$0xff] %v3192
  %3195 = vst [vmem:[#allocation4 + $0x20] sm:$0xff] %v3193
  %v3196 = vld [vmem:[#allocation4] sm:$0xff]
  %v3197 = vld [vmem:[#allocation4 + $0x8] sm:$0xff]
  %v3198 = vld [vmem:[#allocation4 + $0x10] sm:$0xff]
  %v3199 = vld [vmem:[#allocation4 + $0x18] sm:$0xff]
  %v3200 = vld [vmem:[#allocation4 + $0x20] sm:$0xff]
  %v3201 = vld [vmem:[#allocation4 + $0x28] sm:$0xff]
  %s3202 = scalar_lea.vmem %s8, 576
  %v3203 = vld [vmem:[%s3202] sm:$0xf]
  %v3204 = vld [vmem:[%s3202 + $0x4] sm:$0xf]
  %v3205 = vld [vmem:[%s3202 + $0x8] sm:$0xf]
  %v3206 = vld [vmem:[%s3202 + $0xc] sm:$0xf]
  %v3207 = vld [vmem:[%s3202 + $0x10] sm:$0xf]
  %v3208 = vld [vmem:[%s3202 + $0x14] sm:$0xf]
  %v3209 = vld [vmem:[%s3202 + $0x18] sm:$0xf]
  %v3210 = vld [vmem:[%s3202 + $0x1c] sm:$0xf]
  %v3211 = vld [vmem:[%s3202 + $0x20] sm:$0xf]
  %v3212 = vld [vmem:[%s3202 + $0x24] sm:$0xf]
  %v3213 = vld [vmem:[%s3202 + $0x28] sm:$0xf]
  %v3214 = vld [vmem:[%s3202 + $0x2c] sm:$0xf]
  %v3215 = vld [vmem:[%s3202 + $0x30] sm:$0xf]
  %v3216 = vld [vmem:[%s3202 + $0x34] sm:$0xf]
  %v3217 = vld [vmem:[%s3202 + $0x38] sm:$0xf]
  %v3218 = vld [vmem:[%s3202 + $0x3c] sm:$0xf]
  %v3219 = vld [vmem:[%s3202 + $0x40] sm:$0xf]
  %v3220 = vld [vmem:[%s3202 + $0x44] sm:$0xf]
  %v3221 = vld [vmem:[%s3202 + $0x48] sm:$0xf]
  %v3222 = vld [vmem:[%s3202 + $0x4c] sm:$0xf]
  %v3223 = vld [vmem:[%s3202 + $0x50] sm:$0xf]
  %v3224 = vld [vmem:[%s3202 + $0x54] sm:$0xf]
  %v3225 = vld [vmem:[%s3202 + $0x58] sm:$0xf]
  %v3226 = vld [vmem:[%s3202 + $0x5c] sm:$0xf]
  %v3227 = vld [vmem:[%s3202 + $0x60] sm:$0xf]
  %v3228 = vld [vmem:[%s3202 + $0x64] sm:$0xf]
  %v3229 = vld [vmem:[%s3202 + $0x68] sm:$0xf]
  %v3230 = vld [vmem:[%s3202 + $0x6c] sm:$0xf]
  %v3231 = vld [vmem:[%s3202 + $0x70] sm:$0xf]
  %v3232 = vld [vmem:[%s3202 + $0x74] sm:$0xf]
  %v3233 = vld [vmem:[%s3202 + $0x78] sm:$0xf]
  %v3234 = vld [vmem:[%s3202 + $0x7c] sm:$0xf]
  %v3235 = vld [vmem:[%s3202 + $0x80] sm:$0xf]
  %v3236 = vld [vmem:[%s3202 + $0x84] sm:$0xf]
  %v3237 = vld [vmem:[%s3202 + $0x88] sm:$0xf]
  %v3238 = vld [vmem:[%s3202 + $0x8c] sm:$0xf]
  %v3239 = vld [vmem:[%s3202 + $0x90] sm:$0xf]
  %v3240 = vld [vmem:[%s3202 + $0x94] sm:$0xf]
  %v3241 = vld [vmem:[%s3202 + $0x98] sm:$0xf]
  %v3242 = vld [vmem:[%s3202 + $0x9c] sm:$0xf]
  %v3243 = vld [vmem:[%s3202 + $0xa0] sm:$0xf]
  %v3244 = vld [vmem:[%s3202 + $0xa4] sm:$0xf]
  %v3245 = vld [vmem:[%s3202 + $0xa8] sm:$0xf]
  %v3246 = vld [vmem:[%s3202 + $0xac] sm:$0xf]
  %v3247 = vld [vmem:[%s3202 + $0xb0] sm:$0xf]
  %v3248 = vld [vmem:[%s3202 + $0xb4] sm:$0xf]
  %v3249 = vld [vmem:[%s3202 + $0xb8] sm:$0xf]
  %v3250 = vld [vmem:[%s3202 + $0xbc] sm:$0xf]
  %s3251 = scalar_lea.vmem %s12, 12
  %v3252 = vld [vmem:[%s3251] sm:$0x1]
  %v3254 = vlaneseq
  %v3255 = vshrl.u32 %v3254, 7
  %v3256 = vsub.s32 0, %v3255
  %v3257 = vrot.slane %v3252, %v3256
  %v3307 = vunpack.c.l.b16 %v3203
  %v3308 = vunpack.c.l.b16 %v3204
  %v3309 = vunpack.c.l.b16 %v3205
  %v3310 = vunpack.c.l.b16 %v3206
  %v3311 = vunpack.c.l.b16 %v3207
  %v3312 = vunpack.c.l.b16 %v3208
  %v3313 = vunpack.c.l.b16 %v3209
  %v3314 = vunpack.c.l.b16 %v3210
  %v3315 = vunpack.c.l.b16 %v3211
  %v3316 = vunpack.c.l.b16 %v3212
  %v3317 = vunpack.c.l.b16 %v3213
  %v3318 = vunpack.c.l.b16 %v3214
  %v3319 = vunpack.c.l.b16 %v3215
  %v3320 = vunpack.c.l.b16 %v3216
  %v3321 = vunpack.c.l.b16 %v3217
  %v3322 = vunpack.c.l.b16 %v3218
  %v3323 = vunpack.c.l.b16 %v3219
  %v3324 = vunpack.c.l.b16 %v3220
  %v3325 = vunpack.c.l.b16 %v3221
  %v3326 = vunpack.c.l.b16 %v3222
  %v3327 = vunpack.c.l.b16 %v3223
  %v3328 = vunpack.c.l.b16 %v3224
  %v3329 = vunpack.c.l.b16 %v3225
  %v3330 = vunpack.c.l.b16 %v3226
  %v3331 = vunpack.c.l.b16 %v3227
  %v3332 = vunpack.c.l.b16 %v3228
  %v3333 = vunpack.c.l.b16 %v3229
  %v3334 = vunpack.c.l.b16 %v3230
  %v3335 = vunpack.c.l.b16 %v3231
  %v3336 = vunpack.c.l.b16 %v3232
  %v3337 = vunpack.c.l.b16 %v3233
  %v3338 = vunpack.c.l.b16 %v3234
  %v3339 = vunpack.c.l.b16 %v3235
  %v3340 = vunpack.c.l.b16 %v3236
  %v3341 = vunpack.c.l.b16 %v3237
  %v3342 = vunpack.c.l.b16 %v3238
  %v3343 = vunpack.c.l.b16 %v3239
  %v3344 = vunpack.c.l.b16 %v3240
  %v3345 = vunpack.c.l.b16 %v3241
  %v3346 = vunpack.c.l.b16 %v3242
  %v3347 = vunpack.c.l.b16 %v3243
  %v3348 = vunpack.c.l.b16 %v3244
  %v3349 = vunpack.c.l.b16 %v3245
  %v3350 = vunpack.c.l.b16 %v3246
  %v3351 = vunpack.c.l.b16 %v3247
  %v3352 = vunpack.c.l.b16 %v3248
  %v3353 = vunpack.c.l.b16 %v3249
  %v3354 = vunpack.c.l.b16 %v3250
  %v3355 = vpack.c.b16 %v3308, %v3307
  %v3356 = vpack.c.b16 %v3310, %v3309
  %v3357 = vpack.c.b16 %v3312, %v3311
  %v3358 = vpack.c.b16 %v3314, %v3313
  %v3359 = vpack.c.b16 %v3316, %v3315
  %v3360 = vpack.c.b16 %v3318, %v3317
  %v3361 = vpack.c.b16 %v3320, %v3319
  %v3362 = vpack.c.b16 %v3322, %v3321
  %v3363 = vpack.c.b16 %v3324, %v3323
  %v3364 = vpack.c.b16 %v3326, %v3325
  %v3365 = vpack.c.b16 %v3328, %v3327
  %v3366 = vpack.c.b16 %v3330, %v3329
  %v3367 = vpack.c.b16 %v3332, %v3331
  %v3368 = vpack.c.b16 %v3334, %v3333
  %v3369 = vpack.c.b16 %v3336, %v3335
  %v3370 = vpack.c.b16 %v3338, %v3337
  %v3371 = vpack.c.b16 %v3340, %v3339
  %v3372 = vpack.c.b16 %v3342, %v3341
  %v3373 = vpack.c.b16 %v3344, %v3343
  %v3374 = vpack.c.b16 %v3346, %v3345
  %v3375 = vpack.c.b16 %v3348, %v3347
  %v3376 = vpack.c.b16 %v3350, %v3349
  %v3377 = vpack.c.b16 %v3352, %v3351
  %v3378 = vpack.c.b16 %v3354, %v3353
  %3403 = vmatprep.subr.bf16.mxu0 0
  %3404 = vmatpush1.bf16.msra.mxu0 %v3355
  %3405 = vmatprep.subr.bf16.mxu0 0
  %3406 = vmatpush1.bf16.msra.mxu0 %v3356
  %3407 = vmatprep.subr.bf16.mxu0 0
  %3408 = vmatpush1.bf16.msra.mxu0 %v3357
  %3409 = vmatprep.subr.bf16.mxu0 0
  %3410 = vmatpush1.bf16.msra.mxu0 %v3358
  %3411 = vmatprep.subr.bf16.mxu0 0
  %3412 = vmatpush1.bf16.msra.mxu0 %v3359
  %3413 = vmatprep.subr.bf16.mxu0 0
  %3414 = vmatpush1.bf16.msra.mxu0 %v3360
  %3415 = vmatprep.subr.bf16.mxu0 0
  %3416 = vmatpush1.bf16.msra.mxu0 %v3361
  %3417 = vmatprep.subr.bf16.mxu0 0
  %3418 = vmatpush1.bf16.msra.mxu0 %v3362
  %3419 = vmatprep.subr.bf16.mxu0 0
  %3420 = vmatpush1.bf16.msra.mxu0 %v3363
  %3421 = vmatprep.subr.bf16.mxu0 0
  %3422 = vmatpush1.bf16.msra.mxu0 %v3364
  %3423 = vmatprep.subr.bf16.mxu0 0
  %3424 = vmatpush1.bf16.msra.mxu0 %v3365
  %3425 = vmatprep.subr.bf16.mxu0 0
  %3426 = vmatpush1.bf16.msra.mxu0 %v3366
  %3427 = vmatprep.subr.bf16.mxu0 0
  %3428 = vmatpush1.bf16.msra.mxu0 %v3367
  %3429 = vmatprep.subr.bf16.mxu0 0
  %3430 = vmatpush1.bf16.msra.mxu0 %v3368
  %3431 = vmatprep.subr.bf16.mxu0 0
  %3432 = vmatpush1.bf16.msra.mxu0 %v3369
  %3433 = vmatprep.subr.bf16.mxu0 0
  %3434 = vmatpush1.bf16.msra.mxu0 %v3370
  %3435 = vmatprep.mubr.bf16.mxu0 %v3197
  %3436 = vmatmul.mubr.bf16.gmra.mrb[0].mxu0 %v3196
  %v3437 = vpop.f32.mrb[0].mxu0
  %v3438 = vadd.f32 %v3257, %v3437
  %v3439 = vpop.f32.mrb[0].mxu0
  %v3440 = vpop.f32.mrb[0].mxu0
  %v3441 = vadd.f32 %v3257, %v3440
  %v3442 = vpop.f32.mrb[0].mxu0
  %3443 = vmatprep.mubr.bf16.mxu0 %v3200
  %3444 = vmatmul.mubr.bf16.gmra.mrb[0].mxu0 %v3199
  %v3445 = vpop.f32.mrb[0].mxu0
  %v3446 = vadd.f32 %v3257, %v3445
  %v3447 = vpop.f32.mrb[0].mxu0
  %v3448 = vpop.f32.mrb[0].mxu0
  %v3449 = vadd.f32 %v3257, %v3448
  %v3450 = vpop.f32.mrb[0].mxu0
  %3451 = vdwg.mxu0
  %3452 = vmatprep.subr.bf16.mxu0 0
  %3453 = vmatpush1.bf16.msra.mxu0 %v3371
  %3454 = vmatprep.subr.bf16.mxu0 0
  %3455 = vmatpush1.bf16.msra.mxu0 %v3372
  %3456 = vmatprep.subr.bf16.mxu0 0
  %3457 = vmatpush1.bf16.msra.mxu0 %v3373
  %3458 = vmatprep.subr.bf16.mxu0 0
  %3459 = vmatpush1.bf16.msra.mxu0 %v3374
  %3460 = vmatprep.subr.bf16.mxu0 0
  %3461 = vmatpush1.bf16.msra.mxu0 %v3375
  %3462 = vmatprep.subr.bf16.mxu0 0
  %3463 = vmatpush1.bf16.msra.mxu0 %v3376
  %3464 = vmatprep.subr.bf16.mxu0 0
  %3465 = vmatpush1.bf16.msra.mxu0 %v3377
  %3466 = vmatprep.subr.bf16.mxu0 0
  %3467 = vmatpush1.bf16.msra.mxu0 %v3378
  %3468 = vmatprep.subr.bf16.mxu0 0
  %3469 = vmatpush1.bf16.msra.mxu0 0
  %3470 = vmatprep.subr.bf16.mxu0 0
  %3471 = vmatpush1.bf16.msra.mxu0 0
  %3472 = vmatprep.subr.bf16.mxu0 0
  %3473 = vmatpush1.bf16.msra.mxu0 0
  %3474 = vmatprep.subr.bf16.mxu0 0
  %3475 = vmatpush1.bf16.msra.mxu0 0
  %3476 = vmatprep.subr.bf16.mxu0 0
  %3477 = vmatpush1.bf16.msra.mxu0 0
  %3478 = vmatprep.subr.bf16.mxu0 0
  %3479 = vmatpush1.bf16.msra.mxu0 0
  %3480 = vmatprep.subr.bf16.mxu0 0
  %3481 = vmatpush1.bf16.msra.mxu0 0
  %3482 = vmatprep.subr.bf16.mxu0 0
  %3483 = vmatpush1.bf16.msra.mxu0 0
  %3484 = vmatprep.mubr.bf16.mxu0 0
  %3485 = vmatmul.mubr.bf16.gmra.mrb[0].mxu0 %v3198
  %v3486 = vpop.f32.mrb[0].mxu0
  %v3487 = vadd.f32 %v3438, %v3486
  %v3488 = vpop.f32.mrb[0].mxu0
  %v3489 = vpop.f32.mrb[0].mxu0
  %v3490 = vadd.f32 %v3441, %v3489
  %v3491 = vpop.f32.mrb[0].mxu0
  %3492 = vmatprep.mubr.bf16.mxu0 0
  %3493 = vmatmul.mubr.bf16.gmra.mrb[0].mxu0 %v3201
  %v3494 = vpop.f32.mrb[0].mxu0
  %v3495 = vadd.f32 %v3446, %v3494
  %v3496 = vpop.f32.mrb[0].mxu0
  %v3497 = vpop.f32.mrb[0].mxu0
  %v3498 = vadd.f32 %v3449, %v3497
  %v3499 = vpop.f32.mrb[0].mxu0
  %3500 = vdwg.mxu0
  %v3501 = vmax.f32 %v3487, 0.0
  %v3502 = vmax.f32 %v3490, 0.0
  %v3503 = vmax.f32 %v3495, 0.0
  %v3504 = vmax.f32 %v3498, 0.0
  %v3505 = vpack.c.bf16 %v3502, %v3501
  %v3506 = vpack.c.bf16 %v3504, %v3503
  %s3507 = scalar_lea.vmem %s9, 192
  %v3508 = vld [vmem:[%s3507] sm:$0xf]
  %v3509 = vld [vmem:[%s3507 + $0x4] sm:$0xf]
  %v3510 = vld [vmem:[%s3507 + $0x8] sm:$0xf]
  %v3511 = vld [vmem:[%s3507 + $0xc] sm:$0xf]
  %v3512 = vld [vmem:[%s3507 + $0x10] sm:$0xf]
  %v3513 = vld [vmem:[%s3507 + $0x14] sm:$0xf]
  %v3514 = vld [vmem:[%s3507 + $0x18] sm:$0xf]
  %v3515 = vld [vmem:[%s3507 + $0x1c] sm:$0xf]
  %v3516 = vld [vmem:[%s3507 + $0x20] sm:$0xf]
  %v3517 = vld [vmem:[%s3507 + $0x24] sm:$0xf]
  %v3518 = vld [vmem:[%s3507 + $0x28] sm:$0xf]
  %v3519 = vld [vmem:[%s3507 + $0x2c] sm:$0xf]
  %v3520 = vld [vmem:[%s3507 + $0x30] sm:$0xf]
  %v3521 = vld [vmem:[%s3507 + $0x34] sm:$0xf]
  %v3522 = vld [vmem:[%s3507 + $0x38] sm:$0xf]
  %v3523 = vld [vmem:[%s3507 + $0x3c] sm:$0xf]
  %s3524 = scalar_lea.vmem %s12, 13
  %v3525 = vld [vmem:[%s3524] sm:$0x1]
  %v3527 = vlaneseq
  %v3528 = vshrl.u32 %v3527, 7
  %v3529 = vsub.s32 0, %v3528
  %v3530 = vrot.slane %v3525, %v3529
  %v3548 = vunpack.c.l.b16 %v3508
  %v3549 = vunpack.c.l.b16 %v3509
  %v3550 = vunpack.c.l.b16 %v3510
  %v3551 = vunpack.c.l.b16 %v3511
  %v3552 = vunpack.c.l.b16 %v3512
  %v3553 = vunpack.c.l.b16 %v3513
  %v3554 = vunpack.c.l.b16 %v3514
  %v3555 = vunpack.c.l.b16 %v3515
  %v3556 = vunpack.c.l.b16 %v3516
  %v3557 = vunpack.c.l.b16 %v3517
  %v3558 = vunpack.c.l.b16 %v3518
  %v3559 = vunpack.c.l.b16 %v3519
  %v3560 = vunpack.c.l.b16 %v3520
  %v3561 = vunpack.c.l.b16 %v3521
  %v3562 = vunpack.c.l.b16 %v3522
  %v3563 = vunpack.c.l.b16 %v3523
  %v3564 = vpack.c.b16 %v3549, %v3548
  %v3565 = vpack.c.b16 %v3551, %v3550
  %v3566 = vpack.c.b16 %v3553, %v3552
  %v3567 = vpack.c.b16 %v3555, %v3554
  %v3568 = vpack.c.b16 %v3557, %v3556
  %v3569 = vpack.c.b16 %v3559, %v3558
  %v3570 = vpack.c.b16 %v3561, %v3560
  %v3571 = vpack.c.b16 %v3563, %v3562
  %3580 = vmatprep.subr.bf16.mxu0 0
  %3581 = vmatpush1.bf16.msra.mxu0 %v3564
  %3582 = vmatprep.subr.bf16.mxu0 0
  %3583 = vmatpush1.bf16.msra.mxu0 %v3565
  %3584 = vmatprep.subr.bf16.mxu0 0
  %3585 = vmatpush1.bf16.msra.mxu0 %v3566
  %3586 = vmatprep.subr.bf16.mxu0 0
  %3587 = vmatpush1.bf16.msra.mxu0 %v3567
  %3588 = vmatprep.subr.bf16.mxu0 0
  %3589 = vmatpush1.bf16.msra.mxu0 %v3568
  %3590 = vmatprep.subr.bf16.mxu0 0
  %3591 = vmatpush1.bf16.msra.mxu0 %v3569
  %3592 = vmatprep.subr.bf16.mxu0 0
  %3593 = vmatpush1.bf16.msra.mxu0 %v3570
  %3594 = vmatprep.subr.bf16.mxu0 0
  %3595 = vmatpush1.bf16.msra.mxu0 %v3571
  %3596 = vmatprep.subr.bf16.mxu0 0
  %3597 = vmatpush1.bf16.msra.mxu0 0
  %3598 = vmatprep.subr.bf16.mxu0 0
  %3599 = vmatpush1.bf16.msra.mxu0 0
  %3600 = vmatprep.subr.bf16.mxu0 0
  %3601 = vmatpush1.bf16.msra.mxu0 0
  %3602 = vmatprep.subr.bf16.mxu0 0
  %3603 = vmatpush1.bf16.msra.mxu0 0
  %3604 = vmatprep.subr.bf16.mxu0 0
  %3605 = vmatpush1.bf16.msra.mxu0 0
  %3606 = vmatprep.subr.bf16.mxu0 0
  %3607 = vmatpush1.bf16.msra.mxu0 0
  %3608 = vmatprep.subr.bf16.mxu0 0
  %3609 = vmatpush1.bf16.msra.mxu0 0
  %3610 = vmatprep.subr.bf16.mxu0 0
  %3611 = vmatpush1.bf16.msra.mxu0 0
  %3612 = vmatprep.mubr.bf16.mxu0 0
  %3613 = vmatmul.mubr.bf16.gmra.mrb[0].mxu0 %v3505
  %v3614 = vpop.f32.mrb[0].mxu0
  %v3615 = vadd.f32 %v3530, %v3614
  %v3616 = vpop.f32.mrb[0].mxu0
  %v3617 = vpop.f32.mrb[0].mxu0
  %v3618 = vadd.f32 %v3530, %v3617
  %v3619 = vpop.f32.mrb[0].mxu0
  %3620 = vmatprep.mubr.bf16.mxu0 0
  %3621 = vmatmul.mubr.bf16.gmra.mrb[0].mxu0 %v3506
  %v3622 = vpop.f32.mrb[0].mxu0
  %v3623 = vadd.f32 %v3530, %v3622
  %v3624 = vpop.f32.mrb[0].mxu0
  %v3625 = vpop.f32.mrb[0].mxu0
  %v3626 = vadd.f32 %v3530, %v3625
  %v3627 = vpop.f32.mrb[0].mxu0
  %3628 = vdwg.mxu0
  %v3629 = vmax.f32 %v3615, 0.0
  %v3630 = vmax.f32 %v3618, 0.0
  %v3631 = vmax.f32 %v3623, 0.0
  %v3632 = vmax.f32 %v3626, 0.0
  %v3633 = vpack.c.bf16 %v3630, %v3629
  %v3634 = vpack.c.bf16 %v3632, %v3631
  %v3635 = vld [vmem:[%s4] sm:$0xf]
  %v3636 = vld [vmem:[%s4 + $0x4] sm:$0xf]
  %v3639 = vunpack.c.l.b16 %v3635
  %v3640 = vunpack.c.l.b16 %v3636
  %v3641 = vpack.c.b16 %v3640, %v3639
  %v3643 = vsel %vm790, %v3641, 0
  %3645 = vmatprep.subr.bf16.mxu0 0
  %3646 = vmatpush1.bf16.msra.mxu0 %v3633
  %3647 = vmatprep.subr.bf16.mxu0 0
  %3648 = vmatpush1.bf16.msra.mxu0 %v3634
  %3649 = vmatprep.subr.bf16.mxu0 0
  %3650 = vmatpush1.bf16.msra.mxu0 0
  %3651 = vmatprep.subr.bf16.mxu0 0
  %3652 = vmatpush1.bf16.msra.mxu0 0
  %3653 = vmatprep.subr.bf16.mxu0 0
  %3654 = vmatpush1.bf16.msra.mxu0 0
  %3655 = vmatprep.subr.bf16.mxu0 0
  %3656 = vmatpush1.bf16.msra.mxu0 0
  %3657 = vmatprep.subr.bf16.mxu0 0
  %3658 = vmatpush1.bf16.msra.mxu0 0
  %3659 = vmatprep.subr.bf16.mxu0 0
  %3660 = vmatpush1.bf16.msra.mxu0 0
  %3661 = vmatprep.subr.bf16.mxu0 0
  %3662 = vmatpush1.bf16.msra.mxu0 0
  %3663 = vmatprep.subr.bf16.mxu0 0
  %3664 = vmatpush1.bf16.msra.mxu0 0
  %3665 = vmatprep.subr.bf16.mxu0 0
  %3666 = vmatpush1.bf16.msra.mxu0 0
  %3667 = vmatprep.subr.bf16.mxu0 0
  %3668 = vmatpush1.bf16.msra.mxu0 0
  %3669 = vmatprep.subr.bf16.mxu0 0
  %3670 = vmatpush1.bf16.msra.mxu0 0
  %3671 = vmatprep.subr.bf16.mxu0 0
  %3672 = vmatpush1.bf16.msra.mxu0 0
  %3673 = vmatprep.subr.bf16.mxu0 0
  %3674 = vmatpush1.bf16.msra.mxu0 0
  %3675 = vmatprep.subr.bf16.mxu0 0
  %3676 = vmatpush1.bf16.msra.mxu0 0
  %3677 = vmatprep.mubr.bf16.mxu0 0
  %3678 = vmatmul.mubr.bf16.gmra.mrb[0].mxu0 %v3643
  %v3679 = vpop.f32.mrb[0].mxu0
  %v3680 = vadd.f32 0.0, %v3679
  %v3681 = vpop.f32.mrb[0].mxu0
  %v3682 = vpop.f32.mrb[0].mxu0
  %v3683 = vadd.f32 0.0, %v3682
  %v3684 = vpop.f32.mrb[0].mxu0
  %3685 = vdwg.mxu0
  %v3686 = vld [vmem:[#allocation3] sm:$0xff]
  %3687 = vst [vmem:[#allocation5] sm:$0xff] %v3686
  %v3688 = vpack.c.bf16 %v3683, %v3680
  %3689 = vst [vmem:[#allocation5 + $0x8] sm:$0xff] %v3688
  %v3690 = vld [vmem:[#allocation5] sm:$0xff]
  %v3691 = vld [vmem:[#allocation5 + $0x8] sm:$0xff]
  %s3692 = scalar_lea.vmem %s10, 384
  %v3693 = vld [vmem:[%s3692] sm:$0xf]
  %v3694 = vld [vmem:[%s3692 + $0x4] sm:$0xf]
  %v3695 = vld [vmem:[%s3692 + $0x8] sm:$0xf]
  %v3696 = vld [vmem:[%s3692 + $0xc] sm:$0xf]
  %v3697 = vld [vmem:[%s3692 + $0x10] sm:$0xf]
  %v3698 = vld [vmem:[%s3692 + $0x14] sm:$0xf]
  %v3699 = vld [vmem:[%s3692 + $0x18] sm:$0xf]
  %v3700 = vld [vmem:[%s3692 + $0x1c] sm:$0xf]
  %v3701 = vld [vmem:[%s3692 + $0x20] sm:$0xf]
  %v3702 = vld [vmem:[%s3692 + $0x24] sm:$0xf]
  %v3703 = vld [vmem:[%s3692 + $0x28] sm:$0xf]
  %v3704 = vld [vmem:[%s3692 + $0x2c] sm:$0xf]
  %v3705 = vld [vmem:[%s3692 + $0x30] sm:$0xf]
  %v3706 = vld [vmem:[%s3692 + $0x34] sm:$0xf]
  %v3707 = vld [vmem:[%s3692 + $0x38] sm:$0xf]
  %v3708 = vld [vmem:[%s3692 + $0x3c] sm:$0xf]
  %v3709 = vld [vmem:[%s3692 + $0x40] sm:$0xf]
  %v3710 = vld [vmem:[%s3692 + $0x44] sm:$0xf]
  %v3711 = vld [vmem:[%s3692 + $0x48] sm:$0xf]
  %v3712 = vld [vmem:[%s3692 + $0x4c] sm:$0xf]
  %v3713 = vld [vmem:[%s3692 + $0x50] sm:$0xf]
  %v3714 = vld [vmem:[%s3692 + $0x54] sm:$0xf]
  %v3715 = vld [vmem:[%s3692 + $0x58] sm:$0xf]
  %v3716 = vld [vmem:[%s3692 + $0x5c] sm:$0xf]
  %v3717 = vld [vmem:[%s3692 + $0x60] sm:$0xf]
  %v3718 = vld [vmem:[%s3692 + $0x64] sm:$0xf]
  %v3719 = vld [vmem:[%s3692 + $0x68] sm:$0xf]
  %v3720 = vld [vmem:[%s3692 + $0x6c] sm:$0xf]
  %v3721 = vld [vmem:[%s3692 + $0x70] sm:$0xf]
  %v3722 = vld [vmem:[%s3692 + $0x74] sm:$0xf]
  %v3723 = vld [vmem:[%s3692 + $0x78] sm:$0xf]
  %v3724 = vld [vmem:[%s3692 + $0x7c] sm:$0xf]
  %s3725 = scalar_lea.vmem %s12, 14
  %v3726 = vld [vmem:[%s3725] sm:$0x1]
  %v3728 = vlaneseq
  %v3729 = vshrl.u32 %v3728, 7
  %v3730 = vsub.s32 0, %v3729
  %v3731 = vrot.slane %v3726, %v3730
  %v3765 = vunpack.c.l.b16 %v3693
  %v3766 = vunpack.c.l.b16 %v3694
  %v3767 = vunpack.c.l.b16 %v3695
  %v3768 = vunpack.c.l.b16 %v3696
  %v3769 = vunpack.c.l.b16 %v3697
  %v3770 = vunpack.c.l.b16 %v3698
  %v3771 = vunpack.c.l.b16 %v3699
  %v3772 = vunpack.c.l.b16 %v3700
  %v3773 = vunpack.c.l.b16 %v3701
  %v3774 = vunpack.c.l.b16 %v3702
  %v3775 = vunpack.c.l.b16 %v3703
  %v3776 = vunpack.c.l.b16 %v3704
  %v3777 = vunpack.c.l.b16 %v3705
  %v3778 = vunpack.c.l.b16 %v3706
  %v3779 = vunpack.c.l.b16 %v3707
  %v3780 = vunpack.c.l.b16 %v3708
  %v3781 = vunpack.c.l.b16 %v3709
  %v3782 = vunpack.c.l.b16 %v3710
  %v3783 = vunpack.c.l.b16 %v3711
  %v3784 = vunpack.c.l.b16 %v3712
  %v3785 = vunpack.c.l.b16 %v3713
  %v3786 = vunpack.c.l.b16 %v3714
  %v3787 = vunpack.c.l.b16 %v3715
  %v3788 = vunpack.c.l.b16 %v3716
  %v3789 = vunpack.c.l.b16 %v3717
  %v3790 = vunpack.c.l.b16 %v3718
  %v3791 = vunpack.c.l.b16 %v3719
  %v3792 = vunpack.c.l.b16 %v3720
  %v3793 = vunpack.c.l.b16 %v3721
  %v3794 = vunpack.c.l.b16 %v3722
  %v3795 = vunpack.c.l.b16 %v3723
  %v3796 = vunpack.c.l.b16 %v3724
  %v3797 = vpack.c.b16 %v3766, %v3765
  %v3798 = vpack.c.b16 %v3768, %v3767
  %v3799 = vpack.c.b16 %v3770, %v3769
  %v3800 = vpack.c.b16 %v3772, %v3771
  %v3801 = vpack.c.b16 %v3774, %v3773
  %v3802 = vpack.c.b16 %v3776, %v3775
  %v3803 = vpack.c.b16 %v3778, %v3777
  %v3804 = vpack.c.b16 %v3780, %v3779
  %v3805 = vpack.c.b16 %v3782, %v3781
  %v3806 = vpack.c.b16 %v3784, %v3783
  %v3807 = vpack.c.b16 %v3786, %v3785
  %v3808 = vpack.c.b16 %v3788, %v3787
  %v3809 = vpack.c.b16 %v3790, %v3789
  %v3810 = vpack.c.b16 %v3792, %v3791
  %v3811 = vpack.c.b16 %v3794, %v3793
  %v3812 = vpack.c.b16 %v3796, %v3795
  %3829 = vmatprep.subr.bf16.mxu0 0
  %3830 = vmatpush1.bf16.msra.mxu0 %v3797
  %3831 = vmatprep.subr.bf16.mxu0 0
  %3832 = vmatpush1.bf16.msra.mxu0 %v3798
  %3833 = vmatprep.subr.bf16.mxu0 0
  %3834 = vmatpush1.bf16.msra.mxu0 %v3799
  %3835 = vmatprep.subr.bf16.mxu0 0
  %3836 = vmatpush1.bf16.msra.mxu0 %v3800
  %3837 = vmatprep.subr.bf16.mxu0 0
  %3838 = vmatpush1.bf16.msra.mxu0 %v3801
  %3839 = vmatprep.subr.bf16.mxu0 0
  %3840 = vmatpush1.bf16.msra.mxu0 %v3802
  %3841 = vmatprep.subr.bf16.mxu0 0
  %3842 = vmatpush1.bf16.msra.mxu0 %v3803
  %3843 = vmatprep.subr.bf16.mxu0 0
  %3844 = vmatpush1.bf16.msra.mxu0 %v3804
  %3845 = vmatprep.subr.bf16.mxu0 0
  %3846 = vmatpush1.bf16.msra.mxu0 %v3805
  %3847 = vmatprep.subr.bf16.mxu0 0
  %3848 = vmatpush1.bf16.msra.mxu0 %v3806
  %3849 = vmatprep.subr.bf16.mxu0 0
  %3850 = vmatpush1.bf16.msra.mxu0 %v3807
  %3851 = vmatprep.subr.bf16.mxu0 0
  %3852 = vmatpush1.bf16.msra.mxu0 %v3808
  %3853 = vmatprep.subr.bf16.mxu0 0
  %3854 = vmatpush1.bf16.msra.mxu0 %v3809
  %3855 = vmatprep.subr.bf16.mxu0 0
  %3856 = vmatpush1.bf16.msra.mxu0 %v3810
  %3857 = vmatprep.subr.bf16.mxu0 0
  %3858 = vmatpush1.bf16.msra.mxu0 %v3811
  %3859 = vmatprep.subr.bf16.mxu0 0
  %3860 = vmatpush1.bf16.msra.mxu0 %v3812
  %3861 = vmatprep.mubr.bf16.mxu0 %v3691
  %3862 = vmatmul.mubr.bf16.gmra.mrb[0].mxu0 %v3690
  %v3863 = vpop.f32.mrb[0].mxu0
  %v3864 = vadd.f32 %v3731, %v3863
  %v3865 = vpop.f32.mrb[0].mxu0
  %v3866 = vpop.f32.mrb[0].mxu0
  %v3867 = vadd.f32 %v3731, %v3866
  %v3868 = vpop.f32.mrb[0].mxu0
  %3869 = vdwg.mxu0
  %v3870 = vmax.f32 %v3864, 0.0
  %v3871 = vmax.f32 %v3867, 0.0
  %v3872 = vpack.c.bf16 %v3871, %v3870
  %s3873 = scalar_lea.vmem %s11, 192
  %v3874 = vld [vmem:[%s3873] sm:$0xf]
  %v3875 = vld [vmem:[%s3873 + $0x4] sm:$0xf]
  %v3876 = vld [vmem:[%s3873 + $0x8] sm:$0xf]
  %v3877 = vld [vmem:[%s3873 + $0xc] sm:$0xf]
  %v3878 = vld [vmem:[%s3873 + $0x10] sm:$0xf]
  %v3879 = vld [vmem:[%s3873 + $0x14] sm:$0xf]
  %v3880 = vld [vmem:[%s3873 + $0x18] sm:$0xf]
  %v3881 = vld [vmem:[%s3873 + $0x1c] sm:$0xf]
  %v3882 = vld [vmem:[%s3873 + $0x20] sm:$0xf]
  %v3883 = vld [vmem:[%s3873 + $0x24] sm:$0xf]
  %v3884 = vld [vmem:[%s3873 + $0x28] sm:$0xf]
  %v3885 = vld [vmem:[%s3873 + $0x2c] sm:$0xf]
  %v3886 = vld [vmem:[%s3873 + $0x30] sm:$0xf]
  %v3887 = vld [vmem:[%s3873 + $0x34] sm:$0xf]
  %v3888 = vld [vmem:[%s3873 + $0x38] sm:$0xf]
  %v3889 = vld [vmem:[%s3873 + $0x3c] sm:$0xf]
  %s3890 = scalar_lea.vmem %s12, 15
  %v3891 = vld [vmem:[%s3890] sm:$0x1]
  %v3893 = vlaneseq
  %v3894 = vshrl.u32 %v3893, 7
  %v3895 = vsub.s32 0, %v3894
  %v3896 = vrot.slane %v3891, %v3895
  %v3914 = vunpack.c.l.b16 %v3874
  %v3915 = vunpack.c.l.b16 %v3875
  %v3916 = vunpack.c.l.b16 %v3876
  %v3917 = vunpack.c.l.b16 %v3877
  %v3918 = vunpack.c.l.b16 %v3878
  %v3919 = vunpack.c.l.b16 %v3879
  %v3920 = vunpack.c.l.b16 %v3880
  %v3921 = vunpack.c.l.b16 %v3881
  %v3922 = vunpack.c.l.b16 %v3882
  %v3923 = vunpack.c.l.b16 %v3883
  %v3924 = vunpack.c.l.b16 %v3884
  %v3925 = vunpack.c.l.b16 %v3885
  %v3926 = vunpack.c.l.b16 %v3886
  %v3927 = vunpack.c.l.b16 %v3887
  %v3928 = vunpack.c.l.b16 %v3888
  %v3929 = vunpack.c.l.b16 %v3889
  %v3930 = vpack.c.b16 %v3915, %v3914
  %v3931 = vpack.c.b16 %v3917, %v3916
  %v3932 = vpack.c.b16 %v3919, %v3918
  %v3933 = vpack.c.b16 %v3921, %v3920
  %v3934 = vpack.c.b16 %v3923, %v3922
  %v3935 = vpack.c.b16 %v3925, %v3924
  %v3936 = vpack.c.b16 %v3927, %v3926
  %v3937 = vpack.c.b16 %v3929, %v3928
  %3946 = vmatprep.subr.bf16.mxu0 0
  %3947 = vmatpush1.bf16.msra.mxu0 %v3930
  %3948 = vmatprep.subr.bf16.mxu0 0
  %3949 = vmatpush1.bf16.msra.mxu0 %v3931
  %3950 = vmatprep.subr.bf16.mxu0 0
  %3951 = vmatpush1.bf16.msra.mxu0 %v3932
  %3952 = vmatprep.subr.bf16.mxu0 0
  %3953 = vmatpush1.bf16.msra.mxu0 %v3933
  %3954 = vmatprep.subr.bf16.mxu0 0
  %3955 = vmatpush1.bf16.msra.mxu0 %v3934
  %3956 = vmatprep.subr.bf16.mxu0 0
  %3957 = vmatpush1.bf16.msra.mxu0 %v3935
  %3958 = vmatprep.subr.bf16.mxu0 0
  %3959 = vmatpush1.bf16.msra.mxu0 %v3936
  %3960 = vmatprep.subr.bf16.mxu0 0
  %3961 = vmatpush1.bf16.msra.mxu0 %v3937
  %3962 = vmatprep.subr.bf16.mxu0 0
  %3963 = vmatpush1.bf16.msra.mxu0 0
  %3964 = vmatprep.subr.bf16.mxu0 0
  %3965 = vmatpush1.bf16.msra.mxu0 0
  %3966 = vmatprep.subr.bf16.mxu0 0
  %3967 = vmatpush1.bf16.msra.mxu0 0
  %3968 = vmatprep.subr.bf16.mxu0 0
  %3969 = vmatpush1.bf16.msra.mxu0 0
  %3970 = vmatprep.subr.bf16.mxu0 0
  %3971 = vmatpush1.bf16.msra.mxu0 0
  %3972 = vmatprep.subr.bf16.mxu0 0
  %3973 = vmatpush1.bf16.msra.mxu0 0
  %3974 = vmatprep.subr.bf16.mxu0 0
  %3975 = vmatpush1.bf16.msra.mxu0 0
  %3976 = vmatprep.subr.bf16.mxu0 0
  %3977 = vmatpush1.bf16.msra.mxu0 0
  %3978 = vmatprep.mubr.bf16.mxu0 0
  %3979 = vmatmul.mubr.bf16.gmra.mrb[0].mxu0 %v3872
  %v3980 = vpop.f32.mrb[0].mxu0
  %v3981 = vadd.f32 %v3896, %v3980
  %v3982 = vpop.f32.mrb[0].mxu0
  %v3983 = vpop.f32.mrb[0].mxu0
  %v3984 = vadd.f32 %v3896, %v3983
  %v3985 = vpop.f32.mrb[0].mxu0
  %3986 = vdwg.mxu0
  %v3987 = vmax.f32 %v3981, 0.0
  %v3988 = vmax.f32 %v3984, 0.0
  %v3989 = vld [vmem:[#allocation2] sm:$0xff]
  %v3990 = vld [vmem:[#allocation2 + $0x8] sm:$0xff]
  %v3991 = vadd.f32 %v3989, %v3987
  %v3992 = vadd.f32 %v3990, %v3988
  %3993 = vst [vmem:[#allocation2] sm:$0xff] %v3991
  %3994 = vst [vmem:[#allocation2 + $0x8] sm:$0xff] %v3992
  %v3995 = vld [vmem:[#allocation2] sm:$0xff]
  %v3996 = vld [vmem:[#allocation2 + $0x8] sm:$0xff]
  %v3997 = vpack.c.bf16 %v3996, %v3995
  %3998 = vst [vmem:[#allocation3] sm:$0xff] %v3997
  %v3999 = vld [vmem:[%s5] sm:$0xf]
  %v4000 = vld [vmem:[#allocation3] sm:$0xff]
  %v4002 = vsel %vm213, %v3999, 0
  %4004 = vmatprep.subr.bf16.mxu0 0
  %4005 = vmatpush1.bf16.msra.mxu0 %v4000
  %4006 = vmatprep.subr.bf16.mxu0 0
  %4007 = vmatpush1.bf16.msra.mxu0 0
  %4008 = vmatprep.subr.bf16.mxu0 0
  %4009 = vmatpush1.bf16.msra.mxu0 0
  %4010 = vmatprep.subr.bf16.mxu0 0
  %4011 = vmatpush1.bf16.msra.mxu0 0
  %4012 = vmatprep.subr.bf16.mxu0 0
  %4013 = vmatpush1.bf16.msra.mxu0 0
  %4014 = vmatprep.subr.bf16.mxu0 0
  %4015 = vmatpush1.bf16.msra.mxu0 0
  %4016 = vmatprep.subr.bf16.mxu0 0
  %4017 = vmatpush1.bf16.msra.mxu0 0
  %4018 = vmatprep.subr.bf16.mxu0 0
  %4019 = vmatpush1.bf16.msra.mxu0 0
  %4020 = vmatprep.subr.bf16.mxu0 0
  %4021 = vmatpush1.bf16.msra.mxu0 0
  %4022 = vmatprep.subr.bf16.mxu0 0
  %4023 = vmatpush1.bf16.msra.mxu0 0
  %4024 = vmatprep.subr.bf16.mxu0 0
  %4025 = vmatpush1.bf16.msra.mxu0 0
  %4026 = vmatprep.subr.bf16.mxu0 0
  %4027 = vmatpush1.bf16.msra.mxu0 0
  %4028 = vmatprep.subr.bf16.mxu0 0
  %4029 = vmatpush1.bf16.msra.mxu0 0
  %4030 = vmatprep.subr.bf16.mxu0 0
  %4031 = vmatpush1.bf16.msra.mxu0 0
  %4032 = vmatprep.subr.bf16.mxu0 0
  %4033 = vmatpush1.bf16.msra.mxu0 0
  %4034 = vmatprep.subr.bf16.mxu0 0
  %4035 = vmatpush1.bf16.msra.mxu0 0
  %4036 = vmatprep.mubr.bf16.mxu0 0
  %4037 = vmatmul.mubr.bf16.gmra.mrb[0].mxu0 %v4002
  %v4038 = vpop.f32.mrb[0].mxu0
  %v4039 = vadd.f32 0.0, %v4038
  %v4040 = vpop.f32.mrb[0].mxu0
  %v4041 = vpop.f32.mrb[0].mxu0
  %v4042 = vpop.f32.mrb[0].mxu0
  %4043 = vdwg.mxu0
  %v4044 = vld [vmem:[%s15] sm:$0xff]
  %v4045 = vmul.f32 %v4039, %v4044
  %v4046 = vpack.c.bf16 %v4045, %v4045
  %v4047 = vld [vmem:[%s13] sm:$0xf]
  %v4048 = vld [vmem:[%s13 + $0x4] sm:$0xf]
  %v4049 = vld [vmem:[%s13 + $0x8] sm:$0xf]
  %v4050 = vld [vmem:[%s13 + $0xc] sm:$0xf]
  %v4051 = vld [vmem:[%s13 + $0x10] sm:$0xf]
  %v4052 = vld [vmem:[%s13 + $0x14] sm:$0xf]
  %v4053 = vld [vmem:[%s13 + $0x18] sm:$0xf]
  %v4054 = vld [vmem:[%s13 + $0x1c] sm:$0xf]
  %v4055 = vld [vmem:[%s13 + $0x20] sm:$0xf]
  %v4056 = vld [vmem:[%s13 + $0x24] sm:$0xf]
  %v4057 = vld [vmem:[%s13 + $0x28] sm:$0xf]
  %v4058 = vld [vmem:[%s13 + $0x2c] sm:$0xf]
  %v4059 = vld [vmem:[%s13 + $0x30] sm:$0xf]
  %v4060 = vld [vmem:[%s13 + $0x34] sm:$0xf]
  %v4061 = vld [vmem:[%s13 + $0x38] sm:$0xf]
  %v4062 = vld [vmem:[%s13 + $0x3c] sm:$0xf]
  %v4063 = vld [vmem:[%s14] sm:$0x1]
  %v4065 = vlaneseq
  %v4066 = vshrl.u32 %v4065, 7
  %v4067 = vsub.s32 0, %v4066
  %v4068 = vrot.slane %v4063, %v4067
  %v4086 = vunpack.c.l.b16 %v4047
  %v4087 = vunpack.c.l.b16 %v4048
  %v4088 = vunpack.c.l.b16 %v4049
  %v4089 = vunpack.c.l.b16 %v4050
  %v4090 = vunpack.c.l.b16 %v4051
  %v4091 = vunpack.c.l.b16 %v4052
  %v4092 = vunpack.c.l.b16 %v4053
  %v4093 = vunpack.c.l.b16 %v4054
  %v4094 = vunpack.c.l.b16 %v4055
  %v4095 = vunpack.c.l.b16 %v4056
  %v4096 = vunpack.c.l.b16 %v4057
  %v4097 = vunpack.c.l.b16 %v4058
  %v4098 = vunpack.c.l.b16 %v4059
  %v4099 = vunpack.c.l.b16 %v4060
  %v4100 = vunpack.c.l.b16 %v4061
  %v4101 = vunpack.c.l.b16 %v4062
  %v4102 = vpack.c.b16 %v4087, %v4086
  %v4103 = vpack.c.b16 %v4089, %v4088
  %v4104 = vpack.c.b16 %v4091, %v4090
  %v4105 = vpack.c.b16 %v4093, %v4092
  %v4106 = vpack.c.b16 %v4095, %v4094
  %v4107 = vpack.c.b16 %v4097, %v4096
  %v4108 = vpack.c.b16 %v4099, %v4098
  %v4109 = vpack.c.b16 %v4101, %v4100
  %4118 = vmatprep.subr.bf16.mxu0 0
  %4119 = vmatpush1.bf16.msra.mxu0 %v4102
  %4120 = vmatprep.subr.bf16.mxu0 0
  %4121 = vmatpush1.bf16.msra.mxu0 %v4103
  %4122 = vmatprep.subr.bf16.mxu0 0
  %4123 = vmatpush1.bf16.msra.mxu0 %v4104
  %4124 = vmatprep.subr.bf16.mxu0 0
  %4125 = vmatpush1.bf16.msra.mxu0 %v4105
  %4126 = vmatprep.subr.bf16.mxu0 0
  %4127 = vmatpush1.bf16.msra.mxu0 %v4106
  %4128 = vmatprep.subr.bf16.mxu0 0
  %4129 = vmatpush1.bf16.msra.mxu0 %v4107
  %4130 = vmatprep.subr.bf16.mxu0 0
  %4131 = vmatpush1.bf16.msra.mxu0 %v4108
  %4132 = vmatprep.subr.bf16.mxu0 0
  %4133 = vmatpush1.bf16.msra.mxu0 %v4109
  %4134 = vmatprep.subr.bf16.mxu0 0
  %4135 = vmatpush1.bf16.msra.mxu0 0
  %4136 = vmatprep.subr.bf16.mxu0 0
  %4137 = vmatpush1.bf16.msra.mxu0 0
  %4138 = vmatprep.subr.bf16.mxu0 0
  %4139 = vmatpush1.bf16.msra.mxu0 0
  %4140 = vmatprep.subr.bf16.mxu0 0
  %4141 = vmatpush1.bf16.msra.mxu0 0
  %4142 = vmatprep.subr.bf16.mxu0 0
  %4143 = vmatpush1.bf16.msra.mxu0 0
  %4144 = vmatprep.subr.bf16.mxu0 0
  %4145 = vmatpush1.bf16.msra.mxu0 0
  %4146 = vmatprep.subr.bf16.mxu0 0
  %4147 = vmatpush1.bf16.msra.mxu0 0
  %4148 = vmatprep.subr.bf16.mxu0 0
  %4149 = vmatpush1.bf16.msra.mxu0 0
  %4150 = vmatprep.mubr.bf16.mxu0 0
  %4151 = vmatmul.mubr.bf16.gmra.mrb[0].mxu0 %v4046
  %v4152 = vpop.f32.mrb[0].mxu0
  %v4153 = vadd.f32 %v4068, %v4152
  %v4154 = vpop.f32.mrb[0].mxu0
  %v4155 = vpop.f32.mrb[0].mxu0
  %v4156 = vpop.f32.mrb[0].mxu0
  %4157 = vdwg.mxu0
  %4158 = vst [vmem:[%s16] sm:$0xff] %v4153
  // Predicated region
  $region66: #{gnn_forward.1} parent=0 // pred_check
    _
  $region67: #{gnn_forward.1} parent=0 // pred_check_branch
    %4160 = sbr.rel (0) target = $region69
  $region68: #{gnn_forward.1} parent=0 // pred_region
    _
  $region69: #{gnn_forward.1} parent=0 // pred_fallthru
    _
  // Predicated region
  $region70: #{gnn_forward.1} parent=0 // pred_check
    _
  $region71: #{gnn_forward.1} parent=0 // pred_check_branch
    %4162 = sbr.rel (0) target = $region73
  $region72: #{gnn_forward.1} parent=0 // pred_region
    _
  $region73: #{gnn_forward.1} parent=0 // pred_fallthru
    _

</llo_original>
